<compile_context>
chip_gen: v6e
topology: v6e:2x2x1
jax: 0.10.0
libtpu: 0.0.40
codegen_flags: <defaults>
</compile_context>

<pallas_src>
import functools
import math

import jax
import jax.numpy as jnp
from jax.experimental import pallas as pl
from jax.experimental.pallas import tpu as pltpu


def _round_up(a, m):
    return ((a + m - 1) // m) * m


def _distmult_kernel(ent_t_ref, rel_t_ref, hidx_ref, ridx_ref, tidx_ref,
                     scores_ref, *, scale):
    """One batch tile.

    ent_t_ref : (D, n_ent_pad)  transposed entity table, VMEM-resident
    rel_t_ref : (D, n_rel_pad)  transposed relation table, VMEM-resident
    *idx_ref  : (1, tb) int32   head / relation / tail ids for this tile
    scores_ref: (1, tb) f32     lane-dense scores for this tile
    """
    ent_t = ent_t_ref[...]
    rel_t = rel_t_ref[...]

    def gather_tanh(table_t, idx_row):
        # One-hot gather on the MXU: onehot[e, b] = (idx[b] == e), then
        # (D, n_pad) @ (n_pad, tb) -> (D, tb), i.e. gather + transpose in one
        # shot, landing batch-on-lanes.  HIGHEST precision keeps the f32 row
        # extraction exact (one-hot entries are exactly 0/1).
        n_pad = table_t.shape[1]
        tb = idx_row.shape[1]
        rows = jax.lax.broadcasted_iota(jnp.int32, (n_pad, tb), 0)
        onehot = (rows == idx_row).astype(table_t.dtype)
        g = jnp.dot(table_t, onehot,
                    preferred_element_type=jnp.float32,
                    precision=jax.lax.Precision.HIGHEST)
        # In-kernel tanh on the gathered tile (EUP slot; hides under DMA/MXU).
        return jnp.tanh(g)

    h = gather_tanh(ent_t, hidx_ref[...])
    r = gather_tanh(rel_t, ridx_ref[...])
    t = gather_tanh(ent_t, tidx_ref[...])

    # Scores for this tile: I * sum_d(h*r*t) -> (1, tb), lane-dense full vst.
    s = scale * jnp.sum(h * r * t, axis=0, keepdims=True)
    scores_ref[...] = s.astype(scores_ref.dtype)


def distmult_forward(entity_emb, relation_emb, x, *, I, P=2, tb=512):
    """entity_emb: (n_entity, D), relation_emb: (n_relation, D), x: (B, 3) int."""
    n_ent, D = entity_emb.shape
    n_rel = relation_emb.shape[0]
    B = x.shape[0]

    # Pre-transpose + lane-pad the (tiny) tables once: (D, n_pad).  Padded
    # columns are zero and are never selected (ids < n_entity / n_relation).
    # TODO(synk): for large vocabularies (where the (n_ent_pad, tb) one-hot gets
    # too big) switch to a manual per-row DMA gather from an HBM-resident table.
    n_ent_pad = _round_up(n_ent, 128)
    n_rel_pad = _round_up(n_rel, 128)
    ent_t = jnp.zeros((D, n_ent_pad), jnp.float32).at[:, :n_ent].set(
        entity_emb.astype(jnp.float32).T)
    rel_t = jnp.zeros((D, n_rel_pad), jnp.float32).at[:, :n_rel].set(
        relation_emb.astype(jnp.float32).T)

    # Batch tile: lane-dense, clamped so a small batch is a single grid step.
    tb_eff = min(tb, _round_up(B, 128))
    B_pad = _round_up(B, tb_eff)
    idx = jnp.zeros((3, B_pad), jnp.int32).at[:, :B].set(x.astype(jnp.int32).T)
    hidx, ridx, tidx = idx[0:1], idx[1:2], idx[2:3]

    grid = (B_pad // tb_eff,)

    scores2d = pl.pallas_call(
        functools.partial(_distmult_kernel, scale=float(I)),
        out_shape=jax.ShapeDtypeStruct((1, B_pad), jnp.float32),
        grid_spec=pltpu.PrefetchScalarGridSpec(
            num_scalar_prefetch=0,
            grid=grid,
            in_specs=[
                pl.BlockSpec((D, n_ent_pad), lambda i: (0, 0)),  # entity table (resident)
                pl.BlockSpec((D, n_rel_pad), lambda i: (0, 0)),  # relation table (resident)
                pl.BlockSpec((1, tb_eff), lambda i: (0, i)),     # head ids
                pl.BlockSpec((1, tb_eff), lambda i: (0, i)),     # relation ids
                pl.BlockSpec((1, tb_eff), lambda i: (0, i)),     # tail ids
            ],
            out_specs=pl.BlockSpec((1, tb_eff), lambda i: (0, i)),  # lane-dense scores
        ),
        compiler_params=pltpu.CompilerParams(
            # One independent batch axis: megacore-shardable on v7x.
            dimension_semantics=("parallel",),
        ),
    )(ent_t, rel_t, hidx, ridx, tidx)

    scores = scores2d[0, :B]
    # torch.norm(scalar, P) == |scalar| for any p-norm (P > 0).
    regul_term = jnp.abs(jnp.sum(scores))
    return scores, regul_term


if __name__ == "__main__":
    # Synthetic DistMult configuration (args dict analog).
    n_entity = 50
    n_relation = 10
    embedding_size = 32
    I = 2.0          # score scale hyper-parameter
    P = 2            # p for the (scalar) norm -> abs(); value irrelevant for p>0
    B = 256          # number of (h, r, t) triples

    key = jax.random.PRNGKey(0)
    k_ent, k_rel, kh, kr, kt = jax.random.split(key, 5)

    # nn.init.uniform_(-6/sqrt(D), 6/sqrt(D))
    sqrt_size = 6.0 / math.sqrt(embedding_size)
    entity_emb = jax.random.uniform(
        k_ent, (n_entity, embedding_size), jnp.float32, -sqrt_size, sqrt_size)
    relation_emb = jax.random.uniform(
        k_rel, (n_relation, embedding_size), jnp.float32, -sqrt_size, sqrt_size)

    # x: (B, 3) = [head entity id, relation id, tail entity id]
    heads = jax.random.randint(kh, (B,), 0, n_entity, jnp.int32)
    rels = jax.random.randint(kr, (B,), 0, n_relation, jnp.int32)
    tails = jax.random.randint(kt, (B,), 0, n_entity, jnp.int32)
    x = jnp.stack([heads, rels, tails], axis=1)

    fwd = jax.jit(functools.partial(distmult_forward, I=I, P=P))
    scores, regul_term = fwd(entity_emb, relation_emb, x)
    jax.block_until_ready((scores, regul_term))

    # Pure-JAX reference check (matches the PyTorch forward).
    h_ref = jnp.tanh(entity_emb[x[:, 0]])
    r_ref = jnp.tanh(relation_emb[x[:, 1]])
    t_ref = jnp.tanh(entity_emb[x[:, 2]])
    scores_ref = I * jnp.sum(h_ref * r_ref * t_ref, axis=1)
    regul_ref = jnp.abs(jnp.sum(scores_ref))

    assert scores.shape == (B,)
    assert jnp.allclose(scores, scores_ref, atol=1e-4, rtol=1e-4), \
        float(jnp.max(jnp.abs(scores - scores_ref)))
    assert jnp.allclose(regul_term, regul_ref, atol=1e-3, rtol=1e-4)

    print("KERNEL_OK")
</pallas_src>

<mosaic_0001>
module attributes {stable_mosaic.version = 11 : i64} {
  func.func @_distmult_kernel(%arg0: i32, %arg1: memref<32x128xf32, #tpu.memory_space<vmem>>, %arg2: memref<32x128xf32, #tpu.memory_space<vmem>>, %arg3: memref<1x256xi32, #tpu.memory_space<vmem>>, %arg4: memref<1x256xi32, #tpu.memory_space<vmem>>, %arg5: memref<1x256xi32, #tpu.memory_space<vmem>>, %arg6: memref<1x256xf32, #tpu.memory_space<vmem>>) attributes {dimension_semantics = [#tpu.dimension_semantics<parallel>], iteration_bounds = array<i64: 1>, scalar_prefetch = 0 : i64, scratch_operands = 0 : i64, tpu.core_type = #tpu.core_type<tc>, window_params = [{pipeline_mode = #tpu.pipeline_mode<synchronous>, transform_indices = @transform_0, window_bounds = array<i64: 32, 128>}, {pipeline_mode = #tpu.pipeline_mode<synchronous>, transform_indices = @transform_1, window_bounds = array<i64: 32, 128>}, {transform_indices = @transform_2, window_bounds = array<i64: 1, 256>}, {transform_indices = @transform_3, window_bounds = array<i64: 1, 256>}, {transform_indices = @transform_4, window_bounds = array<i64: 1, 256>}, {transform_indices = @transform_5, window_bounds = array<i64: 1, 256>}]} {
    %c0 = arith.constant 0 : index
    %c0_0 = arith.constant 0 : index
    %0 = vector.load %arg1[%c0, %c0_0] : memref<32x128xf32, #tpu.memory_space<vmem>>, vector<32x128xf32>
    %c0_1 = arith.constant 0 : index
    %c0_2 = arith.constant 0 : index
    %1 = vector.load %arg2[%c0_1, %c0_2] : memref<32x128xf32, #tpu.memory_space<vmem>>, vector<32x128xf32>
    %c0_3 = arith.constant 0 : index
    %c0_4 = arith.constant 0 : index
    %2 = vector.load %arg3[%c0_3, %c0_4] : memref<1x256xi32, #tpu.memory_space<vmem>>, vector<1x256xi32>
    %3 = tpu.iota {dimensions = array<i32: 0>} : vector<128x256xi32>
    %4 = vector.broadcast %2 : vector<1x256xi32> to vector<128x256xi32>
    %5 = arith.cmpi eq, %3, %4 : vector<128x256xi32>
    %6 = arith.extui %5 : vector<128x256xi1> to vector<128x256xi32>
    %7 = arith.sitofp %6 : vector<128x256xi32> to vector<128x256xf32>
    %cst = arith.constant dense<0.000000e+00> : vector<32x256xf32>
    %8 = tpu.matmul %0, %7, %cst {dimension_numbers = #tpu.dot_dimension_numbers<[1], [0], [0], [1], [0, 0, 1, 1], [], []>, precision = #tpu.contract_precision<fp32>} : vector<32x128xf32>, vector<128x256xf32>, vector<32x256xf32> -> vector<32x256xf32>
    %9 = math.tanh %8 : vector<32x256xf32>
    %c0_5 = arith.constant 0 : index
    %c0_6 = arith.constant 0 : index
    %10 = vector.load %arg4[%c0_5, %c0_6] : memref<1x256xi32, #tpu.memory_space<vmem>>, vector<1x256xi32>
    %11 = tpu.iota {dimensions = array<i32: 0>} : vector<128x256xi32>
    %12 = vector.broadcast %10 : vector<1x256xi32> to vector<128x256xi32>
    %13 = arith.cmpi eq, %11, %12 : vector<128x256xi32>
    %14 = arith.extui %13 : vector<128x256xi1> to vector<128x256xi32>
    %15 = arith.sitofp %14 : vector<128x256xi32> to vector<128x256xf32>
    %cst_7 = arith.constant dense<0.000000e+00> : vector<32x256xf32>
    %16 = tpu.matmul %1, %15, %cst_7 {dimension_numbers = #tpu.dot_dimension_numbers<[1], [0], [0], [1], [0, 0, 1, 1], [], []>, precision = #tpu.contract_precision<fp32>} : vector<32x128xf32>, vector<128x256xf32>, vector<32x256xf32> -> vector<32x256xf32>
    %17 = math.tanh %16 : vector<32x256xf32>
    %c0_8 = arith.constant 0 : index
    %c0_9 = arith.constant 0 : index
    %18 = vector.load %arg5[%c0_8, %c0_9] : memref<1x256xi32, #tpu.memory_space<vmem>>, vector<1x256xi32>
    %19 = tpu.iota {dimensions = array<i32: 0>} : vector<128x256xi32>
    %20 = vector.broadcast %18 : vector<1x256xi32> to vector<128x256xi32>
    %21 = arith.cmpi eq, %19, %20 : vector<128x256xi32>
    %22 = arith.extui %21 : vector<128x256xi1> to vector<128x256xi32>
    %23 = arith.sitofp %22 : vector<128x256xi32> to vector<128x256xf32>
    %cst_10 = arith.constant dense<0.000000e+00> : vector<32x256xf32>
    %24 = tpu.matmul %0, %23, %cst_10 {dimension_numbers = #tpu.dot_dimension_numbers<[1], [0], [0], [1], [0, 0, 1, 1], [], []>, precision = #tpu.contract_precision<fp32>} : vector<32x128xf32>, vector<128x256xf32>, vector<32x256xf32> -> vector<32x256xf32>
    %25 = math.tanh %24 : vector<32x256xf32>
    %26 = arith.mulf %9, %17 : vector<32x256xf32>
    %27 = arith.mulf %26, %25 : vector<32x256xf32>
    %cst_11 = arith.constant dense<0.000000e+00> : vector<256xf32>
    %28 = vector.multi_reduction <add>, %27, %cst_11 [0] : vector<32x256xf32> to vector<256xf32>
    %29 = vector.shape_cast %28 : vector<256xf32> to vector<1x256xf32>
    %cst_12 = arith.constant 2.000000e+00 : f32
    %30 = vector.broadcast %cst_12 : f32 to vector<1x256xf32>
    %31 = arith.mulf %30, %29 : vector<1x256xf32>
    %c0_13 = arith.constant 0 : index
    %c0_14 = arith.constant 0 : index
    %32 = vector.load %arg6[%c0_13, %c0_14] : memref<1x256xf32, #tpu.memory_space<vmem>>, vector<1x256xf32>
    tpu.vector_store %arg6[%c0_13, %c0_14], %31 {strides = array<i32>} : memref<1x256xf32, #tpu.memory_space<vmem>>, vector<1x256xf32>,
    return
  }
  func.func @transform_0(%arg0: i32) -> (i32, i32) {
    %c0_i32 = arith.constant 0 : i32
    %c0_i32_0 = arith.constant 0 : i32
    %c0_i32_1 = arith.constant 0 : i32
    return %c0_i32, %c0_i32_0 : i32, i32
  }
  func.func @transform_1(%arg0: i32) -> (i32, i32) {
    %c0_i32 = arith.constant 0 : i32
    %c0_i32_0 = arith.constant 0 : i32
    %c0_i32_1 = arith.constant 0 : i32
    return %c0_i32, %c0_i32_0 : i32, i32
  }
  func.func @transform_2(%arg0: i32) -> (i32, i32) {
    %c0_i32 = arith.constant 0 : i32
    %c0_i32_0 = arith.constant 0 : i32
    return %c0_i32, %arg0 : i32, i32
  }
  func.func @transform_3(%arg0: i32) -> (i32, i32) {
    %c0_i32 = arith.constant 0 : i32
    %c0_i32_0 = arith.constant 0 : i32
    return %c0_i32, %arg0 : i32, i32
  }
  func.func @transform_4(%arg0: i32) -> (i32, i32) {
    %c0_i32 = arith.constant 0 : i32
    %c0_i32_0 = arith.constant 0 : i32
    return %c0_i32, %arg0 : i32, i32
  }
  func.func @transform_5(%arg0: i32) -> (i32, i32) {
    %c0_i32 = arith.constant 0 : i32
    %c0_i32_0 = arith.constant 0 : i32
    return %c0_i32, %arg0 : i32, i32
  }
}

</mosaic_0001>

<llo_original>
// kernel: distmult_forward.1
$region0: #{distmult_forward.1}
  #allocation0 [shape = 'u32[]', space=smem, size = 0x4, offset = 0x4, fixed_abs, tag = 'smem constant byte address 0x4 - core index']
  #allocation1 [shape = 'u32[144,128]{1,0:T(1,128)}', space=vmem, size = 0x12000, scoped, tag = 'internal scratch']
  %s0 = inlined_call_operand.vmem [shape: f32[32,128], index: 0, kind: input, shape index: {}]
  %s1 = inlined_call_operand.vmem [shape: f32[32,128], index: 1, kind: input, shape index: {}]
  %s2 = inlined_call_operand.vmem [shape: s32[1,256], index: 2, kind: input, shape index: {}]
  %s3 = inlined_call_operand.vmem [shape: s32[1,256], index: 3, kind: input, shape index: {}]
  %s4 = inlined_call_operand.vmem [shape: s32[1,256], index: 4, kind: input, shape index: {}]
  %s5 = inlined_call_operand.vmem [shape: f32[1,256], index: 5, kind: output, shape index: {}]
  %s6 = sld [smem:[#allocation0]]
  $region30: #{distmult_forward.1} parent=0
    _
  %s8 = ssub.s32 1, %s6
  %s9 = scalar_select 0, %s8, %s6
  // Predicated region
  $region2: #{distmult_forward.1} parent=0 // pred_check
    _
  $region3: #{distmult_forward.1} parent=0 // pred_check_branch
    %11 = sbr.rel (0) target = $region5
  $region4: #{distmult_forward.1} parent=0 // pred_region
    _
  $region5: #{distmult_forward.1} parent=0 // pred_fallthru
    _
  // Predicated region
  $region6: #{distmult_forward.1} parent=0 // pred_check
    _
  $region7: #{distmult_forward.1} parent=0 // pred_check_branch
    %13 = sbr.rel (0) target = $region9
  $region8: #{distmult_forward.1} parent=0 // pred_region
    _
  $region9: #{distmult_forward.1} parent=0 // pred_fallthru
    _
  // Predicated region
  $region10: #{distmult_forward.1} parent=0 // pred_check
    _
  $region11: #{distmult_forward.1} parent=0 // pred_check_branch
    %15 = sbr.rel (0) target = $region13
  $region12: #{distmult_forward.1} parent=0 // pred_region
    _
  $region13: #{distmult_forward.1} parent=0 // pred_fallthru
    _
  // Predicated region
  $region14: #{distmult_forward.1} parent=0 // pred_check
    _
  $region15: #{distmult_forward.1} parent=0 // pred_check_branch
    %17 = sbr.rel (0) target = $region17
  $region16: #{distmult_forward.1} parent=0 // pred_region
    _
  $region17: #{distmult_forward.1} parent=0 // pred_fallthru
    _
  // Predicated region
  $region18: #{distmult_forward.1} parent=0 // pred_check
    _
  $region19: #{distmult_forward.1} parent=0 // pred_check_branch
    %19 = sbr.rel (0) target = $region21
  $region20: #{distmult_forward.1} parent=0 // pred_region
    _
  $region21: #{distmult_forward.1} parent=0 // pred_fallthru
    _
  %v20 = vld [vmem:[%s0] sm:$0xff]
  %v21 = vld [vmem:[%s0 + $0x8] sm:$0xff]
  %v22 = vld [vmem:[%s0 + $0x10] sm:$0xff]
  %v23 = vld [vmem:[%s0 + $0x18] sm:$0xff]
  %v24 = vld [vmem:[%s1] sm:$0xff]
  %v25 = vld [vmem:[%s1 + $0x8] sm:$0xff]
  %v26 = vld [vmem:[%s1 + $0x10] sm:$0xff]
  %v27 = vld [vmem:[%s1 + $0x18] sm:$0xff]
  %v28 = vld [vmem:[%s2] sm:$0x3]
  %v29 = vlaneseq
  %v30 = vshrl.u32 %v29, 7
  %v31 = vadd.s32 %v30, 8
  %v32 = vadd.s32 %v30, 16
  %v33 = vadd.s32 %v30, 24
  %v34 = vadd.s32 %v30, 32
  %v35 = vadd.s32 %v30, 40
  %v36 = vadd.s32 %v30, 48
  %v37 = vadd.s32 %v30, 56
  %v38 = vadd.s32 %v30, 64
  %v39 = vadd.s32 %v30, 72
  %v40 = vadd.s32 %v30, 80
  %v41 = vadd.s32 %v30, 88
  %v42 = vadd.s32 %v30, 96
  %v43 = vadd.s32 %v30, 104
  %v44 = vadd.s32 %v30, 112
  %v45 = vadd.s32 %v30, 120
  %v46 = vlaneseq
  %v47 = vshrl.u32 %v46, 7
  %v48 = vsub.s32 0, %v47
  %v49 = vrot.slane %v28, %v48
  %v50 = vlaneseq
  %v51 = vshrl.u32 %v50, 7
  %v52 = vsub.s32 1, %v51
  %v53 = vrot.slane %v28, %v52
  %vm54 = vcmp.eq.s32.totalorder %v30, %v49
  %vm55 = vcmp.eq.s32.totalorder %v30, %v53
  %vm56 = vcmp.eq.s32.totalorder %v31, %v49
  %vm57 = vcmp.eq.s32.totalorder %v31, %v53
  %vm58 = vcmp.eq.s32.totalorder %v32, %v49
  %vm59 = vcmp.eq.s32.totalorder %v32, %v53
  %vm60 = vcmp.eq.s32.totalorder %v33, %v49
  %vm61 = vcmp.eq.s32.totalorder %v33, %v53
  %vm62 = vcmp.eq.s32.totalorder %v34, %v49
  %vm63 = vcmp.eq.s32.totalorder %v34, %v53
  %vm64 = vcmp.eq.s32.totalorder %v35, %v49
  %vm65 = vcmp.eq.s32.totalorder %v35, %v53
  %vm66 = vcmp.eq.s32.totalorder %v36, %v49
  %vm67 = vcmp.eq.s32.totalorder %v36, %v53
  %vm68 = vcmp.eq.s32.totalorder %v37, %v49
  %vm69 = vcmp.eq.s32.totalorder %v37, %v53
  %vm70 = vcmp.eq.s32.totalorder %v38, %v49
  %vm71 = vcmp.eq.s32.totalorder %v38, %v53
  %vm72 = vcmp.eq.s32.totalorder %v39, %v49
  %vm73 = vcmp.eq.s32.totalorder %v39, %v53
  %vm74 = vcmp.eq.s32.totalorder %v40, %v49
  %vm75 = vcmp.eq.s32.totalorder %v40, %v53
  %vm76 = vcmp.eq.s32.totalorder %v41, %v49
  %vm77 = vcmp.eq.s32.totalorder %v41, %v53
  %vm78 = vcmp.eq.s32.totalorder %v42, %v49
  %vm79 = vcmp.eq.s32.totalorder %v42, %v53
  %vm80 = vcmp.eq.s32.totalorder %v43, %v49
  %vm81 = vcmp.eq.s32.totalorder %v43, %v53
  %vm82 = vcmp.eq.s32.totalorder %v44, %v49
  %vm83 = vcmp.eq.s32.totalorder %v44, %v53
  %vm84 = vcmp.eq.s32.totalorder %v45, %v49
  %vm85 = vcmp.eq.s32.totalorder %v45, %v53
  %v86 = vsel %vm54, 1, 0
  %v87 = vsel %vm55, 1, 0
  %v88 = vsel %vm56, 1, 0
  %v89 = vsel %vm57, 1, 0
  %v90 = vsel %vm58, 1, 0
  %v91 = vsel %vm59, 1, 0
  %v92 = vsel %vm60, 1, 0
  %v93 = vsel %vm61, 1, 0
  %v94 = vsel %vm62, 1, 0
  %v95 = vsel %vm63, 1, 0
  %v96 = vsel %vm64, 1, 0
  %v97 = vsel %vm65, 1, 0
  %v98 = vsel %vm66, 1, 0
  %v99 = vsel %vm67, 1, 0
  %v100 = vsel %vm68, 1, 0
  %v101 = vsel %vm69, 1, 0
  %v102 = vsel %vm70, 1, 0
  %v103 = vsel %vm71, 1, 0
  %v104 = vsel %vm72, 1, 0
  %v105 = vsel %vm73, 1, 0
  %v106 = vsel %vm74, 1, 0
  %v107 = vsel %vm75, 1, 0
  %v108 = vsel %vm76, 1, 0
  %v109 = vsel %vm77, 1, 0
  %v110 = vsel %vm78, 1, 0
  %v111 = vsel %vm79, 1, 0
  %v112 = vsel %vm80, 1, 0
  %v113 = vsel %vm81, 1, 0
  %v114 = vsel %vm82, 1, 0
  %v115 = vsel %vm83, 1, 0
  %v116 = vsel %vm84, 1, 0
  %v117 = vsel %vm85, 1, 0
  %v118 = vcvt.s32.f32 %v86
  %v119 = vcvt.s32.f32 %v87
  %v120 = vcvt.s32.f32 %v88
  %v121 = vcvt.s32.f32 %v89
  %v122 = vcvt.s32.f32 %v90
  %v123 = vcvt.s32.f32 %v91
  %v124 = vcvt.s32.f32 %v92
  %v125 = vcvt.s32.f32 %v93
  %v126 = vcvt.s32.f32 %v94
  %v127 = vcvt.s32.f32 %v95
  %v128 = vcvt.s32.f32 %v96
  %v129 = vcvt.s32.f32 %v97
  %v130 = vcvt.s32.f32 %v98
  %v131 = vcvt.s32.f32 %v99
  %v132 = vcvt.s32.f32 %v100
  %v133 = vcvt.s32.f32 %v101
  %v134 = vcvt.s32.f32 %v102
  %v135 = vcvt.s32.f32 %v103
  %v136 = vcvt.s32.f32 %v104
  %v137 = vcvt.s32.f32 %v105
  %v138 = vcvt.s32.f32 %v106
  %v139 = vcvt.s32.f32 %v107
  %v140 = vcvt.s32.f32 %v108
  %v141 = vcvt.s32.f32 %v109
  %v142 = vcvt.s32.f32 %v110
  %v143 = vcvt.s32.f32 %v111
  %v144 = vcvt.s32.f32 %v112
  %v145 = vcvt.s32.f32 %v113
  %v146 = vcvt.s32.f32 %v114
  %v147 = vcvt.s32.f32 %v115
  %v148 = vcvt.s32.f32 %v116
  %v149 = vcvt.s32.f32 %v117
  %v150 = vand.u32 %v149, 4294901760
  %151 = vmatprep.subr.mxu0 %v150
  %v152 = vand.u32 %v148, 4294901760
  %153 = vmatpush1.msra.mxu0 %v152
  %v154 = vand.u32 %v147, 4294901760
  %155 = vmatprep.subr.mxu0 %v154
  %v156 = vand.u32 %v146, 4294901760
  %157 = vmatpush1.msra.mxu0 %v156
  %v158 = vand.u32 %v145, 4294901760
  %159 = vmatprep.subr.mxu0 %v158
  %v160 = vand.u32 %v144, 4294901760
  %161 = vmatpush1.msra.mxu0 %v160
  %v162 = vand.u32 %v143, 4294901760
  %163 = vmatprep.subr.mxu0 %v162
  %v164 = vand.u32 %v142, 4294901760
  %165 = vmatpush1.msra.mxu0 %v164
  %v166 = vand.u32 %v141, 4294901760
  %167 = vmatprep.subr.mxu0 %v166
  %v168 = vand.u32 %v140, 4294901760
  %169 = vmatpush1.msra.mxu0 %v168
  %v170 = vand.u32 %v139, 4294901760
  %171 = vmatprep.subr.mxu0 %v170
  %v172 = vand.u32 %v138, 4294901760
  %173 = vmatpush1.msra.mxu0 %v172
  %v174 = vand.u32 %v137, 4294901760
  %175 = vmatprep.subr.mxu0 %v174
  %v176 = vand.u32 %v136, 4294901760
  %177 = vmatpush1.msra.mxu0 %v176
  %v178 = vand.u32 %v135, 4294901760
  %179 = vmatprep.subr.mxu0 %v178
  %v180 = vand.u32 %v134, 4294901760
  %181 = vmatpush1.msra.mxu0 %v180
  %v182 = vand.u32 %v133, 4294901760
  %183 = vmatprep.subr.mxu0 %v182
  %v184 = vand.u32 %v132, 4294901760
  %185 = vmatpush1.msra.mxu0 %v184
  %v186 = vand.u32 %v131, 4294901760
  %187 = vmatprep.subr.mxu0 %v186
  %v188 = vand.u32 %v130, 4294901760
  %189 = vmatpush1.msra.mxu0 %v188
  %v190 = vand.u32 %v129, 4294901760
  %191 = vmatprep.subr.mxu0 %v190
  %v192 = vand.u32 %v128, 4294901760
  %193 = vmatpush1.msra.mxu0 %v192
  %v194 = vand.u32 %v127, 4294901760
  %195 = vmatprep.subr.mxu0 %v194
  %v196 = vand.u32 %v126, 4294901760
  %197 = vmatpush1.msra.mxu0 %v196
  %v198 = vand.u32 %v125, 4294901760
  %199 = vmatprep.subr.mxu0 %v198
  %v200 = vand.u32 %v124, 4294901760
  %201 = vmatpush1.msra.mxu0 %v200
  %v202 = vand.u32 %v123, 4294901760
  %203 = vmatprep.subr.mxu0 %v202
  %v204 = vand.u32 %v122, 4294901760
  %205 = vmatpush1.msra.mxu0 %v204
  %v206 = vand.u32 %v121, 4294901760
  %207 = vmatprep.subr.mxu0 %v206
  %v208 = vand.u32 %v120, 4294901760
  %209 = vmatpush1.msra.mxu0 %v208
  %v210 = vand.u32 %v119, 4294901760
  %211 = vmatprep.subr.mxu0 %v210
  %v212 = vand.u32 %v118, 4294901760
  %213 = vmatpush1.msra.mxu0 %v212
  %214 = vmatprep.subr.mxu0 0.0
  %215 = vmatpush2.msra.mxu0 0.0
  %216 = vmatprep.subr.mxu0 0.0
  %217 = vmatpush2.msra.mxu0 0.0
  %218 = vmatprep.subr.mxu0 0.0
  %219 = vmatpush2.msra.mxu0 0.0
  %220 = vmatprep.subr.mxu0 0.0
  %221 = vmatpush2.msra.mxu0 0.0
  %222 = vmatprep.subr.mxu0 0.0
  %223 = vmatpush2.msra.mxu0 0.0
  %224 = vmatprep.subr.mxu0 0.0
  %225 = vmatpush2.msra.mxu0 0.0
  %226 = vmatprep.subr.mxu0 0.0
  %227 = vmatpush2.msra.mxu0 0.0
  %228 = vmatprep.subr.mxu0 0.0
  %229 = vmatpush2.msra.mxu0 0.0
  %230 = vmatprep.subr.mxu0 0.0
  %231 = vmatpush2.msra.mxu0 0.0
  %232 = vmatprep.subr.mxu0 0.0
  %233 = vmatpush2.msra.mxu0 0.0
  %234 = vmatprep.subr.mxu0 0.0
  %235 = vmatpush2.msra.mxu0 0.0
  %236 = vmatprep.subr.mxu0 0.0
  %237 = vmatpush2.msra.mxu0 0.0
  %238 = vmatprep.subr.mxu0 0.0
  %239 = vmatpush2.msra.mxu0 0.0
  %240 = vmatprep.subr.mxu0 0.0
  %241 = vmatpush2.msra.mxu0 0.0
  %242 = vmatprep.subr.mxu0 0.0
  %243 = vmatpush2.msra.mxu0 0.0
  %244 = vmatprep.subr.mxu0 0.0
  %245 = vmatpush2.msra.mxu0 0.0
  %246 = vmatprep.mubr.f32.mxu0 0.0
  %v247 = vand.u32 %v20, 4294901760
  %v248 = vsub.f32 %v20, %v247
  %v249 = vand.u32 %v248, 4294901760
  %v250 = vsub.f32 %v248, %v249
  %v251 = vand.u32 %v250, 4294901760
  %252 = vmatmul.mubr.f32.gmra.mxu0 %v251
  %v253 = vpop.f32.mrf.mxu0
  %v254 = vadd.f32 0.0, %v253
  %v255 = vpop.f32.mrf.mxu0
  %v256 = vadd.f32 0.0, %v255
  %257 = vmatprep.mubr.f32.mxu0 0.0
  %v258 = vand.u32 %v21, 4294901760
  %v259 = vsub.f32 %v21, %v258
  %v260 = vand.u32 %v259, 4294901760
  %v261 = vsub.f32 %v259, %v260
  %v262 = vand.u32 %v261, 4294901760
  %263 = vmatmul.mubr.f32.gmra.mxu0 %v262
  %v264 = vpop.f32.mrf.mxu0
  %v265 = vadd.f32 0.0, %v264
  %v266 = vpop.f32.mrf.mxu0
  %v267 = vadd.f32 0.0, %v266
  %268 = vmatprep.mubr.f32.mxu0 0.0
  %v269 = vand.u32 %v22, 4294901760
  %v270 = vsub.f32 %v22, %v269
  %v271 = vand.u32 %v270, 4294901760
  %v272 = vsub.f32 %v270, %v271
  %v273 = vand.u32 %v272, 4294901760
  %274 = vmatmul.mubr.f32.gmra.mxu0 %v273
  %v275 = vpop.f32.mrf.mxu0
  %v276 = vadd.f32 0.0, %v275
  %v277 = vpop.f32.mrf.mxu0
  %v278 = vadd.f32 0.0, %v277
  %279 = vmatprep.mubr.f32.mxu0 0.0
  %v280 = vand.u32 %v23, 4294901760
  %v281 = vsub.f32 %v23, %v280
  %v282 = vand.u32 %v281, 4294901760
  %v283 = vsub.f32 %v281, %v282
  %v284 = vand.u32 %v283, 4294901760
  %285 = vmatmul.mubr.f32.gmra.mxu0 %v284
  %v286 = vpop.f32.mrf.mxu0
  %v287 = vadd.f32 0.0, %v286
  %v288 = vpop.f32.mrf.mxu0
  %v289 = vadd.f32 0.0, %v288
  %290 = vdwg.mxu0
  %v291 = vand.u32 %v149, 4294901760
  %v292 = vsub.f32 %v149, %v291
  %v293 = vand.u32 %v292, 4294901760
  %v294 = vsub.f32 %v292, %v293
  %v295 = vand.u32 %v294, 4294901760
  %296 = vmatprep.subr.mxu0 %v295
  %v297 = vand.u32 %v148, 4294901760
  %v298 = vsub.f32 %v148, %v297
  %v299 = vand.u32 %v298, 4294901760
  %v300 = vsub.f32 %v298, %v299
  %v301 = vand.u32 %v300, 4294901760
  %302 = vmatpush1.msra.mxu0 %v301
  %v303 = vand.u32 %v147, 4294901760
  %v304 = vsub.f32 %v147, %v303
  %v305 = vand.u32 %v304, 4294901760
  %v306 = vsub.f32 %v304, %v305
  %v307 = vand.u32 %v306, 4294901760
  %308 = vmatprep.subr.mxu0 %v307
  %v309 = vand.u32 %v146, 4294901760
  %v310 = vsub.f32 %v146, %v309
  %v311 = vand.u32 %v310, 4294901760
  %v312 = vsub.f32 %v310, %v311
  %v313 = vand.u32 %v312, 4294901760
  %314 = vmatpush1.msra.mxu0 %v313
  %v315 = vand.u32 %v145, 4294901760
  %v316 = vsub.f32 %v145, %v315
  %v317 = vand.u32 %v316, 4294901760
  %v318 = vsub.f32 %v316, %v317
  %v319 = vand.u32 %v318, 4294901760
  %320 = vmatprep.subr.mxu0 %v319
  %v321 = vand.u32 %v144, 4294901760
  %v322 = vsub.f32 %v144, %v321
  %v323 = vand.u32 %v322, 4294901760
  %v324 = vsub.f32 %v322, %v323
  %v325 = vand.u32 %v324, 4294901760
  %326 = vmatpush1.msra.mxu0 %v325
  %v327 = vand.u32 %v143, 4294901760
  %v328 = vsub.f32 %v143, %v327
  %v329 = vand.u32 %v328, 4294901760
  %v330 = vsub.f32 %v328, %v329
  %v331 = vand.u32 %v330, 4294901760
  %332 = vmatprep.subr.mxu0 %v331
  %v333 = vand.u32 %v142, 4294901760
  %v334 = vsub.f32 %v142, %v333
  %v335 = vand.u32 %v334, 4294901760
  %v336 = vsub.f32 %v334, %v335
  %v337 = vand.u32 %v336, 4294901760
  %338 = vmatpush1.msra.mxu0 %v337
  %v339 = vand.u32 %v141, 4294901760
  %v340 = vsub.f32 %v141, %v339
  %v341 = vand.u32 %v340, 4294901760
  %v342 = vsub.f32 %v340, %v341
  %v343 = vand.u32 %v342, 4294901760
  %344 = vmatprep.subr.mxu0 %v343
  %v345 = vand.u32 %v140, 4294901760
  %v346 = vsub.f32 %v140, %v345
  %v347 = vand.u32 %v346, 4294901760
  %v348 = vsub.f32 %v346, %v347
  %v349 = vand.u32 %v348, 4294901760
  %350 = vmatpush1.msra.mxu0 %v349
  %v351 = vand.u32 %v139, 4294901760
  %v352 = vsub.f32 %v139, %v351
  %v353 = vand.u32 %v352, 4294901760
  %v354 = vsub.f32 %v352, %v353
  %v355 = vand.u32 %v354, 4294901760
  %356 = vmatprep.subr.mxu0 %v355
  %v357 = vand.u32 %v138, 4294901760
  %v358 = vsub.f32 %v138, %v357
  %v359 = vand.u32 %v358, 4294901760
  %v360 = vsub.f32 %v358, %v359
  %v361 = vand.u32 %v360, 4294901760
  %362 = vmatpush1.msra.mxu0 %v361
  %v363 = vand.u32 %v137, 4294901760
  %v364 = vsub.f32 %v137, %v363
  %v365 = vand.u32 %v364, 4294901760
  %v366 = vsub.f32 %v364, %v365
  %v367 = vand.u32 %v366, 4294901760
  %368 = vmatprep.subr.mxu0 %v367
  %v369 = vand.u32 %v136, 4294901760
  %v370 = vsub.f32 %v136, %v369
  %v371 = vand.u32 %v370, 4294901760
  %v372 = vsub.f32 %v370, %v371
  %v373 = vand.u32 %v372, 4294901760
  %374 = vmatpush1.msra.mxu0 %v373
  %v375 = vand.u32 %v135, 4294901760
  %v376 = vsub.f32 %v135, %v375
  %v377 = vand.u32 %v376, 4294901760
  %v378 = vsub.f32 %v376, %v377
  %v379 = vand.u32 %v378, 4294901760
  %380 = vmatprep.subr.mxu0 %v379
  %v381 = vand.u32 %v134, 4294901760
  %v382 = vsub.f32 %v134, %v381
  %v383 = vand.u32 %v382, 4294901760
  %v384 = vsub.f32 %v382, %v383
  %v385 = vand.u32 %v384, 4294901760
  %386 = vmatpush1.msra.mxu0 %v385
  %v387 = vand.u32 %v133, 4294901760
  %v388 = vsub.f32 %v133, %v387
  %v389 = vand.u32 %v388, 4294901760
  %v390 = vsub.f32 %v388, %v389
  %v391 = vand.u32 %v390, 4294901760
  %392 = vmatprep.subr.mxu0 %v391
  %v393 = vand.u32 %v132, 4294901760
  %v394 = vsub.f32 %v132, %v393
  %v395 = vand.u32 %v394, 4294901760
  %v396 = vsub.f32 %v394, %v395
  %v397 = vand.u32 %v396, 4294901760
  %398 = vmatpush1.msra.mxu0 %v397
  %v399 = vand.u32 %v131, 4294901760
  %v400 = vsub.f32 %v131, %v399
  %v401 = vand.u32 %v400, 4294901760
  %v402 = vsub.f32 %v400, %v401
  %v403 = vand.u32 %v402, 4294901760
  %404 = vmatprep.subr.mxu0 %v403
  %v405 = vand.u32 %v130, 4294901760
  %v406 = vsub.f32 %v130, %v405
  %v407 = vand.u32 %v406, 4294901760
  %v408 = vsub.f32 %v406, %v407
  %v409 = vand.u32 %v408, 4294901760
  %410 = vmatpush1.msra.mxu0 %v409
  %v411 = vand.u32 %v129, 4294901760
  %v412 = vsub.f32 %v129, %v411
  %v413 = vand.u32 %v412, 4294901760
  %v414 = vsub.f32 %v412, %v413
  %v415 = vand.u32 %v414, 4294901760
  %416 = vmatprep.subr.mxu0 %v415
  %v417 = vand.u32 %v128, 4294901760
  %v418 = vsub.f32 %v128, %v417
  %v419 = vand.u32 %v418, 4294901760
  %v420 = vsub.f32 %v418, %v419
  %v421 = vand.u32 %v420, 4294901760
  %422 = vmatpush1.msra.mxu0 %v421
  %v423 = vand.u32 %v127, 4294901760
  %v424 = vsub.f32 %v127, %v423
  %v425 = vand.u32 %v424, 4294901760
  %v426 = vsub.f32 %v424, %v425
  %v427 = vand.u32 %v426, 4294901760
  %428 = vmatprep.subr.mxu0 %v427
  %v429 = vand.u32 %v126, 4294901760
  %v430 = vsub.f32 %v126, %v429
  %v431 = vand.u32 %v430, 4294901760
  %v432 = vsub.f32 %v430, %v431
  %v433 = vand.u32 %v432, 4294901760
  %434 = vmatpush1.msra.mxu0 %v433
  %v435 = vand.u32 %v125, 4294901760
  %v436 = vsub.f32 %v125, %v435
  %v437 = vand.u32 %v436, 4294901760
  %v438 = vsub.f32 %v436, %v437
  %v439 = vand.u32 %v438, 4294901760
  %440 = vmatprep.subr.mxu0 %v439
  %v441 = vand.u32 %v124, 4294901760
  %v442 = vsub.f32 %v124, %v441
  %v443 = vand.u32 %v442, 4294901760
  %v444 = vsub.f32 %v442, %v443
  %v445 = vand.u32 %v444, 4294901760
  %446 = vmatpush1.msra.mxu0 %v445
  %v447 = vand.u32 %v123, 4294901760
  %v448 = vsub.f32 %v123, %v447
  %v449 = vand.u32 %v448, 4294901760
  %v450 = vsub.f32 %v448, %v449
  %v451 = vand.u32 %v450, 4294901760
  %452 = vmatprep.subr.mxu0 %v451
  %v453 = vand.u32 %v122, 4294901760
  %v454 = vsub.f32 %v122, %v453
  %v455 = vand.u32 %v454, 4294901760
  %v456 = vsub.f32 %v454, %v455
  %v457 = vand.u32 %v456, 4294901760
  %458 = vmatpush1.msra.mxu0 %v457
  %v459 = vand.u32 %v121, 4294901760
  %v460 = vsub.f32 %v121, %v459
  %v461 = vand.u32 %v460, 4294901760
  %v462 = vsub.f32 %v460, %v461
  %v463 = vand.u32 %v462, 4294901760
  %464 = vmatprep.subr.mxu0 %v463
  %v465 = vand.u32 %v120, 4294901760
  %v466 = vsub.f32 %v120, %v465
  %v467 = vand.u32 %v466, 4294901760
  %v468 = vsub.f32 %v466, %v467
  %v469 = vand.u32 %v468, 4294901760
  %470 = vmatpush1.msra.mxu0 %v469
  %v471 = vand.u32 %v119, 4294901760
  %v472 = vsub.f32 %v119, %v471
  %v473 = vand.u32 %v472, 4294901760
  %v474 = vsub.f32 %v472, %v473
  %v475 = vand.u32 %v474, 4294901760
  %476 = vmatprep.subr.mxu0 %v475
  %v477 = vand.u32 %v118, 4294901760
  %v478 = vsub.f32 %v118, %v477
  %v479 = vand.u32 %v478, 4294901760
  %v480 = vsub.f32 %v478, %v479
  %v481 = vand.u32 %v480, 4294901760
  %482 = vmatpush1.msra.mxu0 %v481
  %483 = vmatprep.subr.mxu0 0.0
  %484 = vmatpush2.msra.mxu0 0.0
  %485 = vmatprep.subr.mxu0 0.0
  %486 = vmatpush2.msra.mxu0 0.0
  %487 = vmatprep.subr.mxu0 0.0
  %488 = vmatpush2.msra.mxu0 0.0
  %489 = vmatprep.subr.mxu0 0.0
  %490 = vmatpush2.msra.mxu0 0.0
  %491 = vmatprep.subr.mxu0 0.0
  %492 = vmatpush2.msra.mxu0 0.0
  %493 = vmatprep.subr.mxu0 0.0
  %494 = vmatpush2.msra.mxu0 0.0
  %495 = vmatprep.subr.mxu0 0.0
  %496 = vmatpush2.msra.mxu0 0.0
  %497 = vmatprep.subr.mxu0 0.0
  %498 = vmatpush2.msra.mxu0 0.0
  %499 = vmatprep.subr.mxu0 0.0
  %500 = vmatpush2.msra.mxu0 0.0
  %501 = vmatprep.subr.mxu0 0.0
  %502 = vmatpush2.msra.mxu0 0.0
  %503 = vmatprep.subr.mxu0 0.0
  %504 = vmatpush2.msra.mxu0 0.0
  %505 = vmatprep.subr.mxu0 0.0
  %506 = vmatpush2.msra.mxu0 0.0
  %507 = vmatprep.subr.mxu0 0.0
  %508 = vmatpush2.msra.mxu0 0.0
  %509 = vmatprep.subr.mxu0 0.0
  %510 = vmatpush2.msra.mxu0 0.0
  %511 = vmatprep.subr.mxu0 0.0
  %512 = vmatpush2.msra.mxu0 0.0
  %513 = vmatprep.subr.mxu0 0.0
  %514 = vmatpush2.msra.mxu0 0.0
  %515 = vmatprep.mubr.f32.mxu0 0.0
  %v516 = vand.u32 %v20, 4294901760
  %517 = vmatmul.mubr.f32.gmra.mxu0 %v516
  %v518 = vpop.f32.mrf.mxu0
  %v519 = vadd.f32 %v254, %v518
  %v520 = vpop.f32.mrf.mxu0
  %v521 = vadd.f32 %v256, %v520
  %522 = vmatprep.mubr.f32.mxu0 0.0
  %v523 = vand.u32 %v21, 4294901760
  %524 = vmatmul.mubr.f32.gmra.mxu0 %v523
  %v525 = vpop.f32.mrf.mxu0
  %v526 = vadd.f32 %v265, %v525
  %v527 = vpop.f32.mrf.mxu0
  %v528 = vadd.f32 %v267, %v527
  %529 = vmatprep.mubr.f32.mxu0 0.0
  %v530 = vand.u32 %v22, 4294901760
  %531 = vmatmul.mubr.f32.gmra.mxu0 %v530
  %v532 = vpop.f32.mrf.mxu0
  %v533 = vadd.f32 %v276, %v532
  %v534 = vpop.f32.mrf.mxu0
  %v535 = vadd.f32 %v278, %v534
  %536 = vmatprep.mubr.f32.mxu0 0.0
  %v537 = vand.u32 %v23, 4294901760
  %538 = vmatmul.mubr.f32.gmra.mxu0 %v537
  %v539 = vpop.f32.mrf.mxu0
  %v540 = vadd.f32 %v287, %v539
  %v541 = vpop.f32.mrf.mxu0
  %v542 = vadd.f32 %v289, %v541
  %543 = vdwg.mxu0
  %v544 = vand.u32 %v149, 4294901760
  %v545 = vsub.f32 %v149, %v544
  %546 = vmatprep.subr.mxu0 %v545
  %v547 = vand.u32 %v148, 4294901760
  %v548 = vsub.f32 %v148, %v547
  %549 = vmatpush1.msra.mxu0 %v548
  %v550 = vand.u32 %v147, 4294901760
  %v551 = vsub.f32 %v147, %v550
  %552 = vmatprep.subr.mxu0 %v551
  %v553 = vand.u32 %v146, 4294901760
  %v554 = vsub.f32 %v146, %v553
  %555 = vmatpush1.msra.mxu0 %v554
  %v556 = vand.u32 %v145, 4294901760
  %v557 = vsub.f32 %v145, %v556
  %558 = vmatprep.subr.mxu0 %v557
  %v559 = vand.u32 %v144, 4294901760
  %v560 = vsub.f32 %v144, %v559
  %561 = vmatpush1.msra.mxu0 %v560
  %v562 = vand.u32 %v143, 4294901760
  %v563 = vsub.f32 %v143, %v562
  %564 = vmatprep.subr.mxu0 %v563
  %v565 = vand.u32 %v142, 4294901760
  %v566 = vsub.f32 %v142, %v565
  %567 = vmatpush1.msra.mxu0 %v566
  %v568 = vand.u32 %v141, 4294901760
  %v569 = vsub.f32 %v141, %v568
  %570 = vmatprep.subr.mxu0 %v569
  %v571 = vand.u32 %v140, 4294901760
  %v572 = vsub.f32 %v140, %v571
  %573 = vmatpush1.msra.mxu0 %v572
  %v574 = vand.u32 %v139, 4294901760
  %v575 = vsub.f32 %v139, %v574
  %576 = vmatprep.subr.mxu0 %v575
  %v577 = vand.u32 %v138, 4294901760
  %v578 = vsub.f32 %v138, %v577
  %579 = vmatpush1.msra.mxu0 %v578
  %v580 = vand.u32 %v137, 4294901760
  %v581 = vsub.f32 %v137, %v580
  %582 = vmatprep.subr.mxu0 %v581
  %v583 = vand.u32 %v136, 4294901760
  %v584 = vsub.f32 %v136, %v583
  %585 = vmatpush1.msra.mxu0 %v584
  %v586 = vand.u32 %v135, 4294901760
  %v587 = vsub.f32 %v135, %v586
  %588 = vmatprep.subr.mxu0 %v587
  %v589 = vand.u32 %v134, 4294901760
  %v590 = vsub.f32 %v134, %v589
  %591 = vmatpush1.msra.mxu0 %v590
  %v592 = vand.u32 %v133, 4294901760
  %v593 = vsub.f32 %v133, %v592
  %594 = vmatprep.subr.mxu0 %v593
  %v595 = vand.u32 %v132, 4294901760
  %v596 = vsub.f32 %v132, %v595
  %597 = vmatpush1.msra.mxu0 %v596
  %v598 = vand.u32 %v131, 4294901760
  %v599 = vsub.f32 %v131, %v598
  %600 = vmatprep.subr.mxu0 %v599
  %v601 = vand.u32 %v130, 4294901760
  %v602 = vsub.f32 %v130, %v601
  %603 = vmatpush1.msra.mxu0 %v602
  %v604 = vand.u32 %v129, 4294901760
  %v605 = vsub.f32 %v129, %v604
  %606 = vmatprep.subr.mxu0 %v605
  %v607 = vand.u32 %v128, 4294901760
  %v608 = vsub.f32 %v128, %v607
  %609 = vmatpush1.msra.mxu0 %v608
  %v610 = vand.u32 %v127, 4294901760
  %v611 = vsub.f32 %v127, %v610
  %612 = vmatprep.subr.mxu0 %v611
  %v613 = vand.u32 %v126, 4294901760
  %v614 = vsub.f32 %v126, %v613
  %615 = vmatpush1.msra.mxu0 %v614
  %v616 = vand.u32 %v125, 4294901760
  %v617 = vsub.f32 %v125, %v616
  %618 = vmatprep.subr.mxu0 %v617
  %v619 = vand.u32 %v124, 4294901760
  %v620 = vsub.f32 %v124, %v619
  %621 = vmatpush1.msra.mxu0 %v620
  %v622 = vand.u32 %v123, 4294901760
  %v623 = vsub.f32 %v123, %v622
  %624 = vmatprep.subr.mxu0 %v623
  %v625 = vand.u32 %v122, 4294901760
  %v626 = vsub.f32 %v122, %v625
  %627 = vmatpush1.msra.mxu0 %v626
  %v628 = vand.u32 %v121, 4294901760
  %v629 = vsub.f32 %v121, %v628
  %630 = vmatprep.subr.mxu0 %v629
  %v631 = vand.u32 %v120, 4294901760
  %v632 = vsub.f32 %v120, %v631
  %633 = vmatpush1.msra.mxu0 %v632
  %v634 = vand.u32 %v119, 4294901760
  %v635 = vsub.f32 %v119, %v634
  %636 = vmatprep.subr.mxu0 %v635
  %v637 = vand.u32 %v118, 4294901760
  %v638 = vsub.f32 %v118, %v637
  %639 = vmatpush1.msra.mxu0 %v638
  %640 = vmatprep.subr.mxu0 0.0
  %641 = vmatpush2.msra.mxu0 0.0
  %642 = vmatprep.subr.mxu0 0.0
  %643 = vmatpush2.msra.mxu0 0.0
  %644 = vmatprep.subr.mxu0 0.0
  %645 = vmatpush2.msra.mxu0 0.0
  %646 = vmatprep.subr.mxu0 0.0
  %647 = vmatpush2.msra.mxu0 0.0
  %648 = vmatprep.subr.mxu0 0.0
  %649 = vmatpush2.msra.mxu0 0.0
  %650 = vmatprep.subr.mxu0 0.0
  %651 = vmatpush2.msra.mxu0 0.0
  %652 = vmatprep.subr.mxu0 0.0
  %653 = vmatpush2.msra.mxu0 0.0
  %654 = vmatprep.subr.mxu0 0.0
  %655 = vmatpush2.msra.mxu0 0.0
  %656 = vmatprep.subr.mxu0 0.0
  %657 = vmatpush2.msra.mxu0 0.0
  %658 = vmatprep.subr.mxu0 0.0
  %659 = vmatpush2.msra.mxu0 0.0
  %660 = vmatprep.subr.mxu0 0.0
  %661 = vmatpush2.msra.mxu0 0.0
  %662 = vmatprep.subr.mxu0 0.0
  %663 = vmatpush2.msra.mxu0 0.0
  %664 = vmatprep.subr.mxu0 0.0
  %665 = vmatpush2.msra.mxu0 0.0
  %666 = vmatprep.subr.mxu0 0.0
  %667 = vmatpush2.msra.mxu0 0.0
  %668 = vmatprep.subr.mxu0 0.0
  %669 = vmatpush2.msra.mxu0 0.0
  %670 = vmatprep.subr.mxu0 0.0
  %671 = vmatpush2.msra.mxu0 0.0
  %672 = vmatprep.mubr.f32.mxu0 0.0
  %v673 = vand.u32 %v20, 4294901760
  %v674 = vsub.f32 %v20, %v673
  %675 = vmatmul.mubr.f32.gmra.mxu0 %v674
  %v676 = vpop.f32.mrf.mxu0
  %v677 = vadd.f32 %v519, %v676
  %v678 = vpop.f32.mrf.mxu0
  %v679 = vadd.f32 %v521, %v678
  %680 = vmatprep.mubr.f32.mxu0 0.0
  %v681 = vand.u32 %v21, 4294901760
  %v682 = vsub.f32 %v21, %v681
  %683 = vmatmul.mubr.f32.gmra.mxu0 %v682
  %v684 = vpop.f32.mrf.mxu0
  %v685 = vadd.f32 %v526, %v684
  %v686 = vpop.f32.mrf.mxu0
  %v687 = vadd.f32 %v528, %v686
  %688 = vmatprep.mubr.f32.mxu0 0.0
  %v689 = vand.u32 %v22, 4294901760
  %v690 = vsub.f32 %v22, %v689
  %691 = vmatmul.mubr.f32.gmra.mxu0 %v690
  %v692 = vpop.f32.mrf.mxu0
  %v693 = vadd.f32 %v533, %v692
  %v694 = vpop.f32.mrf.mxu0
  %v695 = vadd.f32 %v535, %v694
  %696 = vmatprep.mubr.f32.mxu0 0.0
  %v697 = vand.u32 %v23, 4294901760
  %v698 = vsub.f32 %v23, %v697
  %699 = vmatmul.mubr.f32.gmra.mxu0 %v698
  %v700 = vpop.f32.mrf.mxu0
  %v701 = vadd.f32 %v540, %v700
  %v702 = vpop.f32.mrf.mxu0
  %v703 = vadd.f32 %v542, %v702
  %704 = vdwg.mxu0
  %v705 = vand.u32 %v149, 4294901760
  %706 = vmatprep.subr.mxu0 %v705
  %v707 = vand.u32 %v148, 4294901760
  %708 = vmatpush1.msra.mxu0 %v707
  %v709 = vand.u32 %v147, 4294901760
  %710 = vmatprep.subr.mxu0 %v709
  %v711 = vand.u32 %v146, 4294901760
  %712 = vmatpush1.msra.mxu0 %v711
  %v713 = vand.u32 %v145, 4294901760
  %714 = vmatprep.subr.mxu0 %v713
  %v715 = vand.u32 %v144, 4294901760
  %716 = vmatpush1.msra.mxu0 %v715
  %v717 = vand.u32 %v143, 4294901760
  %718 = vmatprep.subr.mxu0 %v717
  %v719 = vand.u32 %v142, 4294901760
  %720 = vmatpush1.msra.mxu0 %v719
  %v721 = vand.u32 %v141, 4294901760
  %722 = vmatprep.subr.mxu0 %v721
  %v723 = vand.u32 %v140, 4294901760
  %724 = vmatpush1.msra.mxu0 %v723
  %v725 = vand.u32 %v139, 4294901760
  %726 = vmatprep.subr.mxu0 %v725
  %v727 = vand.u32 %v138, 4294901760
  %728 = vmatpush1.msra.mxu0 %v727
  %v729 = vand.u32 %v137, 4294901760
  %730 = vmatprep.subr.mxu0 %v729
  %v731 = vand.u32 %v136, 4294901760
  %732 = vmatpush1.msra.mxu0 %v731
  %v733 = vand.u32 %v135, 4294901760
  %734 = vmatprep.subr.mxu0 %v733
  %v735 = vand.u32 %v134, 4294901760
  %736 = vmatpush1.msra.mxu0 %v735
  %v737 = vand.u32 %v133, 4294901760
  %738 = vmatprep.subr.mxu0 %v737
  %v739 = vand.u32 %v132, 4294901760
  %740 = vmatpush1.msra.mxu0 %v739
  %v741 = vand.u32 %v131, 4294901760
  %742 = vmatprep.subr.mxu0 %v741
  %v743 = vand.u32 %v130, 4294901760
  %744 = vmatpush1.msra.mxu0 %v743
  %v745 = vand.u32 %v129, 4294901760
  %746 = vmatprep.subr.mxu0 %v745
  %v747 = vand.u32 %v128, 4294901760
  %748 = vmatpush1.msra.mxu0 %v747
  %v749 = vand.u32 %v127, 4294901760
  %750 = vmatprep.subr.mxu0 %v749
  %v751 = vand.u32 %v126, 4294901760
  %752 = vmatpush1.msra.mxu0 %v751
  %v753 = vand.u32 %v125, 4294901760
  %754 = vmatprep.subr.mxu0 %v753
  %v755 = vand.u32 %v124, 4294901760
  %756 = vmatpush1.msra.mxu0 %v755
  %v757 = vand.u32 %v123, 4294901760
  %758 = vmatprep.subr.mxu0 %v757
  %v759 = vand.u32 %v122, 4294901760
  %760 = vmatpush1.msra.mxu0 %v759
  %v761 = vand.u32 %v121, 4294901760
  %762 = vmatprep.subr.mxu0 %v761
  %v763 = vand.u32 %v120, 4294901760
  %764 = vmatpush1.msra.mxu0 %v763
  %v765 = vand.u32 %v119, 4294901760
  %766 = vmatprep.subr.mxu0 %v765
  %v767 = vand.u32 %v118, 4294901760
  %768 = vmatpush1.msra.mxu0 %v767
  %769 = vmatprep.subr.mxu0 0.0
  %770 = vmatpush2.msra.mxu0 0.0
  %771 = vmatprep.subr.mxu0 0.0
  %772 = vmatpush2.msra.mxu0 0.0
  %773 = vmatprep.subr.mxu0 0.0
  %774 = vmatpush2.msra.mxu0 0.0
  %775 = vmatprep.subr.mxu0 0.0
  %776 = vmatpush2.msra.mxu0 0.0
  %777 = vmatprep.subr.mxu0 0.0
  %778 = vmatpush2.msra.mxu0 0.0
  %779 = vmatprep.subr.mxu0 0.0
  %780 = vmatpush2.msra.mxu0 0.0
  %781 = vmatprep.subr.mxu0 0.0
  %782 = vmatpush2.msra.mxu0 0.0
  %783 = vmatprep.subr.mxu0 0.0
  %784 = vmatpush2.msra.mxu0 0.0
  %785 = vmatprep.subr.mxu0 0.0
  %786 = vmatpush2.msra.mxu0 0.0
  %787 = vmatprep.subr.mxu0 0.0
  %788 = vmatpush2.msra.mxu0 0.0
  %789 = vmatprep.subr.mxu0 0.0
  %790 = vmatpush2.msra.mxu0 0.0
  %791 = vmatprep.subr.mxu0 0.0
  %792 = vmatpush2.msra.mxu0 0.0
  %793 = vmatprep.subr.mxu0 0.0
  %794 = vmatpush2.msra.mxu0 0.0
  %795 = vmatprep.subr.mxu0 0.0
  %796 = vmatpush2.msra.mxu0 0.0
  %797 = vmatprep.subr.mxu0 0.0
  %798 = vmatpush2.msra.mxu0 0.0
  %799 = vmatprep.subr.mxu0 0.0
  %800 = vmatpush2.msra.mxu0 0.0
  %801 = vmatprep.mubr.f32.mxu0 0.0
  %v802 = vand.u32 %v20, 4294901760
  %v803 = vsub.f32 %v20, %v802
  %v804 = vand.u32 %v803, 4294901760
  %805 = vmatmul.mubr.f32.gmra.mxu0 %v804
  %v806 = vpop.f32.mrf.mxu0
  %v807 = vadd.f32 %v677, %v806
  %v808 = vpop.f32.mrf.mxu0
  %v809 = vadd.f32 %v679, %v808
  %810 = vmatprep.mubr.f32.mxu0 0.0
  %v811 = vand.u32 %v21, 4294901760
  %v812 = vsub.f32 %v21, %v811
  %v813 = vand.u32 %v812, 4294901760
  %814 = vmatmul.mubr.f32.gmra.mxu0 %v813
  %v815 = vpop.f32.mrf.mxu0
  %v816 = vadd.f32 %v685, %v815
  %v817 = vpop.f32.mrf.mxu0
  %v818 = vadd.f32 %v687, %v817
  %819 = vmatprep.mubr.f32.mxu0 0.0
  %v820 = vand.u32 %v22, 4294901760
  %v821 = vsub.f32 %v22, %v820
  %v822 = vand.u32 %v821, 4294901760
  %823 = vmatmul.mubr.f32.gmra.mxu0 %v822
  %v824 = vpop.f32.mrf.mxu0
  %v825 = vadd.f32 %v693, %v824
  %v826 = vpop.f32.mrf.mxu0
  %v827 = vadd.f32 %v695, %v826
  %828 = vmatprep.mubr.f32.mxu0 0.0
  %v829 = vand.u32 %v23, 4294901760
  %v830 = vsub.f32 %v23, %v829
  %v831 = vand.u32 %v830, 4294901760
  %832 = vmatmul.mubr.f32.gmra.mxu0 %v831
  %v833 = vpop.f32.mrf.mxu0
  %v834 = vadd.f32 %v701, %v833
  %v835 = vpop.f32.mrf.mxu0
  %v836 = vadd.f32 %v703, %v835
  %837 = vdwg.mxu0
  %v838 = vand.u32 %v149, 4294901760
  %v839 = vsub.f32 %v149, %v838
  %v840 = vand.u32 %v839, 4294901760
  %841 = vmatprep.subr.mxu0 %v840
  %v842 = vand.u32 %v148, 4294901760
  %v843 = vsub.f32 %v148, %v842
  %v844 = vand.u32 %v843, 4294901760
  %845 = vmatpush1.msra.mxu0 %v844
  %v846 = vand.u32 %v147, 4294901760
  %v847 = vsub.f32 %v147, %v846
  %v848 = vand.u32 %v847, 4294901760
  %849 = vmatprep.subr.mxu0 %v848
  %v850 = vand.u32 %v146, 4294901760
  %v851 = vsub.f32 %v146, %v850
  %v852 = vand.u32 %v851, 4294901760
  %853 = vmatpush1.msra.mxu0 %v852
  %v854 = vand.u32 %v145, 4294901760
  %v855 = vsub.f32 %v145, %v854
  %v856 = vand.u32 %v855, 4294901760
  %857 = vmatprep.subr.mxu0 %v856
  %v858 = vand.u32 %v144, 4294901760
  %v859 = vsub.f32 %v144, %v858
  %v860 = vand.u32 %v859, 4294901760
  %861 = vmatpush1.msra.mxu0 %v860
  %v862 = vand.u32 %v143, 4294901760
  %v863 = vsub.f32 %v143, %v862
  %v864 = vand.u32 %v863, 4294901760
  %865 = vmatprep.subr.mxu0 %v864
  %v866 = vand.u32 %v142, 4294901760
  %v867 = vsub.f32 %v142, %v866
  %v868 = vand.u32 %v867, 4294901760
  %869 = vmatpush1.msra.mxu0 %v868
  %v870 = vand.u32 %v141, 4294901760
  %v871 = vsub.f32 %v141, %v870
  %v872 = vand.u32 %v871, 4294901760
  %873 = vmatprep.subr.mxu0 %v872
  %v874 = vand.u32 %v140, 4294901760
  %v875 = vsub.f32 %v140, %v874
  %v876 = vand.u32 %v875, 4294901760
  %877 = vmatpush1.msra.mxu0 %v876
  %v878 = vand.u32 %v139, 4294901760
  %v879 = vsub.f32 %v139, %v878
  %v880 = vand.u32 %v879, 4294901760
  %881 = vmatprep.subr.mxu0 %v880
  %v882 = vand.u32 %v138, 4294901760
  %v883 = vsub.f32 %v138, %v882
  %v884 = vand.u32 %v883, 4294901760
  %885 = vmatpush1.msra.mxu0 %v884
  %v886 = vand.u32 %v137, 4294901760
  %v887 = vsub.f32 %v137, %v886
  %v888 = vand.u32 %v887, 4294901760
  %889 = vmatprep.subr.mxu0 %v888
  %v890 = vand.u32 %v136, 4294901760
  %v891 = vsub.f32 %v136, %v890
  %v892 = vand.u32 %v891, 4294901760
  %893 = vmatpush1.msra.mxu0 %v892
  %v894 = vand.u32 %v135, 4294901760
  %v895 = vsub.f32 %v135, %v894
  %v896 = vand.u32 %v895, 4294901760
  %897 = vmatprep.subr.mxu0 %v896
  %v898 = vand.u32 %v134, 4294901760
  %v899 = vsub.f32 %v134, %v898
  %v900 = vand.u32 %v899, 4294901760
  %901 = vmatpush1.msra.mxu0 %v900
  %v902 = vand.u32 %v133, 4294901760
  %v903 = vsub.f32 %v133, %v902
  %v904 = vand.u32 %v903, 4294901760
  %905 = vmatprep.subr.mxu0 %v904
  %v906 = vand.u32 %v132, 4294901760
  %v907 = vsub.f32 %v132, %v906
  %v908 = vand.u32 %v907, 4294901760
  %909 = vmatpush1.msra.mxu0 %v908
  %v910 = vand.u32 %v131, 4294901760
  %v911 = vsub.f32 %v131, %v910
  %v912 = vand.u32 %v911, 4294901760
  %913 = vmatprep.subr.mxu0 %v912
  %v914 = vand.u32 %v130, 4294901760
  %v915 = vsub.f32 %v130, %v914
  %v916 = vand.u32 %v915, 4294901760
  %917 = vmatpush1.msra.mxu0 %v916
  %v918 = vand.u32 %v129, 4294901760
  %v919 = vsub.f32 %v129, %v918
  %v920 = vand.u32 %v919, 4294901760
  %921 = vmatprep.subr.mxu0 %v920
  %v922 = vand.u32 %v128, 4294901760
  %v923 = vsub.f32 %v128, %v922
  %v924 = vand.u32 %v923, 4294901760
  %925 = vmatpush1.msra.mxu0 %v924
  %v926 = vand.u32 %v127, 4294901760
  %v927 = vsub.f32 %v127, %v926
  %v928 = vand.u32 %v927, 4294901760
  %929 = vmatprep.subr.mxu0 %v928
  %v930 = vand.u32 %v126, 4294901760
  %v931 = vsub.f32 %v126, %v930
  %v932 = vand.u32 %v931, 4294901760
  %933 = vmatpush1.msra.mxu0 %v932
  %v934 = vand.u32 %v125, 4294901760
  %v935 = vsub.f32 %v125, %v934
  %v936 = vand.u32 %v935, 4294901760
  %937 = vmatprep.subr.mxu0 %v936
  %v938 = vand.u32 %v124, 4294901760
  %v939 = vsub.f32 %v124, %v938
  %v940 = vand.u32 %v939, 4294901760
  %941 = vmatpush1.msra.mxu0 %v940
  %v942 = vand.u32 %v123, 4294901760
  %v943 = vsub.f32 %v123, %v942
  %v944 = vand.u32 %v943, 4294901760
  %945 = vmatprep.subr.mxu0 %v944
  %v946 = vand.u32 %v122, 4294901760
  %v947 = vsub.f32 %v122, %v946
  %v948 = vand.u32 %v947, 4294901760
  %949 = vmatpush1.msra.mxu0 %v948
  %v950 = vand.u32 %v121, 4294901760
  %v951 = vsub.f32 %v121, %v950
  %v952 = vand.u32 %v951, 4294901760
  %953 = vmatprep.subr.mxu0 %v952
  %v954 = vand.u32 %v120, 4294901760
  %v955 = vsub.f32 %v120, %v954
  %v956 = vand.u32 %v955, 4294901760
  %957 = vmatpush1.msra.mxu0 %v956
  %v958 = vand.u32 %v119, 4294901760
  %v959 = vsub.f32 %v119, %v958
  %v960 = vand.u32 %v959, 4294901760
  %961 = vmatprep.subr.mxu0 %v960
  %v962 = vand.u32 %v118, 4294901760
  %v963 = vsub.f32 %v118, %v962
  %v964 = vand.u32 %v963, 4294901760
  %965 = vmatpush1.msra.mxu0 %v964
  %966 = vmatprep.subr.mxu0 0.0
  %967 = vmatpush2.msra.mxu0 0.0
  %968 = vmatprep.subr.mxu0 0.0
  %969 = vmatpush2.msra.mxu0 0.0
  %970 = vmatprep.subr.mxu0 0.0
  %971 = vmatpush2.msra.mxu0 0.0
  %972 = vmatprep.subr.mxu0 0.0
  %973 = vmatpush2.msra.mxu0 0.0
  %974 = vmatprep.subr.mxu0 0.0
  %975 = vmatpush2.msra.mxu0 0.0
  %976 = vmatprep.subr.mxu0 0.0
  %977 = vmatpush2.msra.mxu0 0.0
  %978 = vmatprep.subr.mxu0 0.0
  %979 = vmatpush2.msra.mxu0 0.0
  %980 = vmatprep.subr.mxu0 0.0
  %981 = vmatpush2.msra.mxu0 0.0
  %982 = vmatprep.subr.mxu0 0.0
  %983 = vmatpush2.msra.mxu0 0.0
  %984 = vmatprep.subr.mxu0 0.0
  %985 = vmatpush2.msra.mxu0 0.0
  %986 = vmatprep.subr.mxu0 0.0
  %987 = vmatpush2.msra.mxu0 0.0
  %988 = vmatprep.subr.mxu0 0.0
  %989 = vmatpush2.msra.mxu0 0.0
  %990 = vmatprep.subr.mxu0 0.0
  %991 = vmatpush2.msra.mxu0 0.0
  %992 = vmatprep.subr.mxu0 0.0
  %993 = vmatpush2.msra.mxu0 0.0
  %994 = vmatprep.subr.mxu0 0.0
  %995 = vmatpush2.msra.mxu0 0.0
  %996 = vmatprep.subr.mxu0 0.0
  %997 = vmatpush2.msra.mxu0 0.0
  %998 = vmatprep.mubr.f32.mxu0 0.0
  %v999 = vand.u32 %v20, 4294901760
  %1000 = vmatmul.mubr.f32.gmra.mxu0 %v999
  %v1001 = vpop.f32.mrf.mxu0
  %v1002 = vadd.f32 %v807, %v1001
  %v1003 = vpop.f32.mrf.mxu0
  %v1004 = vadd.f32 %v809, %v1003
  %1005 = vmatprep.mubr.f32.mxu0 0.0
  %v1006 = vand.u32 %v21, 4294901760
  %1007 = vmatmul.mubr.f32.gmra.mxu0 %v1006
  %v1008 = vpop.f32.mrf.mxu0
  %v1009 = vadd.f32 %v816, %v1008
  %v1010 = vpop.f32.mrf.mxu0
  %v1011 = vadd.f32 %v818, %v1010
  %1012 = vmatprep.mubr.f32.mxu0 0.0
  %v1013 = vand.u32 %v22, 4294901760
  %1014 = vmatmul.mubr.f32.gmra.mxu0 %v1013
  %v1015 = vpop.f32.mrf.mxu0
  %v1016 = vadd.f32 %v825, %v1015
  %v1017 = vpop.f32.mrf.mxu0
  %v1018 = vadd.f32 %v827, %v1017
  %1019 = vmatprep.mubr.f32.mxu0 0.0
  %v1020 = vand.u32 %v23, 4294901760
  %1021 = vmatmul.mubr.f32.gmra.mxu0 %v1020
  %v1022 = vpop.f32.mrf.mxu0
  %v1023 = vadd.f32 %v834, %v1022
  %v1024 = vpop.f32.mrf.mxu0
  %v1025 = vadd.f32 %v836, %v1024
  %1026 = vdwg.mxu0
  %v1027 = vand.u32 %v149, 4294901760
  %1028 = vmatprep.subr.mxu0 %v1027
  %v1029 = vand.u32 %v148, 4294901760
  %1030 = vmatpush1.msra.mxu0 %v1029
  %v1031 = vand.u32 %v147, 4294901760
  %1032 = vmatprep.subr.mxu0 %v1031
  %v1033 = vand.u32 %v146, 4294901760
  %1034 = vmatpush1.msra.mxu0 %v1033
  %v1035 = vand.u32 %v145, 4294901760
  %1036 = vmatprep.subr.mxu0 %v1035
  %v1037 = vand.u32 %v144, 4294901760
  %1038 = vmatpush1.msra.mxu0 %v1037
  %v1039 = vand.u32 %v143, 4294901760
  %1040 = vmatprep.subr.mxu0 %v1039
  %v1041 = vand.u32 %v142, 4294901760
  %1042 = vmatpush1.msra.mxu0 %v1041
  %v1043 = vand.u32 %v141, 4294901760
  %1044 = vmatprep.subr.mxu0 %v1043
  %v1045 = vand.u32 %v140, 4294901760
  %1046 = vmatpush1.msra.mxu0 %v1045
  %v1047 = vand.u32 %v139, 4294901760
  %1048 = vmatprep.subr.mxu0 %v1047
  %v1049 = vand.u32 %v138, 4294901760
  %1050 = vmatpush1.msra.mxu0 %v1049
  %v1051 = vand.u32 %v137, 4294901760
  %1052 = vmatprep.subr.mxu0 %v1051
  %v1053 = vand.u32 %v136, 4294901760
  %1054 = vmatpush1.msra.mxu0 %v1053
  %v1055 = vand.u32 %v135, 4294901760
  %1056 = vmatprep.subr.mxu0 %v1055
  %v1057 = vand.u32 %v134, 4294901760
  %1058 = vmatpush1.msra.mxu0 %v1057
  %v1059 = vand.u32 %v133, 4294901760
  %1060 = vmatprep.subr.mxu0 %v1059
  %v1061 = vand.u32 %v132, 4294901760
  %1062 = vmatpush1.msra.mxu0 %v1061
  %v1063 = vand.u32 %v131, 4294901760
  %1064 = vmatprep.subr.mxu0 %v1063
  %v1065 = vand.u32 %v130, 4294901760
  %1066 = vmatpush1.msra.mxu0 %v1065
  %v1067 = vand.u32 %v129, 4294901760
  %1068 = vmatprep.subr.mxu0 %v1067
  %v1069 = vand.u32 %v128, 4294901760
  %1070 = vmatpush1.msra.mxu0 %v1069
  %v1071 = vand.u32 %v127, 4294901760
  %1072 = vmatprep.subr.mxu0 %v1071
  %v1073 = vand.u32 %v126, 4294901760
  %1074 = vmatpush1.msra.mxu0 %v1073
  %v1075 = vand.u32 %v125, 4294901760
  %1076 = vmatprep.subr.mxu0 %v1075
  %v1077 = vand.u32 %v124, 4294901760
  %1078 = vmatpush1.msra.mxu0 %v1077
  %v1079 = vand.u32 %v123, 4294901760
  %1080 = vmatprep.subr.mxu0 %v1079
  %v1081 = vand.u32 %v122, 4294901760
  %1082 = vmatpush1.msra.mxu0 %v1081
  %v1083 = vand.u32 %v121, 4294901760
  %1084 = vmatprep.subr.mxu0 %v1083
  %v1085 = vand.u32 %v120, 4294901760
  %1086 = vmatpush1.msra.mxu0 %v1085
  %v1087 = vand.u32 %v119, 4294901760
  %1088 = vmatprep.subr.mxu0 %v1087
  %v1089 = vand.u32 %v118, 4294901760
  %1090 = vmatpush1.msra.mxu0 %v1089
  %1091 = vmatprep.subr.mxu0 0.0
  %1092 = vmatpush2.msra.mxu0 0.0
  %1093 = vmatprep.subr.mxu0 0.0
  %1094 = vmatpush2.msra.mxu0 0.0
  %1095 = vmatprep.subr.mxu0 0.0
  %1096 = vmatpush2.msra.mxu0 0.0
  %1097 = vmatprep.subr.mxu0 0.0
  %1098 = vmatpush2.msra.mxu0 0.0
  %1099 = vmatprep.subr.mxu0 0.0
  %1100 = vmatpush2.msra.mxu0 0.0
  %1101 = vmatprep.subr.mxu0 0.0
  %1102 = vmatpush2.msra.mxu0 0.0
  %1103 = vmatprep.subr.mxu0 0.0
  %1104 = vmatpush2.msra.mxu0 0.0
  %1105 = vmatprep.subr.mxu0 0.0
  %1106 = vmatpush2.msra.mxu0 0.0
  %1107 = vmatprep.subr.mxu0 0.0
  %1108 = vmatpush2.msra.mxu0 0.0
  %1109 = vmatprep.subr.mxu0 0.0
  %1110 = vmatpush2.msra.mxu0 0.0
  %1111 = vmatprep.subr.mxu0 0.0
  %1112 = vmatpush2.msra.mxu0 0.0
  %1113 = vmatprep.subr.mxu0 0.0
  %1114 = vmatpush2.msra.mxu0 0.0
  %1115 = vmatprep.subr.mxu0 0.0
  %1116 = vmatpush2.msra.mxu0 0.0
  %1117 = vmatprep.subr.mxu0 0.0
  %1118 = vmatpush2.msra.mxu0 0.0
  %1119 = vmatprep.subr.mxu0 0.0
  %1120 = vmatpush2.msra.mxu0 0.0
  %1121 = vmatprep.subr.mxu0 0.0
  %1122 = vmatpush2.msra.mxu0 0.0
  %1123 = vmatprep.mubr.f32.mxu0 0.0
  %v1124 = vand.u32 %v20, 4294901760
  %1125 = vmatmul.mubr.f32.gmra.mxu0 %v1124
  %v1126 = vpop.f32.mrf.mxu0
  %v1127 = vadd.f32 %v1002, %v1126
  %v1128 = vpop.f32.mrf.mxu0
  %v1129 = vadd.f32 %v1004, %v1128
  %1130 = vmatprep.mubr.f32.mxu0 0.0
  %v1131 = vand.u32 %v21, 4294901760
  %1132 = vmatmul.mubr.f32.gmra.mxu0 %v1131
  %v1133 = vpop.f32.mrf.mxu0
  %v1134 = vadd.f32 %v1009, %v1133
  %v1135 = vpop.f32.mrf.mxu0
  %v1136 = vadd.f32 %v1011, %v1135
  %1137 = vmatprep.mubr.f32.mxu0 0.0
  %v1138 = vand.u32 %v22, 4294901760
  %1139 = vmatmul.mubr.f32.gmra.mxu0 %v1138
  %v1140 = vpop.f32.mrf.mxu0
  %v1141 = vadd.f32 %v1016, %v1140
  %v1142 = vpop.f32.mrf.mxu0
  %v1143 = vadd.f32 %v1018, %v1142
  %1144 = vmatprep.mubr.f32.mxu0 0.0
  %v1145 = vand.u32 %v23, 4294901760
  %1146 = vmatmul.mubr.f32.gmra.mxu0 %v1145
  %v1147 = vpop.f32.mrf.mxu0
  %v1148 = vadd.f32 %v1023, %v1147
  %v1149 = vpop.f32.mrf.mxu0
  %v1150 = vadd.f32 %v1025, %v1149
  %1151 = vdwg.mxu0
  %v1152 = vtanh.pop %v1127
  %v1153 = vtanh.pop %v1129
  %v1154 = vtanh.pop %v1134
  %v1155 = vtanh.pop %v1136
  %v1156 = vtanh.pop %v1141
  %v1157 = vtanh.pop %v1143
  %v1158 = vtanh.pop %v1148
  %v1159 = vtanh.pop %v1150
  %v1160 = vld [vmem:[%s3] sm:$0x3]
  %v1161 = vlaneseq
  %v1162 = vshrl.u32 %v1161, 7
  %v1163 = vsub.s32 0, %v1162
  %v1164 = vrot.slane %v1160, %v1163
  %v1165 = vlaneseq
  %v1166 = vshrl.u32 %v1165, 7
  %v1167 = vsub.s32 1, %v1166
  %v1168 = vrot.slane %v1160, %v1167
  %vm1169 = vcmp.eq.s32.totalorder %v30, %v1164
  %vm1170 = vcmp.eq.s32.totalorder %v30, %v1168
  %vm1171 = vcmp.eq.s32.totalorder %v31, %v1164
  %vm1172 = vcmp.eq.s32.totalorder %v31, %v1168
  %vm1173 = vcmp.eq.s32.totalorder %v32, %v1164
  %vm1174 = vcmp.eq.s32.totalorder %v32, %v1168
  %vm1175 = vcmp.eq.s32.totalorder %v33, %v1164
  %vm1176 = vcmp.eq.s32.totalorder %v33, %v1168
  %vm1177 = vcmp.eq.s32.totalorder %v34, %v1164
  %vm1178 = vcmp.eq.s32.totalorder %v34, %v1168
  %vm1179 = vcmp.eq.s32.totalorder %v35, %v1164
  %vm1180 = vcmp.eq.s32.totalorder %v35, %v1168
  %vm1181 = vcmp.eq.s32.totalorder %v36, %v1164
  %vm1182 = vcmp.eq.s32.totalorder %v36, %v1168
  %vm1183 = vcmp.eq.s32.totalorder %v37, %v1164
  %vm1184 = vcmp.eq.s32.totalorder %v37, %v1168
  %vm1185 = vcmp.eq.s32.totalorder %v38, %v1164
  %vm1186 = vcmp.eq.s32.totalorder %v38, %v1168
  %vm1187 = vcmp.eq.s32.totalorder %v39, %v1164
  %vm1188 = vcmp.eq.s32.totalorder %v39, %v1168
  %vm1189 = vcmp.eq.s32.totalorder %v40, %v1164
  %vm1190 = vcmp.eq.s32.totalorder %v40, %v1168
  %vm1191 = vcmp.eq.s32.totalorder %v41, %v1164
  %vm1192 = vcmp.eq.s32.totalorder %v41, %v1168
  %vm1193 = vcmp.eq.s32.totalorder %v42, %v1164
  %vm1194 = vcmp.eq.s32.totalorder %v42, %v1168
  %vm1195 = vcmp.eq.s32.totalorder %v43, %v1164
  %vm1196 = vcmp.eq.s32.totalorder %v43, %v1168
  %vm1197 = vcmp.eq.s32.totalorder %v44, %v1164
  %vm1198 = vcmp.eq.s32.totalorder %v44, %v1168
  %vm1199 = vcmp.eq.s32.totalorder %v45, %v1164
  %vm1200 = vcmp.eq.s32.totalorder %v45, %v1168
  %v1201 = vsel %vm1169, 1, 0
  %v1202 = vsel %vm1170, 1, 0
  %v1203 = vsel %vm1171, 1, 0
  %v1204 = vsel %vm1172, 1, 0
  %v1205 = vsel %vm1173, 1, 0
  %v1206 = vsel %vm1174, 1, 0
  %v1207 = vsel %vm1175, 1, 0
  %v1208 = vsel %vm1176, 1, 0
  %v1209 = vsel %vm1177, 1, 0
  %v1210 = vsel %vm1178, 1, 0
  %v1211 = vsel %vm1179, 1, 0
  %v1212 = vsel %vm1180, 1, 0
  %v1213 = vsel %vm1181, 1, 0
  %v1214 = vsel %vm1182, 1, 0
  %v1215 = vsel %vm1183, 1, 0
  %v1216 = vsel %vm1184, 1, 0
  %v1217 = vsel %vm1185, 1, 0
  %v1218 = vsel %vm1186, 1, 0
  %v1219 = vsel %vm1187, 1, 0
  %v1220 = vsel %vm1188, 1, 0
  %v1221 = vsel %vm1189, 1, 0
  %v1222 = vsel %vm1190, 1, 0
  %v1223 = vsel %vm1191, 1, 0
  %v1224 = vsel %vm1192, 1, 0
  %v1225 = vsel %vm1193, 1, 0
  %v1226 = vsel %vm1194, 1, 0
  %v1227 = vsel %vm1195, 1, 0
  %v1228 = vsel %vm1196, 1, 0
  %v1229 = vsel %vm1197, 1, 0
  %v1230 = vsel %vm1198, 1, 0
  %v1231 = vsel %vm1199, 1, 0
  %v1232 = vsel %vm1200, 1, 0
  %v1233 = vcvt.s32.f32 %v1201
  %v1234 = vcvt.s32.f32 %v1202
  %v1235 = vcvt.s32.f32 %v1203
  %v1236 = vcvt.s32.f32 %v1204
  %v1237 = vcvt.s32.f32 %v1205
  %v1238 = vcvt.s32.f32 %v1206
  %v1239 = vcvt.s32.f32 %v1207
  %v1240 = vcvt.s32.f32 %v1208
  %v1241 = vcvt.s32.f32 %v1209
  %v1242 = vcvt.s32.f32 %v1210
  %v1243 = vcvt.s32.f32 %v1211
  %v1244 = vcvt.s32.f32 %v1212
  %v1245 = vcvt.s32.f32 %v1213
  %v1246 = vcvt.s32.f32 %v1214
  %v1247 = vcvt.s32.f32 %v1215
  %v1248 = vcvt.s32.f32 %v1216
  %v1249 = vcvt.s32.f32 %v1217
  %v1250 = vcvt.s32.f32 %v1218
  %v1251 = vcvt.s32.f32 %v1219
  %v1252 = vcvt.s32.f32 %v1220
  %v1253 = vcvt.s32.f32 %v1221
  %v1254 = vcvt.s32.f32 %v1222
  %v1255 = vcvt.s32.f32 %v1223
  %v1256 = vcvt.s32.f32 %v1224
  %v1257 = vcvt.s32.f32 %v1225
  %v1258 = vcvt.s32.f32 %v1226
  %v1259 = vcvt.s32.f32 %v1227
  %v1260 = vcvt.s32.f32 %v1228
  %v1261 = vcvt.s32.f32 %v1229
  %v1262 = vcvt.s32.f32 %v1230
  %v1263 = vcvt.s32.f32 %v1231
  %v1264 = vcvt.s32.f32 %v1232
  %v1265 = vand.u32 %v1264, 4294901760
  %1266 = vmatprep.subr.mxu0 %v1265
  %v1267 = vand.u32 %v1263, 4294901760
  %1268 = vmatpush1.msra.mxu0 %v1267
  %v1269 = vand.u32 %v1262, 4294901760
  %1270 = vmatprep.subr.mxu0 %v1269
  %v1271 = vand.u32 %v1261, 4294901760
  %1272 = vmatpush1.msra.mxu0 %v1271
  %v1273 = vand.u32 %v1260, 4294901760
  %1274 = vmatprep.subr.mxu0 %v1273
  %v1275 = vand.u32 %v1259, 4294901760
  %1276 = vmatpush1.msra.mxu0 %v1275
  %v1277 = vand.u32 %v1258, 4294901760
  %1278 = vmatprep.subr.mxu0 %v1277
  %v1279 = vand.u32 %v1257, 4294901760
  %1280 = vmatpush1.msra.mxu0 %v1279
  %v1281 = vand.u32 %v1256, 4294901760
  %1282 = vmatprep.subr.mxu0 %v1281
  %v1283 = vand.u32 %v1255, 4294901760
  %1284 = vmatpush1.msra.mxu0 %v1283
  %v1285 = vand.u32 %v1254, 4294901760
  %1286 = vmatprep.subr.mxu0 %v1285
  %v1287 = vand.u32 %v1253, 4294901760
  %1288 = vmatpush1.msra.mxu0 %v1287
  %v1289 = vand.u32 %v1252, 4294901760
  %1290 = vmatprep.subr.mxu0 %v1289
  %v1291 = vand.u32 %v1251, 4294901760
  %1292 = vmatpush1.msra.mxu0 %v1291
  %v1293 = vand.u32 %v1250, 4294901760
  %1294 = vmatprep.subr.mxu0 %v1293
  %v1295 = vand.u32 %v1249, 4294901760
  %1296 = vmatpush1.msra.mxu0 %v1295
  %v1297 = vand.u32 %v1248, 4294901760
  %1298 = vmatprep.subr.mxu0 %v1297
  %v1299 = vand.u32 %v1247, 4294901760
  %1300 = vmatpush1.msra.mxu0 %v1299
  %v1301 = vand.u32 %v1246, 4294901760
  %1302 = vmatprep.subr.mxu0 %v1301
  %v1303 = vand.u32 %v1245, 4294901760
  %1304 = vmatpush1.msra.mxu0 %v1303
  %v1305 = vand.u32 %v1244, 4294901760
  %1306 = vmatprep.subr.mxu0 %v1305
  %v1307 = vand.u32 %v1243, 4294901760
  %1308 = vmatpush1.msra.mxu0 %v1307
  %v1309 = vand.u32 %v1242, 4294901760
  %1310 = vmatprep.subr.mxu0 %v1309
  %v1311 = vand.u32 %v1241, 4294901760
  %1312 = vmatpush1.msra.mxu0 %v1311
  %v1313 = vand.u32 %v1240, 4294901760
  %1314 = vmatprep.subr.mxu0 %v1313
  %v1315 = vand.u32 %v1239, 4294901760
  %1316 = vmatpush1.msra.mxu0 %v1315
  %v1317 = vand.u32 %v1238, 4294901760
  %1318 = vmatprep.subr.mxu0 %v1317
  %v1319 = vand.u32 %v1237, 4294901760
  %1320 = vmatpush1.msra.mxu0 %v1319
  %v1321 = vand.u32 %v1236, 4294901760
  %1322 = vmatprep.subr.mxu0 %v1321
  %v1323 = vand.u32 %v1235, 4294901760
  %1324 = vmatpush1.msra.mxu0 %v1323
  %v1325 = vand.u32 %v1234, 4294901760
  %1326 = vmatprep.subr.mxu0 %v1325
  %v1327 = vand.u32 %v1233, 4294901760
  %1328 = vmatpush1.msra.mxu0 %v1327
  %1329 = vmatprep.subr.mxu0 0.0
  %1330 = vmatpush2.msra.mxu0 0.0
  %1331 = vmatprep.subr.mxu0 0.0
  %1332 = vmatpush2.msra.mxu0 0.0
  %1333 = vmatprep.subr.mxu0 0.0
  %1334 = vmatpush2.msra.mxu0 0.0
  %1335 = vmatprep.subr.mxu0 0.0
  %1336 = vmatpush2.msra.mxu0 0.0
  %1337 = vmatprep.subr.mxu0 0.0
  %1338 = vmatpush2.msra.mxu0 0.0
  %1339 = vmatprep.subr.mxu0 0.0
  %1340 = vmatpush2.msra.mxu0 0.0
  %1341 = vmatprep.subr.mxu0 0.0
  %1342 = vmatpush2.msra.mxu0 0.0
  %1343 = vmatprep.subr.mxu0 0.0
  %1344 = vmatpush2.msra.mxu0 0.0
  %1345 = vmatprep.subr.mxu0 0.0
  %1346 = vmatpush2.msra.mxu0 0.0
  %1347 = vmatprep.subr.mxu0 0.0
  %1348 = vmatpush2.msra.mxu0 0.0
  %1349 = vmatprep.subr.mxu0 0.0
  %1350 = vmatpush2.msra.mxu0 0.0
  %1351 = vmatprep.subr.mxu0 0.0
  %1352 = vmatpush2.msra.mxu0 0.0
  %1353 = vmatprep.subr.mxu0 0.0
  %1354 = vmatpush2.msra.mxu0 0.0
  %1355 = vmatprep.subr.mxu0 0.0
  %1356 = vmatpush2.msra.mxu0 0.0
  %1357 = vmatprep.subr.mxu0 0.0
  %1358 = vmatpush2.msra.mxu0 0.0
  %1359 = vmatprep.subr.mxu0 0.0
  %1360 = vmatpush2.msra.mxu0 0.0
  %1361 = vmatprep.mubr.f32.mxu0 0.0
  %v1362 = vand.u32 %v24, 4294901760
  %v1363 = vsub.f32 %v24, %v1362
  %v1364 = vand.u32 %v1363, 4294901760
  %v1365 = vsub.f32 %v1363, %v1364
  %v1366 = vand.u32 %v1365, 4294901760
  %1367 = vmatmul.mubr.f32.gmra.mxu0 %v1366
  %v1368 = vpop.f32.mrf.mxu0
  %v1369 = vadd.f32 0.0, %v1368
  %v1370 = vpop.f32.mrf.mxu0
  %v1371 = vadd.f32 0.0, %v1370
  %1372 = vmatprep.mubr.f32.mxu0 0.0
  %v1373 = vand.u32 %v25, 4294901760
  %v1374 = vsub.f32 %v25, %v1373
  %v1375 = vand.u32 %v1374, 4294901760
  %v1376 = vsub.f32 %v1374, %v1375
  %v1377 = vand.u32 %v1376, 4294901760
  %1378 = vmatmul.mubr.f32.gmra.mxu0 %v1377
  %v1379 = vpop.f32.mrf.mxu0
  %v1380 = vadd.f32 0.0, %v1379
  %v1381 = vpop.f32.mrf.mxu0
  %v1382 = vadd.f32 0.0, %v1381
  %1383 = vmatprep.mubr.f32.mxu0 0.0
  %v1384 = vand.u32 %v26, 4294901760
  %v1385 = vsub.f32 %v26, %v1384
  %v1386 = vand.u32 %v1385, 4294901760
  %v1387 = vsub.f32 %v1385, %v1386
  %v1388 = vand.u32 %v1387, 4294901760
  %1389 = vmatmul.mubr.f32.gmra.mxu0 %v1388
  %v1390 = vpop.f32.mrf.mxu0
  %v1391 = vadd.f32 0.0, %v1390
  %v1392 = vpop.f32.mrf.mxu0
  %v1393 = vadd.f32 0.0, %v1392
  %1394 = vmatprep.mubr.f32.mxu0 0.0
  %v1395 = vand.u32 %v27, 4294901760
  %v1396 = vsub.f32 %v27, %v1395
  %v1397 = vand.u32 %v1396, 4294901760
  %v1398 = vsub.f32 %v1396, %v1397
  %v1399 = vand.u32 %v1398, 4294901760
  %1400 = vmatmul.mubr.f32.gmra.mxu0 %v1399
  %v1401 = vpop.f32.mrf.mxu0
  %v1402 = vadd.f32 0.0, %v1401
  %v1403 = vpop.f32.mrf.mxu0
  %v1404 = vadd.f32 0.0, %v1403
  %1405 = vdwg.mxu0
  %v1406 = vand.u32 %v1264, 4294901760
  %v1407 = vsub.f32 %v1264, %v1406
  %v1408 = vand.u32 %v1407, 4294901760
  %v1409 = vsub.f32 %v1407, %v1408
  %v1410 = vand.u32 %v1409, 4294901760
  %1411 = vmatprep.subr.mxu0 %v1410
  %v1412 = vand.u32 %v1263, 4294901760
  %v1413 = vsub.f32 %v1263, %v1412
  %v1414 = vand.u32 %v1413, 4294901760
  %v1415 = vsub.f32 %v1413, %v1414
  %v1416 = vand.u32 %v1415, 4294901760
  %1417 = vmatpush1.msra.mxu0 %v1416
  %v1418 = vand.u32 %v1262, 4294901760
  %v1419 = vsub.f32 %v1262, %v1418
  %v1420 = vand.u32 %v1419, 4294901760
  %v1421 = vsub.f32 %v1419, %v1420
  %v1422 = vand.u32 %v1421, 4294901760
  %1423 = vmatprep.subr.mxu0 %v1422
  %v1424 = vand.u32 %v1261, 4294901760
  %v1425 = vsub.f32 %v1261, %v1424
  %v1426 = vand.u32 %v1425, 4294901760
  %v1427 = vsub.f32 %v1425, %v1426
  %v1428 = vand.u32 %v1427, 4294901760
  %1429 = vmatpush1.msra.mxu0 %v1428
  %v1430 = vand.u32 %v1260, 4294901760
  %v1431 = vsub.f32 %v1260, %v1430
  %v1432 = vand.u32 %v1431, 4294901760
  %v1433 = vsub.f32 %v1431, %v1432
  %v1434 = vand.u32 %v1433, 4294901760
  %1435 = vmatprep.subr.mxu0 %v1434
  %v1436 = vand.u32 %v1259, 4294901760
  %v1437 = vsub.f32 %v1259, %v1436
  %v1438 = vand.u32 %v1437, 4294901760
  %v1439 = vsub.f32 %v1437, %v1438
  %v1440 = vand.u32 %v1439, 4294901760
  %1441 = vmatpush1.msra.mxu0 %v1440
  %v1442 = vand.u32 %v1258, 4294901760
  %v1443 = vsub.f32 %v1258, %v1442
  %v1444 = vand.u32 %v1443, 4294901760
  %v1445 = vsub.f32 %v1443, %v1444
  %v1446 = vand.u32 %v1445, 4294901760
  %1447 = vmatprep.subr.mxu0 %v1446
  %v1448 = vand.u32 %v1257, 4294901760
  %v1449 = vsub.f32 %v1257, %v1448
  %v1450 = vand.u32 %v1449, 4294901760
  %v1451 = vsub.f32 %v1449, %v1450
  %v1452 = vand.u32 %v1451, 4294901760
  %1453 = vmatpush1.msra.mxu0 %v1452
  %v1454 = vand.u32 %v1256, 4294901760
  %v1455 = vsub.f32 %v1256, %v1454
  %v1456 = vand.u32 %v1455, 4294901760
  %v1457 = vsub.f32 %v1455, %v1456
  %v1458 = vand.u32 %v1457, 4294901760
  %1459 = vmatprep.subr.mxu0 %v1458
  %v1460 = vand.u32 %v1255, 4294901760
  %v1461 = vsub.f32 %v1255, %v1460
  %v1462 = vand.u32 %v1461, 4294901760
  %v1463 = vsub.f32 %v1461, %v1462
  %v1464 = vand.u32 %v1463, 4294901760
  %1465 = vmatpush1.msra.mxu0 %v1464
  %v1466 = vand.u32 %v1254, 4294901760
  %v1467 = vsub.f32 %v1254, %v1466
  %v1468 = vand.u32 %v1467, 4294901760
  %v1469 = vsub.f32 %v1467, %v1468
  %v1470 = vand.u32 %v1469, 4294901760
  %1471 = vmatprep.subr.mxu0 %v1470
  %v1472 = vand.u32 %v1253, 4294901760
  %v1473 = vsub.f32 %v1253, %v1472
  %v1474 = vand.u32 %v1473, 4294901760
  %v1475 = vsub.f32 %v1473, %v1474
  %v1476 = vand.u32 %v1475, 4294901760
  %1477 = vmatpush1.msra.mxu0 %v1476
  %v1478 = vand.u32 %v1252, 4294901760
  %v1479 = vsub.f32 %v1252, %v1478
  %v1480 = vand.u32 %v1479, 4294901760
  %v1481 = vsub.f32 %v1479, %v1480
  %v1482 = vand.u32 %v1481, 4294901760
  %1483 = vmatprep.subr.mxu0 %v1482
  %v1484 = vand.u32 %v1251, 4294901760
  %v1485 = vsub.f32 %v1251, %v1484
  %v1486 = vand.u32 %v1485, 4294901760
  %v1487 = vsub.f32 %v1485, %v1486
  %v1488 = vand.u32 %v1487, 4294901760
  %1489 = vmatpush1.msra.mxu0 %v1488
  %v1490 = vand.u32 %v1250, 4294901760
  %v1491 = vsub.f32 %v1250, %v1490
  %v1492 = vand.u32 %v1491, 4294901760
  %v1493 = vsub.f32 %v1491, %v1492
  %v1494 = vand.u32 %v1493, 4294901760
  %1495 = vmatprep.subr.mxu0 %v1494
  %v1496 = vand.u32 %v1249, 4294901760
  %v1497 = vsub.f32 %v1249, %v1496
  %v1498 = vand.u32 %v1497, 4294901760
  %v1499 = vsub.f32 %v1497, %v1498
  %v1500 = vand.u32 %v1499, 4294901760
  %1501 = vmatpush1.msra.mxu0 %v1500
  %v1502 = vand.u32 %v1248, 4294901760
  %v1503 = vsub.f32 %v1248, %v1502
  %v1504 = vand.u32 %v1503, 4294901760
  %v1505 = vsub.f32 %v1503, %v1504
  %v1506 = vand.u32 %v1505, 4294901760
  %1507 = vmatprep.subr.mxu0 %v1506
  %v1508 = vand.u32 %v1247, 4294901760
  %v1509 = vsub.f32 %v1247, %v1508
  %v1510 = vand.u32 %v1509, 4294901760
  %v1511 = vsub.f32 %v1509, %v1510
  %v1512 = vand.u32 %v1511, 4294901760
  %1513 = vmatpush1.msra.mxu0 %v1512
  %v1514 = vand.u32 %v1246, 4294901760
  %v1515 = vsub.f32 %v1246, %v1514
  %v1516 = vand.u32 %v1515, 4294901760
  %v1517 = vsub.f32 %v1515, %v1516
  %v1518 = vand.u32 %v1517, 4294901760
  %1519 = vmatprep.subr.mxu0 %v1518
  %v1520 = vand.u32 %v1245, 4294901760
  %v1521 = vsub.f32 %v1245, %v1520
  %v1522 = vand.u32 %v1521, 4294901760
  %v1523 = vsub.f32 %v1521, %v1522
  %v1524 = vand.u32 %v1523, 4294901760
  %1525 = vmatpush1.msra.mxu0 %v1524
  %v1526 = vand.u32 %v1244, 4294901760
  %v1527 = vsub.f32 %v1244, %v1526
  %v1528 = vand.u32 %v1527, 4294901760
  %v1529 = vsub.f32 %v1527, %v1528
  %v1530 = vand.u32 %v1529, 4294901760
  %1531 = vmatprep.subr.mxu0 %v1530
  %v1532 = vand.u32 %v1243, 4294901760
  %v1533 = vsub.f32 %v1243, %v1532
  %v1534 = vand.u32 %v1533, 4294901760
  %v1535 = vsub.f32 %v1533, %v1534
  %v1536 = vand.u32 %v1535, 4294901760
  %1537 = vmatpush1.msra.mxu0 %v1536
  %v1538 = vand.u32 %v1242, 4294901760
  %v1539 = vsub.f32 %v1242, %v1538
  %v1540 = vand.u32 %v1539, 4294901760
  %v1541 = vsub.f32 %v1539, %v1540
  %v1542 = vand.u32 %v1541, 4294901760
  %1543 = vmatprep.subr.mxu0 %v1542
  %v1544 = vand.u32 %v1241, 4294901760
  %v1545 = vsub.f32 %v1241, %v1544
  %v1546 = vand.u32 %v1545, 4294901760
  %v1547 = vsub.f32 %v1545, %v1546
  %v1548 = vand.u32 %v1547, 4294901760
  %1549 = vmatpush1.msra.mxu0 %v1548
  %v1550 = vand.u32 %v1240, 4294901760
  %v1551 = vsub.f32 %v1240, %v1550
  %v1552 = vand.u32 %v1551, 4294901760
  %v1553 = vsub.f32 %v1551, %v1552
  %v1554 = vand.u32 %v1553, 4294901760
  %1555 = vmatprep.subr.mxu0 %v1554
  %v1556 = vand.u32 %v1239, 4294901760
  %v1557 = vsub.f32 %v1239, %v1556
  %v1558 = vand.u32 %v1557, 4294901760
  %v1559 = vsub.f32 %v1557, %v1558
  %v1560 = vand.u32 %v1559, 4294901760
  %1561 = vmatpush1.msra.mxu0 %v1560
  %v1562 = vand.u32 %v1238, 4294901760
  %v1563 = vsub.f32 %v1238, %v1562
  %v1564 = vand.u32 %v1563, 4294901760
  %v1565 = vsub.f32 %v1563, %v1564
  %v1566 = vand.u32 %v1565, 4294901760
  %1567 = vmatprep.subr.mxu0 %v1566
  %v1568 = vand.u32 %v1237, 4294901760
  %v1569 = vsub.f32 %v1237, %v1568
  %v1570 = vand.u32 %v1569, 4294901760
  %v1571 = vsub.f32 %v1569, %v1570
  %v1572 = vand.u32 %v1571, 4294901760
  %1573 = vmatpush1.msra.mxu0 %v1572
  %v1574 = vand.u32 %v1236, 4294901760
  %v1575 = vsub.f32 %v1236, %v1574
  %v1576 = vand.u32 %v1575, 4294901760
  %v1577 = vsub.f32 %v1575, %v1576
  %v1578 = vand.u32 %v1577, 4294901760
  %1579 = vmatprep.subr.mxu0 %v1578
  %v1580 = vand.u32 %v1235, 4294901760
  %v1581 = vsub.f32 %v1235, %v1580
  %v1582 = vand.u32 %v1581, 4294901760
  %v1583 = vsub.f32 %v1581, %v1582
  %v1584 = vand.u32 %v1583, 4294901760
  %1585 = vmatpush1.msra.mxu0 %v1584
  %v1586 = vand.u32 %v1234, 4294901760
  %v1587 = vsub.f32 %v1234, %v1586
  %v1588 = vand.u32 %v1587, 4294901760
  %v1589 = vsub.f32 %v1587, %v1588
  %v1590 = vand.u32 %v1589, 4294901760
  %1591 = vmatprep.subr.mxu0 %v1590
  %v1592 = vand.u32 %v1233, 4294901760
  %v1593 = vsub.f32 %v1233, %v1592
  %v1594 = vand.u32 %v1593, 4294901760
  %v1595 = vsub.f32 %v1593, %v1594
  %v1596 = vand.u32 %v1595, 4294901760
  %1597 = vmatpush1.msra.mxu0 %v1596
  %1598 = vmatprep.subr.mxu0 0.0
  %1599 = vmatpush2.msra.mxu0 0.0
  %1600 = vmatprep.subr.mxu0 0.0
  %1601 = vmatpush2.msra.mxu0 0.0
  %1602 = vmatprep.subr.mxu0 0.0
  %1603 = vmatpush2.msra.mxu0 0.0
  %1604 = vmatprep.subr.mxu0 0.0
  %1605 = vmatpush2.msra.mxu0 0.0
  %1606 = vmatprep.subr.mxu0 0.0
  %1607 = vmatpush2.msra.mxu0 0.0
  %1608 = vmatprep.subr.mxu0 0.0
  %1609 = vmatpush2.msra.mxu0 0.0
  %1610 = vmatprep.subr.mxu0 0.0
  %1611 = vmatpush2.msra.mxu0 0.0
  %1612 = vmatprep.subr.mxu0 0.0
  %1613 = vmatpush2.msra.mxu0 0.0
  %1614 = vmatprep.subr.mxu0 0.0
  %1615 = vmatpush2.msra.mxu0 0.0
  %1616 = vmatprep.subr.mxu0 0.0
  %1617 = vmatpush2.msra.mxu0 0.0
  %1618 = vmatprep.subr.mxu0 0.0
  %1619 = vmatpush2.msra.mxu0 0.0
  %1620 = vmatprep.subr.mxu0 0.0
  %1621 = vmatpush2.msra.mxu0 0.0
  %1622 = vmatprep.subr.mxu0 0.0
  %1623 = vmatpush2.msra.mxu0 0.0
  %1624 = vmatprep.subr.mxu0 0.0
  %1625 = vmatpush2.msra.mxu0 0.0
  %1626 = vmatprep.subr.mxu0 0.0
  %1627 = vmatpush2.msra.mxu0 0.0
  %1628 = vmatprep.subr.mxu0 0.0
  %1629 = vmatpush2.msra.mxu0 0.0
  %1630 = vmatprep.mubr.f32.mxu0 0.0
  %v1631 = vand.u32 %v24, 4294901760
  %1632 = vmatmul.mubr.f32.gmra.mxu0 %v1631
  %v1633 = vpop.f32.mrf.mxu0
  %v1634 = vadd.f32 %v1369, %v1633
  %v1635 = vpop.f32.mrf.mxu0
  %v1636 = vadd.f32 %v1371, %v1635
  %1637 = vmatprep.mubr.f32.mxu0 0.0
  %v1638 = vand.u32 %v25, 4294901760
  %1639 = vmatmul.mubr.f32.gmra.mxu0 %v1638
  %v1640 = vpop.f32.mrf.mxu0
  %v1641 = vadd.f32 %v1380, %v1640
  %v1642 = vpop.f32.mrf.mxu0
  %v1643 = vadd.f32 %v1382, %v1642
  %1644 = vmatprep.mubr.f32.mxu0 0.0
  %v1645 = vand.u32 %v26, 4294901760
  %1646 = vmatmul.mubr.f32.gmra.mxu0 %v1645
  %v1647 = vpop.f32.mrf.mxu0
  %v1648 = vadd.f32 %v1391, %v1647
  %v1649 = vpop.f32.mrf.mxu0
  %v1650 = vadd.f32 %v1393, %v1649
  %1651 = vmatprep.mubr.f32.mxu0 0.0
  %v1652 = vand.u32 %v27, 4294901760
  %1653 = vmatmul.mubr.f32.gmra.mxu0 %v1652
  %v1654 = vpop.f32.mrf.mxu0
  %v1655 = vadd.f32 %v1402, %v1654
  %v1656 = vpop.f32.mrf.mxu0
  %v1657 = vadd.f32 %v1404, %v1656
  %1658 = vdwg.mxu0
  %v1659 = vand.u32 %v1264, 4294901760
  %v1660 = vsub.f32 %v1264, %v1659
  %1661 = vmatprep.subr.mxu0 %v1660
  %v1662 = vand.u32 %v1263, 4294901760
  %v1663 = vsub.f32 %v1263, %v1662
  %1664 = vmatpush1.msra.mxu0 %v1663
  %v1665 = vand.u32 %v1262, 4294901760
  %v1666 = vsub.f32 %v1262, %v1665
  %1667 = vmatprep.subr.mxu0 %v1666
  %v1668 = vand.u32 %v1261, 4294901760
  %v1669 = vsub.f32 %v1261, %v1668
  %1670 = vmatpush1.msra.mxu0 %v1669
  %v1671 = vand.u32 %v1260, 4294901760
  %v1672 = vsub.f32 %v1260, %v1671
  %1673 = vmatprep.subr.mxu0 %v1672
  %v1674 = vand.u32 %v1259, 4294901760
  %v1675 = vsub.f32 %v1259, %v1674
  %1676 = vmatpush1.msra.mxu0 %v1675
  %v1677 = vand.u32 %v1258, 4294901760
  %v1678 = vsub.f32 %v1258, %v1677
  %1679 = vmatprep.subr.mxu0 %v1678
  %v1680 = vand.u32 %v1257, 4294901760
  %v1681 = vsub.f32 %v1257, %v1680
  %1682 = vmatpush1.msra.mxu0 %v1681
  %v1683 = vand.u32 %v1256, 4294901760
  %v1684 = vsub.f32 %v1256, %v1683
  %1685 = vmatprep.subr.mxu0 %v1684
  %v1686 = vand.u32 %v1255, 4294901760
  %v1687 = vsub.f32 %v1255, %v1686
  %1688 = vmatpush1.msra.mxu0 %v1687
  %v1689 = vand.u32 %v1254, 4294901760
  %v1690 = vsub.f32 %v1254, %v1689
  %1691 = vmatprep.subr.mxu0 %v1690
  %v1692 = vand.u32 %v1253, 4294901760
  %v1693 = vsub.f32 %v1253, %v1692
  %1694 = vmatpush1.msra.mxu0 %v1693
  %v1695 = vand.u32 %v1252, 4294901760
  %v1696 = vsub.f32 %v1252, %v1695
  %1697 = vmatprep.subr.mxu0 %v1696
  %v1698 = vand.u32 %v1251, 4294901760
  %v1699 = vsub.f32 %v1251, %v1698
  %1700 = vmatpush1.msra.mxu0 %v1699
  %v1701 = vand.u32 %v1250, 4294901760
  %v1702 = vsub.f32 %v1250, %v1701
  %1703 = vmatprep.subr.mxu0 %v1702
  %v1704 = vand.u32 %v1249, 4294901760
  %v1705 = vsub.f32 %v1249, %v1704
  %1706 = vmatpush1.msra.mxu0 %v1705
  %v1707 = vand.u32 %v1248, 4294901760
  %v1708 = vsub.f32 %v1248, %v1707
  %1709 = vmatprep.subr.mxu0 %v1708
  %v1710 = vand.u32 %v1247, 4294901760
  %v1711 = vsub.f32 %v1247, %v1710
  %1712 = vmatpush1.msra.mxu0 %v1711
  %v1713 = vand.u32 %v1246, 4294901760
  %v1714 = vsub.f32 %v1246, %v1713
  %1715 = vmatprep.subr.mxu0 %v1714
  %v1716 = vand.u32 %v1245, 4294901760
  %v1717 = vsub.f32 %v1245, %v1716
  %1718 = vmatpush1.msra.mxu0 %v1717
  %v1719 = vand.u32 %v1244, 4294901760
  %v1720 = vsub.f32 %v1244, %v1719
  %1721 = vmatprep.subr.mxu0 %v1720
  %v1722 = vand.u32 %v1243, 4294901760
  %v1723 = vsub.f32 %v1243, %v1722
  %1724 = vmatpush1.msra.mxu0 %v1723
  %v1725 = vand.u32 %v1242, 4294901760
  %v1726 = vsub.f32 %v1242, %v1725
  %1727 = vmatprep.subr.mxu0 %v1726
  %v1728 = vand.u32 %v1241, 4294901760
  %v1729 = vsub.f32 %v1241, %v1728
  %1730 = vmatpush1.msra.mxu0 %v1729
  %v1731 = vand.u32 %v1240, 4294901760
  %v1732 = vsub.f32 %v1240, %v1731
  %1733 = vmatprep.subr.mxu0 %v1732
  %v1734 = vand.u32 %v1239, 4294901760
  %v1735 = vsub.f32 %v1239, %v1734
  %1736 = vmatpush1.msra.mxu0 %v1735
  %v1737 = vand.u32 %v1238, 4294901760
  %v1738 = vsub.f32 %v1238, %v1737
  %1739 = vmatprep.subr.mxu0 %v1738
  %v1740 = vand.u32 %v1237, 4294901760
  %v1741 = vsub.f32 %v1237, %v1740
  %1742 = vmatpush1.msra.mxu0 %v1741
  %v1743 = vand.u32 %v1236, 4294901760
  %v1744 = vsub.f32 %v1236, %v1743
  %1745 = vmatprep.subr.mxu0 %v1744
  %v1746 = vand.u32 %v1235, 4294901760
  %v1747 = vsub.f32 %v1235, %v1746
  %1748 = vmatpush1.msra.mxu0 %v1747
  %v1749 = vand.u32 %v1234, 4294901760
  %v1750 = vsub.f32 %v1234, %v1749
  %1751 = vmatprep.subr.mxu0 %v1750
  %v1752 = vand.u32 %v1233, 4294901760
  %v1753 = vsub.f32 %v1233, %v1752
  %1754 = vmatpush1.msra.mxu0 %v1753
  %1755 = vmatprep.subr.mxu0 0.0
  %1756 = vmatpush2.msra.mxu0 0.0
  %1757 = vmatprep.subr.mxu0 0.0
  %1758 = vmatpush2.msra.mxu0 0.0
  %1759 = vmatprep.subr.mxu0 0.0
  %1760 = vmatpush2.msra.mxu0 0.0
  %1761 = vmatprep.subr.mxu0 0.0
  %1762 = vmatpush2.msra.mxu0 0.0
  %1763 = vmatprep.subr.mxu0 0.0
  %1764 = vmatpush2.msra.mxu0 0.0
  %1765 = vmatprep.subr.mxu0 0.0
  %1766 = vmatpush2.msra.mxu0 0.0
  %1767 = vmatprep.subr.mxu0 0.0
  %1768 = vmatpush2.msra.mxu0 0.0
  %1769 = vmatprep.subr.mxu0 0.0
  %1770 = vmatpush2.msra.mxu0 0.0
  %1771 = vmatprep.subr.mxu0 0.0
  %1772 = vmatpush2.msra.mxu0 0.0
  %1773 = vmatprep.subr.mxu0 0.0
  %1774 = vmatpush2.msra.mxu0 0.0
  %1775 = vmatprep.subr.mxu0 0.0
  %1776 = vmatpush2.msra.mxu0 0.0
  %1777 = vmatprep.subr.mxu0 0.0
  %1778 = vmatpush2.msra.mxu0 0.0
  %1779 = vmatprep.subr.mxu0 0.0
  %1780 = vmatpush2.msra.mxu0 0.0
  %1781 = vmatprep.subr.mxu0 0.0
  %1782 = vmatpush2.msra.mxu0 0.0
  %1783 = vmatprep.subr.mxu0 0.0
  %1784 = vmatpush2.msra.mxu0 0.0
  %1785 = vmatprep.subr.mxu0 0.0
  %1786 = vmatpush2.msra.mxu0 0.0
  %1787 = vmatprep.mubr.f32.mxu0 0.0
  %v1788 = vand.u32 %v24, 4294901760
  %v1789 = vsub.f32 %v24, %v1788
  %1790 = vmatmul.mubr.f32.gmra.mxu0 %v1789
  %v1791 = vpop.f32.mrf.mxu0
  %v1792 = vadd.f32 %v1634, %v1791
  %v1793 = vpop.f32.mrf.mxu0
  %v1794 = vadd.f32 %v1636, %v1793
  %1795 = vmatprep.mubr.f32.mxu0 0.0
  %v1796 = vand.u32 %v25, 4294901760
  %v1797 = vsub.f32 %v25, %v1796
  %1798 = vmatmul.mubr.f32.gmra.mxu0 %v1797
  %v1799 = vpop.f32.mrf.mxu0
  %v1800 = vadd.f32 %v1641, %v1799
  %v1801 = vpop.f32.mrf.mxu0
  %v1802 = vadd.f32 %v1643, %v1801
  %1803 = vmatprep.mubr.f32.mxu0 0.0
  %v1804 = vand.u32 %v26, 4294901760
  %v1805 = vsub.f32 %v26, %v1804
  %1806 = vmatmul.mubr.f32.gmra.mxu0 %v1805
  %v1807 = vpop.f32.mrf.mxu0
  %v1808 = vadd.f32 %v1648, %v1807
  %v1809 = vpop.f32.mrf.mxu0
  %v1810 = vadd.f32 %v1650, %v1809
  %1811 = vmatprep.mubr.f32.mxu0 0.0
  %v1812 = vand.u32 %v27, 4294901760
  %v1813 = vsub.f32 %v27, %v1812
  %1814 = vmatmul.mubr.f32.gmra.mxu0 %v1813
  %v1815 = vpop.f32.mrf.mxu0
  %v1816 = vadd.f32 %v1655, %v1815
  %v1817 = vpop.f32.mrf.mxu0
  %v1818 = vadd.f32 %v1657, %v1817
  %1819 = vdwg.mxu0
  %v1820 = vand.u32 %v1264, 4294901760
  %1821 = vmatprep.subr.mxu0 %v1820
  %v1822 = vand.u32 %v1263, 4294901760
  %1823 = vmatpush1.msra.mxu0 %v1822
  %v1824 = vand.u32 %v1262, 4294901760
  %1825 = vmatprep.subr.mxu0 %v1824
  %v1826 = vand.u32 %v1261, 4294901760
  %1827 = vmatpush1.msra.mxu0 %v1826
  %v1828 = vand.u32 %v1260, 4294901760
  %1829 = vmatprep.subr.mxu0 %v1828
  %v1830 = vand.u32 %v1259, 4294901760
  %1831 = vmatpush1.msra.mxu0 %v1830
  %v1832 = vand.u32 %v1258, 4294901760
  %1833 = vmatprep.subr.mxu0 %v1832
  %v1834 = vand.u32 %v1257, 4294901760
  %1835 = vmatpush1.msra.mxu0 %v1834
  %v1836 = vand.u32 %v1256, 4294901760
  %1837 = vmatprep.subr.mxu0 %v1836
  %v1838 = vand.u32 %v1255, 4294901760
  %1839 = vmatpush1.msra.mxu0 %v1838
  %v1840 = vand.u32 %v1254, 4294901760
  %1841 = vmatprep.subr.mxu0 %v1840
  %v1842 = vand.u32 %v1253, 4294901760
  %1843 = vmatpush1.msra.mxu0 %v1842
  %v1844 = vand.u32 %v1252, 4294901760
  %1845 = vmatprep.subr.mxu0 %v1844
  %v1846 = vand.u32 %v1251, 4294901760
  %1847 = vmatpush1.msra.mxu0 %v1846
  %v1848 = vand.u32 %v1250, 4294901760
  %1849 = vmatprep.subr.mxu0 %v1848
  %v1850 = vand.u32 %v1249, 4294901760
  %1851 = vmatpush1.msra.mxu0 %v1850
  %v1852 = vand.u32 %v1248, 4294901760
  %1853 = vmatprep.subr.mxu0 %v1852
  %v1854 = vand.u32 %v1247, 4294901760
  %1855 = vmatpush1.msra.mxu0 %v1854
  %v1856 = vand.u32 %v1246, 4294901760
  %1857 = vmatprep.subr.mxu0 %v1856
  %v1858 = vand.u32 %v1245, 4294901760
  %1859 = vmatpush1.msra.mxu0 %v1858
  %v1860 = vand.u32 %v1244, 4294901760
  %1861 = vmatprep.subr.mxu0 %v1860
  %v1862 = vand.u32 %v1243, 4294901760
  %1863 = vmatpush1.msra.mxu0 %v1862
  %v1864 = vand.u32 %v1242, 4294901760
  %1865 = vmatprep.subr.mxu0 %v1864
  %v1866 = vand.u32 %v1241, 4294901760
  %1867 = vmatpush1.msra.mxu0 %v1866
  %v1868 = vand.u32 %v1240, 4294901760
  %1869 = vmatprep.subr.mxu0 %v1868
  %v1870 = vand.u32 %v1239, 4294901760
  %1871 = vmatpush1.msra.mxu0 %v1870
  %v1872 = vand.u32 %v1238, 4294901760
  %1873 = vmatprep.subr.mxu0 %v1872
  %v1874 = vand.u32 %v1237, 4294901760
  %1875 = vmatpush1.msra.mxu0 %v1874
  %v1876 = vand.u32 %v1236, 4294901760
  %1877 = vmatprep.subr.mxu0 %v1876
  %v1878 = vand.u32 %v1235, 4294901760
  %1879 = vmatpush1.msra.mxu0 %v1878
  %v1880 = vand.u32 %v1234, 4294901760
  %1881 = vmatprep.subr.mxu0 %v1880
  %v1882 = vand.u32 %v1233, 4294901760
  %1883 = vmatpush1.msra.mxu0 %v1882
  %1884 = vmatprep.subr.mxu0 0.0
  %1885 = vmatpush2.msra.mxu0 0.0
  %1886 = vmatprep.subr.mxu0 0.0
  %1887 = vmatpush2.msra.mxu0 0.0
  %1888 = vmatprep.subr.mxu0 0.0
  %1889 = vmatpush2.msra.mxu0 0.0
  %1890 = vmatprep.subr.mxu0 0.0
  %1891 = vmatpush2.msra.mxu0 0.0
  %1892 = vmatprep.subr.mxu0 0.0
  %1893 = vmatpush2.msra.mxu0 0.0
  %1894 = vmatprep.subr.mxu0 0.0
  %1895 = vmatpush2.msra.mxu0 0.0
  %1896 = vmatprep.subr.mxu0 0.0
  %1897 = vmatpush2.msra.mxu0 0.0
  %1898 = vmatprep.subr.mxu0 0.0
  %1899 = vmatpush2.msra.mxu0 0.0
  %1900 = vmatprep.subr.mxu0 0.0
  %1901 = vmatpush2.msra.mxu0 0.0
  %1902 = vmatprep.subr.mxu0 0.0
  %1903 = vmatpush2.msra.mxu0 0.0
  %1904 = vmatprep.subr.mxu0 0.0
  %1905 = vmatpush2.msra.mxu0 0.0
  %1906 = vmatprep.subr.mxu0 0.0
  %1907 = vmatpush2.msra.mxu0 0.0
  %1908 = vmatprep.subr.mxu0 0.0
  %1909 = vmatpush2.msra.mxu0 0.0
  %1910 = vmatprep.subr.mxu0 0.0
  %1911 = vmatpush2.msra.mxu0 0.0
  %1912 = vmatprep.subr.mxu0 0.0
  %1913 = vmatpush2.msra.mxu0 0.0
  %1914 = vmatprep.subr.mxu0 0.0
  %1915 = vmatpush2.msra.mxu0 0.0
  %1916 = vmatprep.mubr.f32.mxu0 0.0
  %v1917 = vand.u32 %v24, 4294901760
  %v1918 = vsub.f32 %v24, %v1917
  %v1919 = vand.u32 %v1918, 4294901760
  %1920 = vmatmul.mubr.f32.gmra.mxu0 %v1919
  %v1921 = vpop.f32.mrf.mxu0
  %v1922 = vadd.f32 %v1792, %v1921
  %v1923 = vpop.f32.mrf.mxu0
  %v1924 = vadd.f32 %v1794, %v1923
  %1925 = vmatprep.mubr.f32.mxu0 0.0
  %v1926 = vand.u32 %v25, 4294901760
  %v1927 = vsub.f32 %v25, %v1926
  %v1928 = vand.u32 %v1927, 4294901760
  %1929 = vmatmul.mubr.f32.gmra.mxu0 %v1928
  %v1930 = vpop.f32.mrf.mxu0
  %v1931 = vadd.f32 %v1800, %v1930
  %v1932 = vpop.f32.mrf.mxu0
  %v1933 = vadd.f32 %v1802, %v1932
  %1934 = vmatprep.mubr.f32.mxu0 0.0
  %v1935 = vand.u32 %v26, 4294901760
  %v1936 = vsub.f32 %v26, %v1935
  %v1937 = vand.u32 %v1936, 4294901760
  %1938 = vmatmul.mubr.f32.gmra.mxu0 %v1937
  %v1939 = vpop.f32.mrf.mxu0
  %v1940 = vadd.f32 %v1808, %v1939
  %v1941 = vpop.f32.mrf.mxu0
  %v1942 = vadd.f32 %v1810, %v1941
  %1943 = vmatprep.mubr.f32.mxu0 0.0
  %v1944 = vand.u32 %v27, 4294901760
  %v1945 = vsub.f32 %v27, %v1944
  %v1946 = vand.u32 %v1945, 4294901760
  %1947 = vmatmul.mubr.f32.gmra.mxu0 %v1946
  %v1948 = vpop.f32.mrf.mxu0
  %v1949 = vadd.f32 %v1816, %v1948
  %v1950 = vpop.f32.mrf.mxu0
  %v1951 = vadd.f32 %v1818, %v1950
  %1952 = vdwg.mxu0
  %v1953 = vand.u32 %v1264, 4294901760
  %v1954 = vsub.f32 %v1264, %v1953
  %v1955 = vand.u32 %v1954, 4294901760
  %1956 = vmatprep.subr.mxu0 %v1955
  %v1957 = vand.u32 %v1263, 4294901760
  %v1958 = vsub.f32 %v1263, %v1957
  %v1959 = vand.u32 %v1958, 4294901760
  %1960 = vmatpush1.msra.mxu0 %v1959
  %v1961 = vand.u32 %v1262, 4294901760
  %v1962 = vsub.f32 %v1262, %v1961
  %v1963 = vand.u32 %v1962, 4294901760
  %1964 = vmatprep.subr.mxu0 %v1963
  %v1965 = vand.u32 %v1261, 4294901760
  %v1966 = vsub.f32 %v1261, %v1965
  %v1967 = vand.u32 %v1966, 4294901760
  %1968 = vmatpush1.msra.mxu0 %v1967
  %v1969 = vand.u32 %v1260, 4294901760
  %v1970 = vsub.f32 %v1260, %v1969
  %v1971 = vand.u32 %v1970, 4294901760
  %1972 = vmatprep.subr.mxu0 %v1971
  %v1973 = vand.u32 %v1259, 4294901760
  %v1974 = vsub.f32 %v1259, %v1973
  %v1975 = vand.u32 %v1974, 4294901760
  %1976 = vmatpush1.msra.mxu0 %v1975
  %v1977 = vand.u32 %v1258, 4294901760
  %v1978 = vsub.f32 %v1258, %v1977
  %v1979 = vand.u32 %v1978, 4294901760
  %1980 = vmatprep.subr.mxu0 %v1979
  %v1981 = vand.u32 %v1257, 4294901760
  %v1982 = vsub.f32 %v1257, %v1981
  %v1983 = vand.u32 %v1982, 4294901760
  %1984 = vmatpush1.msra.mxu0 %v1983
  %v1985 = vand.u32 %v1256, 4294901760
  %v1986 = vsub.f32 %v1256, %v1985
  %v1987 = vand.u32 %v1986, 4294901760
  %1988 = vmatprep.subr.mxu0 %v1987
  %v1989 = vand.u32 %v1255, 4294901760
  %v1990 = vsub.f32 %v1255, %v1989
  %v1991 = vand.u32 %v1990, 4294901760
  %1992 = vmatpush1.msra.mxu0 %v1991
  %v1993 = vand.u32 %v1254, 4294901760
  %v1994 = vsub.f32 %v1254, %v1993
  %v1995 = vand.u32 %v1994, 4294901760
  %1996 = vmatprep.subr.mxu0 %v1995
  %v1997 = vand.u32 %v1253, 4294901760
  %v1998 = vsub.f32 %v1253, %v1997
  %v1999 = vand.u32 %v1998, 4294901760
  %2000 = vmatpush1.msra.mxu0 %v1999
  %v2001 = vand.u32 %v1252, 4294901760
  %v2002 = vsub.f32 %v1252, %v2001
  %v2003 = vand.u32 %v2002, 4294901760
  %2004 = vmatprep.subr.mxu0 %v2003
  %v2005 = vand.u32 %v1251, 4294901760
  %v2006 = vsub.f32 %v1251, %v2005
  %v2007 = vand.u32 %v2006, 4294901760
  %2008 = vmatpush1.msra.mxu0 %v2007
  %v2009 = vand.u32 %v1250, 4294901760
  %v2010 = vsub.f32 %v1250, %v2009
  %v2011 = vand.u32 %v2010, 4294901760
  %2012 = vmatprep.subr.mxu0 %v2011
  %v2013 = vand.u32 %v1249, 4294901760
  %v2014 = vsub.f32 %v1249, %v2013
  %v2015 = vand.u32 %v2014, 4294901760
  %2016 = vmatpush1.msra.mxu0 %v2015
  %v2017 = vand.u32 %v1248, 4294901760
  %v2018 = vsub.f32 %v1248, %v2017
  %v2019 = vand.u32 %v2018, 4294901760
  %2020 = vmatprep.subr.mxu0 %v2019
  %v2021 = vand.u32 %v1247, 4294901760
  %v2022 = vsub.f32 %v1247, %v2021
  %v2023 = vand.u32 %v2022, 4294901760
  %2024 = vmatpush1.msra.mxu0 %v2023
  %v2025 = vand.u32 %v1246, 4294901760
  %v2026 = vsub.f32 %v1246, %v2025
  %v2027 = vand.u32 %v2026, 4294901760
  %2028 = vmatprep.subr.mxu0 %v2027
  %v2029 = vand.u32 %v1245, 4294901760
  %v2030 = vsub.f32 %v1245, %v2029
  %v2031 = vand.u32 %v2030, 4294901760
  %2032 = vmatpush1.msra.mxu0 %v2031
  %v2033 = vand.u32 %v1244, 4294901760
  %v2034 = vsub.f32 %v1244, %v2033
  %v2035 = vand.u32 %v2034, 4294901760
  %2036 = vmatprep.subr.mxu0 %v2035
  %v2037 = vand.u32 %v1243, 4294901760
  %v2038 = vsub.f32 %v1243, %v2037
  %v2039 = vand.u32 %v2038, 4294901760
  %2040 = vmatpush1.msra.mxu0 %v2039
  %v2041 = vand.u32 %v1242, 4294901760
  %v2042 = vsub.f32 %v1242, %v2041
  %v2043 = vand.u32 %v2042, 4294901760
  %2044 = vmatprep.subr.mxu0 %v2043
  %v2045 = vand.u32 %v1241, 4294901760
  %v2046 = vsub.f32 %v1241, %v2045
  %v2047 = vand.u32 %v2046, 4294901760
  %2048 = vmatpush1.msra.mxu0 %v2047
  %v2049 = vand.u32 %v1240, 4294901760
  %v2050 = vsub.f32 %v1240, %v2049
  %v2051 = vand.u32 %v2050, 4294901760
  %2052 = vmatprep.subr.mxu0 %v2051
  %v2053 = vand.u32 %v1239, 4294901760
  %v2054 = vsub.f32 %v1239, %v2053
  %v2055 = vand.u32 %v2054, 4294901760
  %2056 = vmatpush1.msra.mxu0 %v2055
  %v2057 = vand.u32 %v1238, 4294901760
  %v2058 = vsub.f32 %v1238, %v2057
  %v2059 = vand.u32 %v2058, 4294901760
  %2060 = vmatprep.subr.mxu0 %v2059
  %v2061 = vand.u32 %v1237, 4294901760
  %v2062 = vsub.f32 %v1237, %v2061
  %v2063 = vand.u32 %v2062, 4294901760
  %2064 = vmatpush1.msra.mxu0 %v2063
  %v2065 = vand.u32 %v1236, 4294901760
  %v2066 = vsub.f32 %v1236, %v2065
  %v2067 = vand.u32 %v2066, 4294901760
  %2068 = vmatprep.subr.mxu0 %v2067
  %v2069 = vand.u32 %v1235, 4294901760
  %v2070 = vsub.f32 %v1235, %v2069
  %v2071 = vand.u32 %v2070, 4294901760
  %2072 = vmatpush1.msra.mxu0 %v2071
  %v2073 = vand.u32 %v1234, 4294901760
  %v2074 = vsub.f32 %v1234, %v2073
  %v2075 = vand.u32 %v2074, 4294901760
  %2076 = vmatprep.subr.mxu0 %v2075
  %v2077 = vand.u32 %v1233, 4294901760
  %v2078 = vsub.f32 %v1233, %v2077
  %v2079 = vand.u32 %v2078, 4294901760
  %2080 = vmatpush1.msra.mxu0 %v2079
  %2081 = vmatprep.subr.mxu0 0.0
  %2082 = vmatpush2.msra.mxu0 0.0
  %2083 = vmatprep.subr.mxu0 0.0
  %2084 = vmatpush2.msra.mxu0 0.0
  %2085 = vmatprep.subr.mxu0 0.0
  %2086 = vmatpush2.msra.mxu0 0.0
  %2087 = vmatprep.subr.mxu0 0.0
  %2088 = vmatpush2.msra.mxu0 0.0
  %2089 = vmatprep.subr.mxu0 0.0
  %2090 = vmatpush2.msra.mxu0 0.0
  %2091 = vmatprep.subr.mxu0 0.0
  %2092 = vmatpush2.msra.mxu0 0.0
  %2093 = vmatprep.subr.mxu0 0.0
  %2094 = vmatpush2.msra.mxu0 0.0
  %2095 = vmatprep.subr.mxu0 0.0
  %2096 = vmatpush2.msra.mxu0 0.0
  %2097 = vmatprep.subr.mxu0 0.0
  %2098 = vmatpush2.msra.mxu0 0.0
  %2099 = vmatprep.subr.mxu0 0.0
  %2100 = vmatpush2.msra.mxu0 0.0
  %2101 = vmatprep.subr.mxu0 0.0
  %2102 = vmatpush2.msra.mxu0 0.0
  %2103 = vmatprep.subr.mxu0 0.0
  %2104 = vmatpush2.msra.mxu0 0.0
  %2105 = vmatprep.subr.mxu0 0.0
  %2106 = vmatpush2.msra.mxu0 0.0
  %2107 = vmatprep.subr.mxu0 0.0
  %2108 = vmatpush2.msra.mxu0 0.0
  %2109 = vmatprep.subr.mxu0 0.0
  %2110 = vmatpush2.msra.mxu0 0.0
  %2111 = vmatprep.subr.mxu0 0.0
  %2112 = vmatpush2.msra.mxu0 0.0
  %2113 = vmatprep.mubr.f32.mxu0 0.0
  %v2114 = vand.u32 %v24, 4294901760
  %2115 = vmatmul.mubr.f32.gmra.mxu0 %v2114
  %v2116 = vpop.f32.mrf.mxu0
  %v2117 = vadd.f32 %v1922, %v2116
  %v2118 = vpop.f32.mrf.mxu0
  %v2119 = vadd.f32 %v1924, %v2118
  %2120 = vmatprep.mubr.f32.mxu0 0.0
  %v2121 = vand.u32 %v25, 4294901760
  %2122 = vmatmul.mubr.f32.gmra.mxu0 %v2121
  %v2123 = vpop.f32.mrf.mxu0
  %v2124 = vadd.f32 %v1931, %v2123
  %v2125 = vpop.f32.mrf.mxu0
  %v2126 = vadd.f32 %v1933, %v2125
  %2127 = vmatprep.mubr.f32.mxu0 0.0
  %v2128 = vand.u32 %v26, 4294901760
  %2129 = vmatmul.mubr.f32.gmra.mxu0 %v2128
  %v2130 = vpop.f32.mrf.mxu0
  %v2131 = vadd.f32 %v1940, %v2130
  %v2132 = vpop.f32.mrf.mxu0
  %v2133 = vadd.f32 %v1942, %v2132
  %2134 = vmatprep.mubr.f32.mxu0 0.0
  %v2135 = vand.u32 %v27, 4294901760
  %2136 = vmatmul.mubr.f32.gmra.mxu0 %v2135
  %v2137 = vpop.f32.mrf.mxu0
  %v2138 = vadd.f32 %v1949, %v2137
  %v2139 = vpop.f32.mrf.mxu0
  %v2140 = vadd.f32 %v1951, %v2139
  %2141 = vdwg.mxu0
  %v2142 = vand.u32 %v1264, 4294901760
  %2143 = vmatprep.subr.mxu0 %v2142
  %v2144 = vand.u32 %v1263, 4294901760
  %2145 = vmatpush1.msra.mxu0 %v2144
  %v2146 = vand.u32 %v1262, 4294901760
  %2147 = vmatprep.subr.mxu0 %v2146
  %v2148 = vand.u32 %v1261, 4294901760
  %2149 = vmatpush1.msra.mxu0 %v2148
  %v2150 = vand.u32 %v1260, 4294901760
  %2151 = vmatprep.subr.mxu0 %v2150
  %v2152 = vand.u32 %v1259, 4294901760
  %2153 = vmatpush1.msra.mxu0 %v2152
  %v2154 = vand.u32 %v1258, 4294901760
  %2155 = vmatprep.subr.mxu0 %v2154
  %v2156 = vand.u32 %v1257, 4294901760
  %2157 = vmatpush1.msra.mxu0 %v2156
  %v2158 = vand.u32 %v1256, 4294901760
  %2159 = vmatprep.subr.mxu0 %v2158
  %v2160 = vand.u32 %v1255, 4294901760
  %2161 = vmatpush1.msra.mxu0 %v2160
  %v2162 = vand.u32 %v1254, 4294901760
  %2163 = vmatprep.subr.mxu0 %v2162
  %v2164 = vand.u32 %v1253, 4294901760
  %2165 = vmatpush1.msra.mxu0 %v2164
  %v2166 = vand.u32 %v1252, 4294901760
  %2167 = vmatprep.subr.mxu0 %v2166
  %v2168 = vand.u32 %v1251, 4294901760
  %2169 = vmatpush1.msra.mxu0 %v2168
  %v2170 = vand.u32 %v1250, 4294901760
  %2171 = vmatprep.subr.mxu0 %v2170
  %v2172 = vand.u32 %v1249, 4294901760
  %2173 = vmatpush1.msra.mxu0 %v2172
  %v2174 = vand.u32 %v1248, 4294901760
  %2175 = vmatprep.subr.mxu0 %v2174
  %v2176 = vand.u32 %v1247, 4294901760
  %2177 = vmatpush1.msra.mxu0 %v2176
  %v2178 = vand.u32 %v1246, 4294901760
  %2179 = vmatprep.subr.mxu0 %v2178
  %v2180 = vand.u32 %v1245, 4294901760
  %2181 = vmatpush1.msra.mxu0 %v2180
  %v2182 = vand.u32 %v1244, 4294901760
  %2183 = vmatprep.subr.mxu0 %v2182
  %v2184 = vand.u32 %v1243, 4294901760
  %2185 = vmatpush1.msra.mxu0 %v2184
  %v2186 = vand.u32 %v1242, 4294901760
  %2187 = vmatprep.subr.mxu0 %v2186
  %v2188 = vand.u32 %v1241, 4294901760
  %2189 = vmatpush1.msra.mxu0 %v2188
  %v2190 = vand.u32 %v1240, 4294901760
  %2191 = vmatprep.subr.mxu0 %v2190
  %v2192 = vand.u32 %v1239, 4294901760
  %2193 = vmatpush1.msra.mxu0 %v2192
  %v2194 = vand.u32 %v1238, 4294901760
  %2195 = vmatprep.subr.mxu0 %v2194
  %v2196 = vand.u32 %v1237, 4294901760
  %2197 = vmatpush1.msra.mxu0 %v2196
  %v2198 = vand.u32 %v1236, 4294901760
  %2199 = vmatprep.subr.mxu0 %v2198
  %v2200 = vand.u32 %v1235, 4294901760
  %2201 = vmatpush1.msra.mxu0 %v2200
  %v2202 = vand.u32 %v1234, 4294901760
  %2203 = vmatprep.subr.mxu0 %v2202
  %v2204 = vand.u32 %v1233, 4294901760
  %2205 = vmatpush1.msra.mxu0 %v2204
  %2206 = vmatprep.subr.mxu0 0.0
  %2207 = vmatpush2.msra.mxu0 0.0
  %2208 = vmatprep.subr.mxu0 0.0
  %2209 = vmatpush2.msra.mxu0 0.0
  %2210 = vmatprep.subr.mxu0 0.0
  %2211 = vmatpush2.msra.mxu0 0.0
  %2212 = vmatprep.subr.mxu0 0.0
  %2213 = vmatpush2.msra.mxu0 0.0
  %2214 = vmatprep.subr.mxu0 0.0
  %2215 = vmatpush2.msra.mxu0 0.0
  %2216 = vmatprep.subr.mxu0 0.0
  %2217 = vmatpush2.msra.mxu0 0.0
  %2218 = vmatprep.subr.mxu0 0.0
  %2219 = vmatpush2.msra.mxu0 0.0
  %2220 = vmatprep.subr.mxu0 0.0
  %2221 = vmatpush2.msra.mxu0 0.0
  %2222 = vmatprep.subr.mxu0 0.0
  %2223 = vmatpush2.msra.mxu0 0.0
  %2224 = vmatprep.subr.mxu0 0.0
  %2225 = vmatpush2.msra.mxu0 0.0
  %2226 = vmatprep.subr.mxu0 0.0
  %2227 = vmatpush2.msra.mxu0 0.0
  %2228 = vmatprep.subr.mxu0 0.0
  %2229 = vmatpush2.msra.mxu0 0.0
  %2230 = vmatprep.subr.mxu0 0.0
  %2231 = vmatpush2.msra.mxu0 0.0
  %2232 = vmatprep.subr.mxu0 0.0
  %2233 = vmatpush2.msra.mxu0 0.0
  %2234 = vmatprep.subr.mxu0 0.0
  %2235 = vmatpush2.msra.mxu0 0.0
  %2236 = vmatprep.subr.mxu0 0.0
  %2237 = vmatpush2.msra.mxu0 0.0
  %2238 = vmatprep.mubr.f32.mxu0 0.0
  %v2239 = vand.u32 %v24, 4294901760
  %2240 = vmatmul.mubr.f32.gmra.mxu0 %v2239
  %v2241 = vpop.f32.mrf.mxu0
  %v2242 = vadd.f32 %v2117, %v2241
  %v2243 = vpop.f32.mrf.mxu0
  %v2244 = vadd.f32 %v2119, %v2243
  %2245 = vmatprep.mubr.f32.mxu0 0.0
  %v2246 = vand.u32 %v25, 4294901760
  %2247 = vmatmul.mubr.f32.gmra.mxu0 %v2246
  %v2248 = vpop.f32.mrf.mxu0
  %v2249 = vadd.f32 %v2124, %v2248
  %v2250 = vpop.f32.mrf.mxu0
  %v2251 = vadd.f32 %v2126, %v2250
  %2252 = vmatprep.mubr.f32.mxu0 0.0
  %v2253 = vand.u32 %v26, 4294901760
  %2254 = vmatmul.mubr.f32.gmra.mxu0 %v2253
  %v2255 = vpop.f32.mrf.mxu0
  %v2256 = vadd.f32 %v2131, %v2255
  %v2257 = vpop.f32.mrf.mxu0
  %v2258 = vadd.f32 %v2133, %v2257
  %2259 = vmatprep.mubr.f32.mxu0 0.0
  %v2260 = vand.u32 %v27, 4294901760
  %2261 = vmatmul.mubr.f32.gmra.mxu0 %v2260
  %v2262 = vpop.f32.mrf.mxu0
  %v2263 = vadd.f32 %v2138, %v2262
  %v2264 = vpop.f32.mrf.mxu0
  %v2265 = vadd.f32 %v2140, %v2264
  %2266 = vdwg.mxu0
  %v2267 = vtanh.pop %v2242
  %v2268 = vtanh.pop %v2244
  %v2269 = vtanh.pop %v2249
  %v2270 = vtanh.pop %v2251
  %v2271 = vtanh.pop %v2256
  %v2272 = vtanh.pop %v2258
  %v2273 = vtanh.pop %v2263
  %v2274 = vtanh.pop %v2265
  %v2275 = vld [vmem:[%s4] sm:$0x3]
  %v2276 = vlaneseq
  %v2277 = vshrl.u32 %v2276, 7
  %v2278 = vsub.s32 0, %v2277
  %v2279 = vrot.slane %v2275, %v2278
  %v2280 = vlaneseq
  %v2281 = vshrl.u32 %v2280, 7
  %v2282 = vsub.s32 1, %v2281
  %v2283 = vrot.slane %v2275, %v2282
  %vm2284 = vcmp.eq.s32.totalorder %v30, %v2279
  %vm2285 = vcmp.eq.s32.totalorder %v30, %v2283
  %vm2286 = vcmp.eq.s32.totalorder %v31, %v2279
  %vm2287 = vcmp.eq.s32.totalorder %v31, %v2283
  %vm2288 = vcmp.eq.s32.totalorder %v32, %v2279
  %vm2289 = vcmp.eq.s32.totalorder %v32, %v2283
  %vm2290 = vcmp.eq.s32.totalorder %v33, %v2279
  %vm2291 = vcmp.eq.s32.totalorder %v33, %v2283
  %vm2292 = vcmp.eq.s32.totalorder %v34, %v2279
  %vm2293 = vcmp.eq.s32.totalorder %v34, %v2283
  %vm2294 = vcmp.eq.s32.totalorder %v35, %v2279
  %vm2295 = vcmp.eq.s32.totalorder %v35, %v2283
  %vm2296 = vcmp.eq.s32.totalorder %v36, %v2279
  %vm2297 = vcmp.eq.s32.totalorder %v36, %v2283
  %vm2298 = vcmp.eq.s32.totalorder %v37, %v2279
  %vm2299 = vcmp.eq.s32.totalorder %v37, %v2283
  %vm2300 = vcmp.eq.s32.totalorder %v38, %v2279
  %vm2301 = vcmp.eq.s32.totalorder %v38, %v2283
  %vm2302 = vcmp.eq.s32.totalorder %v39, %v2279
  %vm2303 = vcmp.eq.s32.totalorder %v39, %v2283
  %vm2304 = vcmp.eq.s32.totalorder %v40, %v2279
  %vm2305 = vcmp.eq.s32.totalorder %v40, %v2283
  %vm2306 = vcmp.eq.s32.totalorder %v41, %v2279
  %vm2307 = vcmp.eq.s32.totalorder %v41, %v2283
  %vm2308 = vcmp.eq.s32.totalorder %v42, %v2279
  %vm2309 = vcmp.eq.s32.totalorder %v42, %v2283
  %vm2310 = vcmp.eq.s32.totalorder %v43, %v2279
  %vm2311 = vcmp.eq.s32.totalorder %v43, %v2283
  %vm2312 = vcmp.eq.s32.totalorder %v44, %v2279
  %vm2313 = vcmp.eq.s32.totalorder %v44, %v2283
  %vm2314 = vcmp.eq.s32.totalorder %v45, %v2279
  %vm2315 = vcmp.eq.s32.totalorder %v45, %v2283
  %v2316 = vsel %vm2284, 1, 0
  %v2317 = vsel %vm2285, 1, 0
  %v2318 = vsel %vm2286, 1, 0
  %v2319 = vsel %vm2287, 1, 0
  %v2320 = vsel %vm2288, 1, 0
  %v2321 = vsel %vm2289, 1, 0
  %v2322 = vsel %vm2290, 1, 0
  %v2323 = vsel %vm2291, 1, 0
  %v2324 = vsel %vm2292, 1, 0
  %v2325 = vsel %vm2293, 1, 0
  %v2326 = vsel %vm2294, 1, 0
  %v2327 = vsel %vm2295, 1, 0
  %v2328 = vsel %vm2296, 1, 0
  %v2329 = vsel %vm2297, 1, 0
  %v2330 = vsel %vm2298, 1, 0
  %v2331 = vsel %vm2299, 1, 0
  %v2332 = vsel %vm2300, 1, 0
  %v2333 = vsel %vm2301, 1, 0
  %v2334 = vsel %vm2302, 1, 0
  %v2335 = vsel %vm2303, 1, 0
  %v2336 = vsel %vm2304, 1, 0
  %v2337 = vsel %vm2305, 1, 0
  %v2338 = vsel %vm2306, 1, 0
  %v2339 = vsel %vm2307, 1, 0
  %v2340 = vsel %vm2308, 1, 0
  %v2341 = vsel %vm2309, 1, 0
  %v2342 = vsel %vm2310, 1, 0
  %v2343 = vsel %vm2311, 1, 0
  %v2344 = vsel %vm2312, 1, 0
  %v2345 = vsel %vm2313, 1, 0
  %v2346 = vsel %vm2314, 1, 0
  %v2347 = vsel %vm2315, 1, 0
  %v2348 = vcvt.s32.f32 %v2316
  %v2349 = vcvt.s32.f32 %v2317
  %v2350 = vcvt.s32.f32 %v2318
  %v2351 = vcvt.s32.f32 %v2319
  %v2352 = vcvt.s32.f32 %v2320
  %v2353 = vcvt.s32.f32 %v2321
  %v2354 = vcvt.s32.f32 %v2322
  %v2355 = vcvt.s32.f32 %v2323
  %v2356 = vcvt.s32.f32 %v2324
  %v2357 = vcvt.s32.f32 %v2325
  %v2358 = vcvt.s32.f32 %v2326
  %v2359 = vcvt.s32.f32 %v2327
  %v2360 = vcvt.s32.f32 %v2328
  %v2361 = vcvt.s32.f32 %v2329
  %v2362 = vcvt.s32.f32 %v2330
  %v2363 = vcvt.s32.f32 %v2331
  %v2364 = vcvt.s32.f32 %v2332
  %v2365 = vcvt.s32.f32 %v2333
  %v2366 = vcvt.s32.f32 %v2334
  %v2367 = vcvt.s32.f32 %v2335
  %v2368 = vcvt.s32.f32 %v2336
  %v2369 = vcvt.s32.f32 %v2337
  %v2370 = vcvt.s32.f32 %v2338
  %v2371 = vcvt.s32.f32 %v2339
  %v2372 = vcvt.s32.f32 %v2340
  %v2373 = vcvt.s32.f32 %v2341
  %v2374 = vcvt.s32.f32 %v2342
  %v2375 = vcvt.s32.f32 %v2343
  %v2376 = vcvt.s32.f32 %v2344
  %v2377 = vcvt.s32.f32 %v2345
  %v2378 = vcvt.s32.f32 %v2346
  %v2379 = vcvt.s32.f32 %v2347
  %v2380 = vand.u32 %v2379, 4294901760
  %2381 = vmatprep.subr.mxu0 %v2380
  %v2382 = vand.u32 %v2378, 4294901760
  %2383 = vmatpush1.msra.mxu0 %v2382
  %v2384 = vand.u32 %v2377, 4294901760
  %2385 = vmatprep.subr.mxu0 %v2384
  %v2386 = vand.u32 %v2376, 4294901760
  %2387 = vmatpush1.msra.mxu0 %v2386
  %v2388 = vand.u32 %v2375, 4294901760
  %2389 = vmatprep.subr.mxu0 %v2388
  %v2390 = vand.u32 %v2374, 4294901760
  %2391 = vmatpush1.msra.mxu0 %v2390
  %v2392 = vand.u32 %v2373, 4294901760
  %2393 = vmatprep.subr.mxu0 %v2392
  %v2394 = vand.u32 %v2372, 4294901760
  %2395 = vmatpush1.msra.mxu0 %v2394
  %v2396 = vand.u32 %v2371, 4294901760
  %2397 = vmatprep.subr.mxu0 %v2396
  %v2398 = vand.u32 %v2370, 4294901760
  %2399 = vmatpush1.msra.mxu0 %v2398
  %v2400 = vand.u32 %v2369, 4294901760
  %2401 = vmatprep.subr.mxu0 %v2400
  %v2402 = vand.u32 %v2368, 4294901760
  %2403 = vmatpush1.msra.mxu0 %v2402
  %v2404 = vand.u32 %v2367, 4294901760
  %2405 = vmatprep.subr.mxu0 %v2404
  %v2406 = vand.u32 %v2366, 4294901760
  %2407 = vmatpush1.msra.mxu0 %v2406
  %v2408 = vand.u32 %v2365, 4294901760
  %2409 = vmatprep.subr.mxu0 %v2408
  %v2410 = vand.u32 %v2364, 4294901760
  %2411 = vmatpush1.msra.mxu0 %v2410
  %v2412 = vand.u32 %v2363, 4294901760
  %2413 = vmatprep.subr.mxu0 %v2412
  %v2414 = vand.u32 %v2362, 4294901760
  %2415 = vmatpush1.msra.mxu0 %v2414
  %v2416 = vand.u32 %v2361, 4294901760
  %2417 = vmatprep.subr.mxu0 %v2416
  %v2418 = vand.u32 %v2360, 4294901760
  %2419 = vmatpush1.msra.mxu0 %v2418
  %v2420 = vand.u32 %v2359, 4294901760
  %2421 = vmatprep.subr.mxu0 %v2420
  %v2422 = vand.u32 %v2358, 4294901760
  %2423 = vmatpush1.msra.mxu0 %v2422
  %v2424 = vand.u32 %v2357, 4294901760
  %2425 = vmatprep.subr.mxu0 %v2424
  %v2426 = vand.u32 %v2356, 4294901760
  %2427 = vmatpush1.msra.mxu0 %v2426
  %v2428 = vand.u32 %v2355, 4294901760
  %2429 = vmatprep.subr.mxu0 %v2428
  %v2430 = vand.u32 %v2354, 4294901760
  %2431 = vmatpush1.msra.mxu0 %v2430
  %v2432 = vand.u32 %v2353, 4294901760
  %2433 = vmatprep.subr.mxu0 %v2432
  %v2434 = vand.u32 %v2352, 4294901760
  %2435 = vmatpush1.msra.mxu0 %v2434
  %v2436 = vand.u32 %v2351, 4294901760
  %2437 = vmatprep.subr.mxu0 %v2436
  %v2438 = vand.u32 %v2350, 4294901760
  %2439 = vmatpush1.msra.mxu0 %v2438
  %v2440 = vand.u32 %v2349, 4294901760
  %2441 = vmatprep.subr.mxu0 %v2440
  %v2442 = vand.u32 %v2348, 4294901760
  %2443 = vmatpush1.msra.mxu0 %v2442
  %2444 = vmatprep.subr.mxu0 0.0
  %2445 = vmatpush2.msra.mxu0 0.0
  %2446 = vmatprep.subr.mxu0 0.0
  %2447 = vmatpush2.msra.mxu0 0.0
  %2448 = vmatprep.subr.mxu0 0.0
  %2449 = vmatpush2.msra.mxu0 0.0
  %2450 = vmatprep.subr.mxu0 0.0
  %2451 = vmatpush2.msra.mxu0 0.0
  %2452 = vmatprep.subr.mxu0 0.0
  %2453 = vmatpush2.msra.mxu0 0.0
  %2454 = vmatprep.subr.mxu0 0.0
  %2455 = vmatpush2.msra.mxu0 0.0
  %2456 = vmatprep.subr.mxu0 0.0
  %2457 = vmatpush2.msra.mxu0 0.0
  %2458 = vmatprep.subr.mxu0 0.0
  %2459 = vmatpush2.msra.mxu0 0.0
  %2460 = vmatprep.subr.mxu0 0.0
  %2461 = vmatpush2.msra.mxu0 0.0
  %2462 = vmatprep.subr.mxu0 0.0
  %2463 = vmatpush2.msra.mxu0 0.0
  %2464 = vmatprep.subr.mxu0 0.0
  %2465 = vmatpush2.msra.mxu0 0.0
  %2466 = vmatprep.subr.mxu0 0.0
  %2467 = vmatpush2.msra.mxu0 0.0
  %2468 = vmatprep.subr.mxu0 0.0
  %2469 = vmatpush2.msra.mxu0 0.0
  %2470 = vmatprep.subr.mxu0 0.0
  %2471 = vmatpush2.msra.mxu0 0.0
  %2472 = vmatprep.subr.mxu0 0.0
  %2473 = vmatpush2.msra.mxu0 0.0
  %2474 = vmatprep.subr.mxu0 0.0
  %2475 = vmatpush2.msra.mxu0 0.0
  %2476 = vmatprep.mubr.f32.mxu0 0.0
  %v2477 = vand.u32 %v20, 4294901760
  %v2478 = vsub.f32 %v20, %v2477
  %v2479 = vand.u32 %v2478, 4294901760
  %v2480 = vsub.f32 %v2478, %v2479
  %v2481 = vand.u32 %v2480, 4294901760
  %2482 = vmatmul.mubr.f32.gmra.mxu0 %v2481
  %v2483 = vpop.f32.mrf.mxu0
  %v2484 = vadd.f32 0.0, %v2483
  %v2485 = vpop.f32.mrf.mxu0
  %v2486 = vadd.f32 0.0, %v2485
  %2487 = vmatprep.mubr.f32.mxu0 0.0
  %v2488 = vand.u32 %v21, 4294901760
  %v2489 = vsub.f32 %v21, %v2488
  %v2490 = vand.u32 %v2489, 4294901760
  %v2491 = vsub.f32 %v2489, %v2490
  %v2492 = vand.u32 %v2491, 4294901760
  %2493 = vmatmul.mubr.f32.gmra.mxu0 %v2492
  %v2494 = vpop.f32.mrf.mxu0
  %v2495 = vadd.f32 0.0, %v2494
  %v2496 = vpop.f32.mrf.mxu0
  %v2497 = vadd.f32 0.0, %v2496
  %2498 = vmatprep.mubr.f32.mxu0 0.0
  %v2499 = vand.u32 %v22, 4294901760
  %v2500 = vsub.f32 %v22, %v2499
  %v2501 = vand.u32 %v2500, 4294901760
  %v2502 = vsub.f32 %v2500, %v2501
  %v2503 = vand.u32 %v2502, 4294901760
  %2504 = vmatmul.mubr.f32.gmra.mxu0 %v2503
  %v2505 = vpop.f32.mrf.mxu0
  %v2506 = vadd.f32 0.0, %v2505
  %v2507 = vpop.f32.mrf.mxu0
  %v2508 = vadd.f32 0.0, %v2507
  %2509 = vmatprep.mubr.f32.mxu0 0.0
  %v2510 = vand.u32 %v23, 4294901760
  %v2511 = vsub.f32 %v23, %v2510
  %v2512 = vand.u32 %v2511, 4294901760
  %v2513 = vsub.f32 %v2511, %v2512
  %v2514 = vand.u32 %v2513, 4294901760
  %2515 = vmatmul.mubr.f32.gmra.mxu0 %v2514
  %v2516 = vpop.f32.mrf.mxu0
  %v2517 = vadd.f32 0.0, %v2516
  %v2518 = vpop.f32.mrf.mxu0
  %v2519 = vadd.f32 0.0, %v2518
  %2520 = vdwg.mxu0
  %v2521 = vand.u32 %v2379, 4294901760
  %v2522 = vsub.f32 %v2379, %v2521
  %v2523 = vand.u32 %v2522, 4294901760
  %v2524 = vsub.f32 %v2522, %v2523
  %v2525 = vand.u32 %v2524, 4294901760
  %2526 = vmatprep.subr.mxu0 %v2525
  %v2527 = vand.u32 %v2378, 4294901760
  %v2528 = vsub.f32 %v2378, %v2527
  %v2529 = vand.u32 %v2528, 4294901760
  %v2530 = vsub.f32 %v2528, %v2529
  %v2531 = vand.u32 %v2530, 4294901760
  %2532 = vmatpush1.msra.mxu0 %v2531
  %v2533 = vand.u32 %v2377, 4294901760
  %v2534 = vsub.f32 %v2377, %v2533
  %v2535 = vand.u32 %v2534, 4294901760
  %v2536 = vsub.f32 %v2534, %v2535
  %v2537 = vand.u32 %v2536, 4294901760
  %2538 = vmatprep.subr.mxu0 %v2537
  %v2539 = vand.u32 %v2376, 4294901760
  %v2540 = vsub.f32 %v2376, %v2539
  %v2541 = vand.u32 %v2540, 4294901760
  %v2542 = vsub.f32 %v2540, %v2541
  %v2543 = vand.u32 %v2542, 4294901760
  %2544 = vmatpush1.msra.mxu0 %v2543
  %v2545 = vand.u32 %v2375, 4294901760
  %v2546 = vsub.f32 %v2375, %v2545
  %v2547 = vand.u32 %v2546, 4294901760
  %v2548 = vsub.f32 %v2546, %v2547
  %v2549 = vand.u32 %v2548, 4294901760
  %2550 = vmatprep.subr.mxu0 %v2549
  %v2551 = vand.u32 %v2374, 4294901760
  %v2552 = vsub.f32 %v2374, %v2551
  %v2553 = vand.u32 %v2552, 4294901760
  %v2554 = vsub.f32 %v2552, %v2553
  %v2555 = vand.u32 %v2554, 4294901760
  %2556 = vmatpush1.msra.mxu0 %v2555
  %v2557 = vand.u32 %v2373, 4294901760
  %v2558 = vsub.f32 %v2373, %v2557
  %v2559 = vand.u32 %v2558, 4294901760
  %v2560 = vsub.f32 %v2558, %v2559
  %v2561 = vand.u32 %v2560, 4294901760
  %2562 = vmatprep.subr.mxu0 %v2561
  %v2563 = vand.u32 %v2372, 4294901760
  %v2564 = vsub.f32 %v2372, %v2563
  %v2565 = vand.u32 %v2564, 4294901760
  %v2566 = vsub.f32 %v2564, %v2565
  %v2567 = vand.u32 %v2566, 4294901760
  %2568 = vmatpush1.msra.mxu0 %v2567
  %v2569 = vand.u32 %v2371, 4294901760
  %v2570 = vsub.f32 %v2371, %v2569
  %v2571 = vand.u32 %v2570, 4294901760
  %v2572 = vsub.f32 %v2570, %v2571
  %v2573 = vand.u32 %v2572, 4294901760
  %2574 = vmatprep.subr.mxu0 %v2573
  %v2575 = vand.u32 %v2370, 4294901760
  %v2576 = vsub.f32 %v2370, %v2575
  %v2577 = vand.u32 %v2576, 4294901760
  %v2578 = vsub.f32 %v2576, %v2577
  %v2579 = vand.u32 %v2578, 4294901760
  %2580 = vmatpush1.msra.mxu0 %v2579
  %v2581 = vand.u32 %v2369, 4294901760
  %v2582 = vsub.f32 %v2369, %v2581
  %v2583 = vand.u32 %v2582, 4294901760
  %v2584 = vsub.f32 %v2582, %v2583
  %v2585 = vand.u32 %v2584, 4294901760
  %2586 = vmatprep.subr.mxu0 %v2585
  %v2587 = vand.u32 %v2368, 4294901760
  %v2588 = vsub.f32 %v2368, %v2587
  %v2589 = vand.u32 %v2588, 4294901760
  %v2590 = vsub.f32 %v2588, %v2589
  %v2591 = vand.u32 %v2590, 4294901760
  %2592 = vmatpush1.msra.mxu0 %v2591
  %v2593 = vand.u32 %v2367, 4294901760
  %v2594 = vsub.f32 %v2367, %v2593
  %v2595 = vand.u32 %v2594, 4294901760
  %v2596 = vsub.f32 %v2594, %v2595
  %v2597 = vand.u32 %v2596, 4294901760
  %2598 = vmatprep.subr.mxu0 %v2597
  %v2599 = vand.u32 %v2366, 4294901760
  %v2600 = vsub.f32 %v2366, %v2599
  %v2601 = vand.u32 %v2600, 4294901760
  %v2602 = vsub.f32 %v2600, %v2601
  %v2603 = vand.u32 %v2602, 4294901760
  %2604 = vmatpush1.msra.mxu0 %v2603
  %v2605 = vand.u32 %v2365, 4294901760
  %v2606 = vsub.f32 %v2365, %v2605
  %v2607 = vand.u32 %v2606, 4294901760
  %v2608 = vsub.f32 %v2606, %v2607
  %v2609 = vand.u32 %v2608, 4294901760
  %2610 = vmatprep.subr.mxu0 %v2609
  %v2611 = vand.u32 %v2364, 4294901760
  %v2612 = vsub.f32 %v2364, %v2611
  %v2613 = vand.u32 %v2612, 4294901760
  %v2614 = vsub.f32 %v2612, %v2613
  %v2615 = vand.u32 %v2614, 4294901760
  %2616 = vmatpush1.msra.mxu0 %v2615
  %v2617 = vand.u32 %v2363, 4294901760
  %v2618 = vsub.f32 %v2363, %v2617
  %v2619 = vand.u32 %v2618, 4294901760
  %v2620 = vsub.f32 %v2618, %v2619
  %v2621 = vand.u32 %v2620, 4294901760
  %2622 = vmatprep.subr.mxu0 %v2621
  %v2623 = vand.u32 %v2362, 4294901760
  %v2624 = vsub.f32 %v2362, %v2623
  %v2625 = vand.u32 %v2624, 4294901760
  %v2626 = vsub.f32 %v2624, %v2625
  %v2627 = vand.u32 %v2626, 4294901760
  %2628 = vmatpush1.msra.mxu0 %v2627
  %v2629 = vand.u32 %v2361, 4294901760
  %v2630 = vsub.f32 %v2361, %v2629
  %v2631 = vand.u32 %v2630, 4294901760
  %v2632 = vsub.f32 %v2630, %v2631
  %v2633 = vand.u32 %v2632, 4294901760
  %2634 = vmatprep.subr.mxu0 %v2633
  %v2635 = vand.u32 %v2360, 4294901760
  %v2636 = vsub.f32 %v2360, %v2635
  %v2637 = vand.u32 %v2636, 4294901760
  %v2638 = vsub.f32 %v2636, %v2637
  %v2639 = vand.u32 %v2638, 4294901760
  %2640 = vmatpush1.msra.mxu0 %v2639
  %v2641 = vand.u32 %v2359, 4294901760
  %v2642 = vsub.f32 %v2359, %v2641
  %v2643 = vand.u32 %v2642, 4294901760
  %v2644 = vsub.f32 %v2642, %v2643
  %v2645 = vand.u32 %v2644, 4294901760
  %2646 = vmatprep.subr.mxu0 %v2645
  %v2647 = vand.u32 %v2358, 4294901760
  %v2648 = vsub.f32 %v2358, %v2647
  %v2649 = vand.u32 %v2648, 4294901760
  %v2650 = vsub.f32 %v2648, %v2649
  %v2651 = vand.u32 %v2650, 4294901760
  %2652 = vmatpush1.msra.mxu0 %v2651
  %v2653 = vand.u32 %v2357, 4294901760
  %v2654 = vsub.f32 %v2357, %v2653
  %v2655 = vand.u32 %v2654, 4294901760
  %v2656 = vsub.f32 %v2654, %v2655
  %v2657 = vand.u32 %v2656, 4294901760
  %2658 = vmatprep.subr.mxu0 %v2657
  %v2659 = vand.u32 %v2356, 4294901760
  %v2660 = vsub.f32 %v2356, %v2659
  %v2661 = vand.u32 %v2660, 4294901760
  %v2662 = vsub.f32 %v2660, %v2661
  %v2663 = vand.u32 %v2662, 4294901760
  %2664 = vmatpush1.msra.mxu0 %v2663
  %v2665 = vand.u32 %v2355, 4294901760
  %v2666 = vsub.f32 %v2355, %v2665
  %v2667 = vand.u32 %v2666, 4294901760
  %v2668 = vsub.f32 %v2666, %v2667
  %v2669 = vand.u32 %v2668, 4294901760
  %2670 = vmatprep.subr.mxu0 %v2669
  %v2671 = vand.u32 %v2354, 4294901760
  %v2672 = vsub.f32 %v2354, %v2671
  %v2673 = vand.u32 %v2672, 4294901760
  %v2674 = vsub.f32 %v2672, %v2673
  %v2675 = vand.u32 %v2674, 4294901760
  %2676 = vmatpush1.msra.mxu0 %v2675
  %v2677 = vand.u32 %v2353, 4294901760
  %v2678 = vsub.f32 %v2353, %v2677
  %v2679 = vand.u32 %v2678, 4294901760
  %v2680 = vsub.f32 %v2678, %v2679
  %v2681 = vand.u32 %v2680, 4294901760
  %2682 = vmatprep.subr.mxu0 %v2681
  %v2683 = vand.u32 %v2352, 4294901760
  %v2684 = vsub.f32 %v2352, %v2683
  %v2685 = vand.u32 %v2684, 4294901760
  %v2686 = vsub.f32 %v2684, %v2685
  %v2687 = vand.u32 %v2686, 4294901760
  %2688 = vmatpush1.msra.mxu0 %v2687
  %v2689 = vand.u32 %v2351, 4294901760
  %v2690 = vsub.f32 %v2351, %v2689
  %v2691 = vand.u32 %v2690, 4294901760
  %v2692 = vsub.f32 %v2690, %v2691
  %v2693 = vand.u32 %v2692, 4294901760
  %2694 = vmatprep.subr.mxu0 %v2693
  %v2695 = vand.u32 %v2350, 4294901760
  %v2696 = vsub.f32 %v2350, %v2695
  %v2697 = vand.u32 %v2696, 4294901760
  %v2698 = vsub.f32 %v2696, %v2697
  %v2699 = vand.u32 %v2698, 4294901760
  %2700 = vmatpush1.msra.mxu0 %v2699
  %v2701 = vand.u32 %v2349, 4294901760
  %v2702 = vsub.f32 %v2349, %v2701
  %v2703 = vand.u32 %v2702, 4294901760
  %v2704 = vsub.f32 %v2702, %v2703
  %v2705 = vand.u32 %v2704, 4294901760
  %2706 = vmatprep.subr.mxu0 %v2705
  %v2707 = vand.u32 %v2348, 4294901760
  %v2708 = vsub.f32 %v2348, %v2707
  %v2709 = vand.u32 %v2708, 4294901760
  %v2710 = vsub.f32 %v2708, %v2709
  %v2711 = vand.u32 %v2710, 4294901760
  %2712 = vmatpush1.msra.mxu0 %v2711
  %2713 = vmatprep.subr.mxu0 0.0
  %2714 = vmatpush2.msra.mxu0 0.0
  %2715 = vmatprep.subr.mxu0 0.0
  %2716 = vmatpush2.msra.mxu0 0.0
  %2717 = vmatprep.subr.mxu0 0.0
  %2718 = vmatpush2.msra.mxu0 0.0
  %2719 = vmatprep.subr.mxu0 0.0
  %2720 = vmatpush2.msra.mxu0 0.0
  %2721 = vmatprep.subr.mxu0 0.0
  %2722 = vmatpush2.msra.mxu0 0.0
  %2723 = vmatprep.subr.mxu0 0.0
  %2724 = vmatpush2.msra.mxu0 0.0
  %2725 = vmatprep.subr.mxu0 0.0
  %2726 = vmatpush2.msra.mxu0 0.0
  %2727 = vmatprep.subr.mxu0 0.0
  %2728 = vmatpush2.msra.mxu0 0.0
  %2729 = vmatprep.subr.mxu0 0.0
  %2730 = vmatpush2.msra.mxu0 0.0
  %2731 = vmatprep.subr.mxu0 0.0
  %2732 = vmatpush2.msra.mxu0 0.0
  %2733 = vmatprep.subr.mxu0 0.0
  %2734 = vmatpush2.msra.mxu0 0.0
  %2735 = vmatprep.subr.mxu0 0.0
  %2736 = vmatpush2.msra.mxu0 0.0
  %2737 = vmatprep.subr.mxu0 0.0
  %2738 = vmatpush2.msra.mxu0 0.0
  %2739 = vmatprep.subr.mxu0 0.0
  %2740 = vmatpush2.msra.mxu0 0.0
  %2741 = vmatprep.subr.mxu0 0.0
  %2742 = vmatpush2.msra.mxu0 0.0
  %2743 = vmatprep.subr.mxu0 0.0
  %2744 = vmatpush2.msra.mxu0 0.0
  %2745 = vmatprep.mubr.f32.mxu0 0.0
  %v2746 = vand.u32 %v20, 4294901760
  %2747 = vmatmul.mubr.f32.gmra.mxu0 %v2746
  %v2748 = vpop.f32.mrf.mxu0
  %v2749 = vadd.f32 %v2484, %v2748
  %v2750 = vpop.f32.mrf.mxu0
  %v2751 = vadd.f32 %v2486, %v2750
  %2752 = vmatprep.mubr.f32.mxu0 0.0
  %v2753 = vand.u32 %v21, 4294901760
  %2754 = vmatmul.mubr.f32.gmra.mxu0 %v2753
  %v2755 = vpop.f32.mrf.mxu0
  %v2756 = vadd.f32 %v2495, %v2755
  %v2757 = vpop.f32.mrf.mxu0
  %v2758 = vadd.f32 %v2497, %v2757
  %2759 = vmatprep.mubr.f32.mxu0 0.0
  %v2760 = vand.u32 %v22, 4294901760
  %2761 = vmatmul.mubr.f32.gmra.mxu0 %v2760
  %v2762 = vpop.f32.mrf.mxu0
  %v2763 = vadd.f32 %v2506, %v2762
  %v2764 = vpop.f32.mrf.mxu0
  %v2765 = vadd.f32 %v2508, %v2764
  %2766 = vmatprep.mubr.f32.mxu0 0.0
  %v2767 = vand.u32 %v23, 4294901760
  %2768 = vmatmul.mubr.f32.gmra.mxu0 %v2767
  %v2769 = vpop.f32.mrf.mxu0
  %v2770 = vadd.f32 %v2517, %v2769
  %v2771 = vpop.f32.mrf.mxu0
  %v2772 = vadd.f32 %v2519, %v2771
  %2773 = vdwg.mxu0
  %v2774 = vand.u32 %v2379, 4294901760
  %v2775 = vsub.f32 %v2379, %v2774
  %2776 = vmatprep.subr.mxu0 %v2775
  %v2777 = vand.u32 %v2378, 4294901760
  %v2778 = vsub.f32 %v2378, %v2777
  %2779 = vmatpush1.msra.mxu0 %v2778
  %v2780 = vand.u32 %v2377, 4294901760
  %v2781 = vsub.f32 %v2377, %v2780
  %2782 = vmatprep.subr.mxu0 %v2781
  %v2783 = vand.u32 %v2376, 4294901760
  %v2784 = vsub.f32 %v2376, %v2783
  %2785 = vmatpush1.msra.mxu0 %v2784
  %v2786 = vand.u32 %v2375, 4294901760
  %v2787 = vsub.f32 %v2375, %v2786
  %2788 = vmatprep.subr.mxu0 %v2787
  %v2789 = vand.u32 %v2374, 4294901760
  %v2790 = vsub.f32 %v2374, %v2789
  %2791 = vmatpush1.msra.mxu0 %v2790
  %v2792 = vand.u32 %v2373, 4294901760
  %v2793 = vsub.f32 %v2373, %v2792
  %2794 = vmatprep.subr.mxu0 %v2793
  %v2795 = vand.u32 %v2372, 4294901760
  %v2796 = vsub.f32 %v2372, %v2795
  %2797 = vmatpush1.msra.mxu0 %v2796
  %v2798 = vand.u32 %v2371, 4294901760
  %v2799 = vsub.f32 %v2371, %v2798
  %2800 = vmatprep.subr.mxu0 %v2799
  %v2801 = vand.u32 %v2370, 4294901760
  %v2802 = vsub.f32 %v2370, %v2801
  %2803 = vmatpush1.msra.mxu0 %v2802
  %v2804 = vand.u32 %v2369, 4294901760
  %v2805 = vsub.f32 %v2369, %v2804
  %2806 = vmatprep.subr.mxu0 %v2805
  %v2807 = vand.u32 %v2368, 4294901760
  %v2808 = vsub.f32 %v2368, %v2807
  %2809 = vmatpush1.msra.mxu0 %v2808
  %v2810 = vand.u32 %v2367, 4294901760
  %v2811 = vsub.f32 %v2367, %v2810
  %2812 = vmatprep.subr.mxu0 %v2811
  %v2813 = vand.u32 %v2366, 4294901760
  %v2814 = vsub.f32 %v2366, %v2813
  %2815 = vmatpush1.msra.mxu0 %v2814
  %v2816 = vand.u32 %v2365, 4294901760
  %v2817 = vsub.f32 %v2365, %v2816
  %2818 = vmatprep.subr.mxu0 %v2817
  %v2819 = vand.u32 %v2364, 4294901760
  %v2820 = vsub.f32 %v2364, %v2819
  %2821 = vmatpush1.msra.mxu0 %v2820
  %v2822 = vand.u32 %v2363, 4294901760
  %v2823 = vsub.f32 %v2363, %v2822
  %2824 = vmatprep.subr.mxu0 %v2823
  %v2825 = vand.u32 %v2362, 4294901760
  %v2826 = vsub.f32 %v2362, %v2825
  %2827 = vmatpush1.msra.mxu0 %v2826
  %v2828 = vand.u32 %v2361, 4294901760
  %v2829 = vsub.f32 %v2361, %v2828
  %2830 = vmatprep.subr.mxu0 %v2829
  %v2831 = vand.u32 %v2360, 4294901760
  %v2832 = vsub.f32 %v2360, %v2831
  %2833 = vmatpush1.msra.mxu0 %v2832
  %v2834 = vand.u32 %v2359, 4294901760
  %v2835 = vsub.f32 %v2359, %v2834
  %2836 = vmatprep.subr.mxu0 %v2835
  %v2837 = vand.u32 %v2358, 4294901760
  %v2838 = vsub.f32 %v2358, %v2837
  %2839 = vmatpush1.msra.mxu0 %v2838
  %v2840 = vand.u32 %v2357, 4294901760
  %v2841 = vsub.f32 %v2357, %v2840
  %2842 = vmatprep.subr.mxu0 %v2841
  %v2843 = vand.u32 %v2356, 4294901760
  %v2844 = vsub.f32 %v2356, %v2843
  %2845 = vmatpush1.msra.mxu0 %v2844
  %v2846 = vand.u32 %v2355, 4294901760
  %v2847 = vsub.f32 %v2355, %v2846
  %2848 = vmatprep.subr.mxu0 %v2847
  %v2849 = vand.u32 %v2354, 4294901760
  %v2850 = vsub.f32 %v2354, %v2849
  %2851 = vmatpush1.msra.mxu0 %v2850
  %v2852 = vand.u32 %v2353, 4294901760
  %v2853 = vsub.f32 %v2353, %v2852
  %2854 = vmatprep.subr.mxu0 %v2853
  %v2855 = vand.u32 %v2352, 4294901760
  %v2856 = vsub.f32 %v2352, %v2855
  %2857 = vmatpush1.msra.mxu0 %v2856
  %v2858 = vand.u32 %v2351, 4294901760
  %v2859 = vsub.f32 %v2351, %v2858
  %2860 = vmatprep.subr.mxu0 %v2859
  %v2861 = vand.u32 %v2350, 4294901760
  %v2862 = vsub.f32 %v2350, %v2861
  %2863 = vmatpush1.msra.mxu0 %v2862
  %v2864 = vand.u32 %v2349, 4294901760
  %v2865 = vsub.f32 %v2349, %v2864
  %2866 = vmatprep.subr.mxu0 %v2865
  %v2867 = vand.u32 %v2348, 4294901760
  %v2868 = vsub.f32 %v2348, %v2867
  %2869 = vmatpush1.msra.mxu0 %v2868
  %2870 = vmatprep.subr.mxu0 0.0
  %2871 = vmatpush2.msra.mxu0 0.0
  %2872 = vmatprep.subr.mxu0 0.0
  %2873 = vmatpush2.msra.mxu0 0.0
  %2874 = vmatprep.subr.mxu0 0.0
  %2875 = vmatpush2.msra.mxu0 0.0
  %2876 = vmatprep.subr.mxu0 0.0
  %2877 = vmatpush2.msra.mxu0 0.0
  %2878 = vmatprep.subr.mxu0 0.0
  %2879 = vmatpush2.msra.mxu0 0.0
  %2880 = vmatprep.subr.mxu0 0.0
  %2881 = vmatpush2.msra.mxu0 0.0
  %2882 = vmatprep.subr.mxu0 0.0
  %2883 = vmatpush2.msra.mxu0 0.0
  %2884 = vmatprep.subr.mxu0 0.0
  %2885 = vmatpush2.msra.mxu0 0.0
  %2886 = vmatprep.subr.mxu0 0.0
  %2887 = vmatpush2.msra.mxu0 0.0
  %2888 = vmatprep.subr.mxu0 0.0
  %2889 = vmatpush2.msra.mxu0 0.0
  %2890 = vmatprep.subr.mxu0 0.0
  %2891 = vmatpush2.msra.mxu0 0.0
  %2892 = vmatprep.subr.mxu0 0.0
  %2893 = vmatpush2.msra.mxu0 0.0
  %2894 = vmatprep.subr.mxu0 0.0
  %2895 = vmatpush2.msra.mxu0 0.0
  %2896 = vmatprep.subr.mxu0 0.0
  %2897 = vmatpush2.msra.mxu0 0.0
  %2898 = vmatprep.subr.mxu0 0.0
  %2899 = vmatpush2.msra.mxu0 0.0
  %2900 = vmatprep.subr.mxu0 0.0
  %2901 = vmatpush2.msra.mxu0 0.0
  %2902 = vmatprep.mubr.f32.mxu0 0.0
  %v2903 = vand.u32 %v20, 4294901760
  %v2904 = vsub.f32 %v20, %v2903
  %2905 = vmatmul.mubr.f32.gmra.mxu0 %v2904
  %v2906 = vpop.f32.mrf.mxu0
  %v2907 = vadd.f32 %v2749, %v2906
  %v2908 = vpop.f32.mrf.mxu0
  %v2909 = vadd.f32 %v2751, %v2908
  %2910 = vmatprep.mubr.f32.mxu0 0.0
  %v2911 = vand.u32 %v21, 4294901760
  %v2912 = vsub.f32 %v21, %v2911
  %2913 = vmatmul.mubr.f32.gmra.mxu0 %v2912
  %v2914 = vpop.f32.mrf.mxu0
  %v2915 = vadd.f32 %v2756, %v2914
  %v2916 = vpop.f32.mrf.mxu0
  %v2917 = vadd.f32 %v2758, %v2916
  %2918 = vmatprep.mubr.f32.mxu0 0.0
  %v2919 = vand.u32 %v22, 4294901760
  %v2920 = vsub.f32 %v22, %v2919
  %2921 = vmatmul.mubr.f32.gmra.mxu0 %v2920
  %v2922 = vpop.f32.mrf.mxu0
  %v2923 = vadd.f32 %v2763, %v2922
  %v2924 = vpop.f32.mrf.mxu0
  %v2925 = vadd.f32 %v2765, %v2924
  %2926 = vmatprep.mubr.f32.mxu0 0.0
  %v2927 = vand.u32 %v23, 4294901760
  %v2928 = vsub.f32 %v23, %v2927
  %2929 = vmatmul.mubr.f32.gmra.mxu0 %v2928
  %v2930 = vpop.f32.mrf.mxu0
  %v2931 = vadd.f32 %v2770, %v2930
  %v2932 = vpop.f32.mrf.mxu0
  %v2933 = vadd.f32 %v2772, %v2932
  %2934 = vdwg.mxu0
  %v2935 = vand.u32 %v2379, 4294901760
  %2936 = vmatprep.subr.mxu0 %v2935
  %v2937 = vand.u32 %v2378, 4294901760
  %2938 = vmatpush1.msra.mxu0 %v2937
  %v2939 = vand.u32 %v2377, 4294901760
  %2940 = vmatprep.subr.mxu0 %v2939
  %v2941 = vand.u32 %v2376, 4294901760
  %2942 = vmatpush1.msra.mxu0 %v2941
  %v2943 = vand.u32 %v2375, 4294901760
  %2944 = vmatprep.subr.mxu0 %v2943
  %v2945 = vand.u32 %v2374, 4294901760
  %2946 = vmatpush1.msra.mxu0 %v2945
  %v2947 = vand.u32 %v2373, 4294901760
  %2948 = vmatprep.subr.mxu0 %v2947
  %v2949 = vand.u32 %v2372, 4294901760
  %2950 = vmatpush1.msra.mxu0 %v2949
  %v2951 = vand.u32 %v2371, 4294901760
  %2952 = vmatprep.subr.mxu0 %v2951
  %v2953 = vand.u32 %v2370, 4294901760
  %2954 = vmatpush1.msra.mxu0 %v2953
  %v2955 = vand.u32 %v2369, 4294901760
  %2956 = vmatprep.subr.mxu0 %v2955
  %v2957 = vand.u32 %v2368, 4294901760
  %2958 = vmatpush1.msra.mxu0 %v2957
  %v2959 = vand.u32 %v2367, 4294901760
  %2960 = vmatprep.subr.mxu0 %v2959
  %v2961 = vand.u32 %v2366, 4294901760
  %2962 = vmatpush1.msra.mxu0 %v2961
  %v2963 = vand.u32 %v2365, 4294901760
  %2964 = vmatprep.subr.mxu0 %v2963
  %v2965 = vand.u32 %v2364, 4294901760
  %2966 = vmatpush1.msra.mxu0 %v2965
  %v2967 = vand.u32 %v2363, 4294901760
  %2968 = vmatprep.subr.mxu0 %v2967
  %v2969 = vand.u32 %v2362, 4294901760
  %2970 = vmatpush1.msra.mxu0 %v2969
  %v2971 = vand.u32 %v2361, 4294901760
  %2972 = vmatprep.subr.mxu0 %v2971
  %v2973 = vand.u32 %v2360, 4294901760
  %2974 = vmatpush1.msra.mxu0 %v2973
  %v2975 = vand.u32 %v2359, 4294901760
  %2976 = vmatprep.subr.mxu0 %v2975
  %v2977 = vand.u32 %v2358, 4294901760
  %2978 = vmatpush1.msra.mxu0 %v2977
  %v2979 = vand.u32 %v2357, 4294901760
  %2980 = vmatprep.subr.mxu0 %v2979
  %v2981 = vand.u32 %v2356, 4294901760
  %2982 = vmatpush1.msra.mxu0 %v2981
  %v2983 = vand.u32 %v2355, 4294901760
  %2984 = vmatprep.subr.mxu0 %v2983
  %v2985 = vand.u32 %v2354, 4294901760
  %2986 = vmatpush1.msra.mxu0 %v2985
  %v2987 = vand.u32 %v2353, 4294901760
  %2988 = vmatprep.subr.mxu0 %v2987
  %v2989 = vand.u32 %v2352, 4294901760
  %2990 = vmatpush1.msra.mxu0 %v2989
  %v2991 = vand.u32 %v2351, 4294901760
  %2992 = vmatprep.subr.mxu0 %v2991
  %v2993 = vand.u32 %v2350, 4294901760
  %2994 = vmatpush1.msra.mxu0 %v2993
  %v2995 = vand.u32 %v2349, 4294901760
  %2996 = vmatprep.subr.mxu0 %v2995
  %v2997 = vand.u32 %v2348, 4294901760
  %2998 = vmatpush1.msra.mxu0 %v2997
  %2999 = vmatprep.subr.mxu0 0.0
  %3000 = vmatpush2.msra.mxu0 0.0
  %3001 = vmatprep.subr.mxu0 0.0
  %3002 = vmatpush2.msra.mxu0 0.0
  %3003 = vmatprep.subr.mxu0 0.0
  %3004 = vmatpush2.msra.mxu0 0.0
  %3005 = vmatprep.subr.mxu0 0.0
  %3006 = vmatpush2.msra.mxu0 0.0
  %3007 = vmatprep.subr.mxu0 0.0
  %3008 = vmatpush2.msra.mxu0 0.0
  %3009 = vmatprep.subr.mxu0 0.0
  %3010 = vmatpush2.msra.mxu0 0.0
  %3011 = vmatprep.subr.mxu0 0.0
  %3012 = vmatpush2.msra.mxu0 0.0
  %3013 = vmatprep.subr.mxu0 0.0
  %3014 = vmatpush2.msra.mxu0 0.0
  %3015 = vmatprep.subr.mxu0 0.0
  %3016 = vmatpush2.msra.mxu0 0.0
  %3017 = vmatprep.subr.mxu0 0.0
  %3018 = vmatpush2.msra.mxu0 0.0
  %3019 = vmatprep.subr.mxu0 0.0
  %3020 = vmatpush2.msra.mxu0 0.0
  %3021 = vmatprep.subr.mxu0 0.0
  %3022 = vmatpush2.msra.mxu0 0.0
  %3023 = vmatprep.subr.mxu0 0.0
  %3024 = vmatpush2.msra.mxu0 0.0
  %3025 = vmatprep.subr.mxu0 0.0
  %3026 = vmatpush2.msra.mxu0 0.0
  %3027 = vmatprep.subr.mxu0 0.0
  %3028 = vmatpush2.msra.mxu0 0.0
  %3029 = vmatprep.subr.mxu0 0.0
  %3030 = vmatpush2.msra.mxu0 0.0
  %3031 = vmatprep.mubr.f32.mxu0 0.0
  %v3032 = vand.u32 %v20, 4294901760
  %v3033 = vsub.f32 %v20, %v3032
  %v3034 = vand.u32 %v3033, 4294901760
  %3035 = vmatmul.mubr.f32.gmra.mxu0 %v3034
  %v3036 = vpop.f32.mrf.mxu0
  %v3037 = vadd.f32 %v2907, %v3036
  %v3038 = vpop.f32.mrf.mxu0
  %v3039 = vadd.f32 %v2909, %v3038
  %3040 = vmatprep.mubr.f32.mxu0 0.0
  %v3041 = vand.u32 %v21, 4294901760
  %v3042 = vsub.f32 %v21, %v3041
  %v3043 = vand.u32 %v3042, 4294901760
  %3044 = vmatmul.mubr.f32.gmra.mxu0 %v3043
  %v3045 = vpop.f32.mrf.mxu0
  %v3046 = vadd.f32 %v2915, %v3045
  %v3047 = vpop.f32.mrf.mxu0
  %v3048 = vadd.f32 %v2917, %v3047
  %3049 = vmatprep.mubr.f32.mxu0 0.0
  %v3050 = vand.u32 %v22, 4294901760
  %v3051 = vsub.f32 %v22, %v3050
  %v3052 = vand.u32 %v3051, 4294901760
  %3053 = vmatmul.mubr.f32.gmra.mxu0 %v3052
  %v3054 = vpop.f32.mrf.mxu0
  %v3055 = vadd.f32 %v2923, %v3054
  %v3056 = vpop.f32.mrf.mxu0
  %v3057 = vadd.f32 %v2925, %v3056
  %3058 = vmatprep.mubr.f32.mxu0 0.0
  %v3059 = vand.u32 %v23, 4294901760
  %v3060 = vsub.f32 %v23, %v3059
  %v3061 = vand.u32 %v3060, 4294901760
  %3062 = vmatmul.mubr.f32.gmra.mxu0 %v3061
  %v3063 = vpop.f32.mrf.mxu0
  %v3064 = vadd.f32 %v2931, %v3063
  %v3065 = vpop.f32.mrf.mxu0
  %v3066 = vadd.f32 %v2933, %v3065
  %3067 = vdwg.mxu0
  %v3068 = vand.u32 %v2379, 4294901760
  %v3069 = vsub.f32 %v2379, %v3068
  %v3070 = vand.u32 %v3069, 4294901760
  %3071 = vmatprep.subr.mxu0 %v3070
  %v3072 = vand.u32 %v2378, 4294901760
  %v3073 = vsub.f32 %v2378, %v3072
  %v3074 = vand.u32 %v3073, 4294901760
  %3075 = vmatpush1.msra.mxu0 %v3074
  %v3076 = vand.u32 %v2377, 4294901760
  %v3077 = vsub.f32 %v2377, %v3076
  %v3078 = vand.u32 %v3077, 4294901760
  %3079 = vmatprep.subr.mxu0 %v3078
  %v3080 = vand.u32 %v2376, 4294901760
  %v3081 = vsub.f32 %v2376, %v3080
  %v3082 = vand.u32 %v3081, 4294901760
  %3083 = vmatpush1.msra.mxu0 %v3082
  %v3084 = vand.u32 %v2375, 4294901760
  %v3085 = vsub.f32 %v2375, %v3084
  %v3086 = vand.u32 %v3085, 4294901760
  %3087 = vmatprep.subr.mxu0 %v3086
  %v3088 = vand.u32 %v2374, 4294901760
  %v3089 = vsub.f32 %v2374, %v3088
  %v3090 = vand.u32 %v3089, 4294901760
  %3091 = vmatpush1.msra.mxu0 %v3090
  %v3092 = vand.u32 %v2373, 4294901760
  %v3093 = vsub.f32 %v2373, %v3092
  %v3094 = vand.u32 %v3093, 4294901760
  %3095 = vmatprep.subr.mxu0 %v3094
  %v3096 = vand.u32 %v2372, 4294901760
  %v3097 = vsub.f32 %v2372, %v3096
  %v3098 = vand.u32 %v3097, 4294901760
  %3099 = vmatpush1.msra.mxu0 %v3098
  %v3100 = vand.u32 %v2371, 4294901760
  %v3101 = vsub.f32 %v2371, %v3100
  %v3102 = vand.u32 %v3101, 4294901760
  %3103 = vmatprep.subr.mxu0 %v3102
  %v3104 = vand.u32 %v2370, 4294901760
  %v3105 = vsub.f32 %v2370, %v3104
  %v3106 = vand.u32 %v3105, 4294901760
  %3107 = vmatpush1.msra.mxu0 %v3106
  %v3108 = vand.u32 %v2369, 4294901760
  %v3109 = vsub.f32 %v2369, %v3108
  %v3110 = vand.u32 %v3109, 4294901760
  %3111 = vmatprep.subr.mxu0 %v3110
  %v3112 = vand.u32 %v2368, 4294901760
  %v3113 = vsub.f32 %v2368, %v3112
  %v3114 = vand.u32 %v3113, 4294901760
  %3115 = vmatpush1.msra.mxu0 %v3114
  %v3116 = vand.u32 %v2367, 4294901760
  %v3117 = vsub.f32 %v2367, %v3116
  %v3118 = vand.u32 %v3117, 4294901760
  %3119 = vmatprep.subr.mxu0 %v3118
  %v3120 = vand.u32 %v2366, 4294901760
  %v3121 = vsub.f32 %v2366, %v3120
  %v3122 = vand.u32 %v3121, 4294901760
  %3123 = vmatpush1.msra.mxu0 %v3122
  %v3124 = vand.u32 %v2365, 4294901760
  %v3125 = vsub.f32 %v2365, %v3124
  %v3126 = vand.u32 %v3125, 4294901760
  %3127 = vmatprep.subr.mxu0 %v3126
  %v3128 = vand.u32 %v2364, 4294901760
  %v3129 = vsub.f32 %v2364, %v3128
  %v3130 = vand.u32 %v3129, 4294901760
  %3131 = vmatpush1.msra.mxu0 %v3130
  %v3132 = vand.u32 %v2363, 4294901760
  %v3133 = vsub.f32 %v2363, %v3132
  %v3134 = vand.u32 %v3133, 4294901760
  %3135 = vmatprep.subr.mxu0 %v3134
  %v3136 = vand.u32 %v2362, 4294901760
  %v3137 = vsub.f32 %v2362, %v3136
  %v3138 = vand.u32 %v3137, 4294901760
  %3139 = vmatpush1.msra.mxu0 %v3138
  %v3140 = vand.u32 %v2361, 4294901760
  %v3141 = vsub.f32 %v2361, %v3140
  %v3142 = vand.u32 %v3141, 4294901760
  %3143 = vmatprep.subr.mxu0 %v3142
  %v3144 = vand.u32 %v2360, 4294901760
  %v3145 = vsub.f32 %v2360, %v3144
  %v3146 = vand.u32 %v3145, 4294901760
  %3147 = vmatpush1.msra.mxu0 %v3146
  %v3148 = vand.u32 %v2359, 4294901760
  %v3149 = vsub.f32 %v2359, %v3148
  %v3150 = vand.u32 %v3149, 4294901760
  %3151 = vmatprep.subr.mxu0 %v3150
  %v3152 = vand.u32 %v2358, 4294901760
  %v3153 = vsub.f32 %v2358, %v3152
  %v3154 = vand.u32 %v3153, 4294901760
  %3155 = vmatpush1.msra.mxu0 %v3154
  %v3156 = vand.u32 %v2357, 4294901760
  %v3157 = vsub.f32 %v2357, %v3156
  %v3158 = vand.u32 %v3157, 4294901760
  %3159 = vmatprep.subr.mxu0 %v3158
  %v3160 = vand.u32 %v2356, 4294901760
  %v3161 = vsub.f32 %v2356, %v3160
  %v3162 = vand.u32 %v3161, 4294901760
  %3163 = vmatpush1.msra.mxu0 %v3162
  %v3164 = vand.u32 %v2355, 4294901760
  %v3165 = vsub.f32 %v2355, %v3164
  %v3166 = vand.u32 %v3165, 4294901760
  %3167 = vmatprep.subr.mxu0 %v3166
  %v3168 = vand.u32 %v2354, 4294901760
  %v3169 = vsub.f32 %v2354, %v3168
  %v3170 = vand.u32 %v3169, 4294901760
  %3171 = vmatpush1.msra.mxu0 %v3170
  %v3172 = vand.u32 %v2353, 4294901760
  %v3173 = vsub.f32 %v2353, %v3172
  %v3174 = vand.u32 %v3173, 4294901760
  %3175 = vmatprep.subr.mxu0 %v3174
  %v3176 = vand.u32 %v2352, 4294901760
  %v3177 = vsub.f32 %v2352, %v3176
  %v3178 = vand.u32 %v3177, 4294901760
  %3179 = vmatpush1.msra.mxu0 %v3178
  %v3180 = vand.u32 %v2351, 4294901760
  %v3181 = vsub.f32 %v2351, %v3180
  %v3182 = vand.u32 %v3181, 4294901760
  %3183 = vmatprep.subr.mxu0 %v3182
  %v3184 = vand.u32 %v2350, 4294901760
  %v3185 = vsub.f32 %v2350, %v3184
  %v3186 = vand.u32 %v3185, 4294901760
  %3187 = vmatpush1.msra.mxu0 %v3186
  %v3188 = vand.u32 %v2349, 4294901760
  %v3189 = vsub.f32 %v2349, %v3188
  %v3190 = vand.u32 %v3189, 4294901760
  %3191 = vmatprep.subr.mxu0 %v3190
  %v3192 = vand.u32 %v2348, 4294901760
  %v3193 = vsub.f32 %v2348, %v3192
  %v3194 = vand.u32 %v3193, 4294901760
  %3195 = vmatpush1.msra.mxu0 %v3194
  %3196 = vmatprep.subr.mxu0 0.0
  %3197 = vmatpush2.msra.mxu0 0.0
  %3198 = vmatprep.subr.mxu0 0.0
  %3199 = vmatpush2.msra.mxu0 0.0
  %3200 = vmatprep.subr.mxu0 0.0
  %3201 = vmatpush2.msra.mxu0 0.0
  %3202 = vmatprep.subr.mxu0 0.0
  %3203 = vmatpush2.msra.mxu0 0.0
  %3204 = vmatprep.subr.mxu0 0.0
  %3205 = vmatpush2.msra.mxu0 0.0
  %3206 = vmatprep.subr.mxu0 0.0
  %3207 = vmatpush2.msra.mxu0 0.0
  %3208 = vmatprep.subr.mxu0 0.0
  %3209 = vmatpush2.msra.mxu0 0.0
  %3210 = vmatprep.subr.mxu0 0.0
  %3211 = vmatpush2.msra.mxu0 0.0
  %3212 = vmatprep.subr.mxu0 0.0
  %3213 = vmatpush2.msra.mxu0 0.0
  %3214 = vmatprep.subr.mxu0 0.0
  %3215 = vmatpush2.msra.mxu0 0.0
  %3216 = vmatprep.subr.mxu0 0.0
  %3217 = vmatpush2.msra.mxu0 0.0
  %3218 = vmatprep.subr.mxu0 0.0
  %3219 = vmatpush2.msra.mxu0 0.0
  %3220 = vmatprep.subr.mxu0 0.0
  %3221 = vmatpush2.msra.mxu0 0.0
  %3222 = vmatprep.subr.mxu0 0.0
  %3223 = vmatpush2.msra.mxu0 0.0
  %3224 = vmatprep.subr.mxu0 0.0
  %3225 = vmatpush2.msra.mxu0 0.0
  %3226 = vmatprep.subr.mxu0 0.0
  %3227 = vmatpush2.msra.mxu0 0.0
  %3228 = vmatprep.mubr.f32.mxu0 0.0
  %v3229 = vand.u32 %v20, 4294901760
  %3230 = vmatmul.mubr.f32.gmra.mxu0 %v3229
  %v3231 = vpop.f32.mrf.mxu0
  %v3232 = vadd.f32 %v3037, %v3231
  %v3233 = vpop.f32.mrf.mxu0
  %v3234 = vadd.f32 %v3039, %v3233
  %3235 = vmatprep.mubr.f32.mxu0 0.0
  %v3236 = vand.u32 %v21, 4294901760
  %3237 = vmatmul.mubr.f32.gmra.mxu0 %v3236
  %v3238 = vpop.f32.mrf.mxu0
  %v3239 = vadd.f32 %v3046, %v3238
  %v3240 = vpop.f32.mrf.mxu0
  %v3241 = vadd.f32 %v3048, %v3240
  %3242 = vmatprep.mubr.f32.mxu0 0.0
  %v3243 = vand.u32 %v22, 4294901760
  %3244 = vmatmul.mubr.f32.gmra.mxu0 %v3243
  %v3245 = vpop.f32.mrf.mxu0
  %v3246 = vadd.f32 %v3055, %v3245
  %v3247 = vpop.f32.mrf.mxu0
  %v3248 = vadd.f32 %v3057, %v3247
  %3249 = vmatprep.mubr.f32.mxu0 0.0
  %v3250 = vand.u32 %v23, 4294901760
  %3251 = vmatmul.mubr.f32.gmra.mxu0 %v3250
  %v3252 = vpop.f32.mrf.mxu0
  %v3253 = vadd.f32 %v3064, %v3252
  %v3254 = vpop.f32.mrf.mxu0
  %v3255 = vadd.f32 %v3066, %v3254
  %3256 = vdwg.mxu0
  %v3257 = vand.u32 %v2379, 4294901760
  %3258 = vmatprep.subr.mxu0 %v3257
  %v3259 = vand.u32 %v2378, 4294901760
  %3260 = vmatpush1.msra.mxu0 %v3259
  %v3261 = vand.u32 %v2377, 4294901760
  %3262 = vmatprep.subr.mxu0 %v3261
  %v3263 = vand.u32 %v2376, 4294901760
  %3264 = vmatpush1.msra.mxu0 %v3263
  %v3265 = vand.u32 %v2375, 4294901760
  %3266 = vmatprep.subr.mxu0 %v3265
  %v3267 = vand.u32 %v2374, 4294901760
  %3268 = vmatpush1.msra.mxu0 %v3267
  %v3269 = vand.u32 %v2373, 4294901760
  %3270 = vmatprep.subr.mxu0 %v3269
  %v3271 = vand.u32 %v2372, 4294901760
  %3272 = vmatpush1.msra.mxu0 %v3271
  %v3273 = vand.u32 %v2371, 4294901760
  %3274 = vmatprep.subr.mxu0 %v3273
  %v3275 = vand.u32 %v2370, 4294901760
  %3276 = vmatpush1.msra.mxu0 %v3275
  %v3277 = vand.u32 %v2369, 4294901760
  %3278 = vmatprep.subr.mxu0 %v3277
  %v3279 = vand.u32 %v2368, 4294901760
  %3280 = vmatpush1.msra.mxu0 %v3279
  %v3281 = vand.u32 %v2367, 4294901760
  %3282 = vmatprep.subr.mxu0 %v3281
  %v3283 = vand.u32 %v2366, 4294901760
  %3284 = vmatpush1.msra.mxu0 %v3283
  %v3285 = vand.u32 %v2365, 4294901760
  %3286 = vmatprep.subr.mxu0 %v3285
  %v3287 = vand.u32 %v2364, 4294901760
  %3288 = vmatpush1.msra.mxu0 %v3287
  %v3289 = vand.u32 %v2363, 4294901760
  %3290 = vmatprep.subr.mxu0 %v3289
  %v3291 = vand.u32 %v2362, 4294901760
  %3292 = vmatpush1.msra.mxu0 %v3291
  %v3293 = vand.u32 %v2361, 4294901760
  %3294 = vmatprep.subr.mxu0 %v3293
  %v3295 = vand.u32 %v2360, 4294901760
  %3296 = vmatpush1.msra.mxu0 %v3295
  %v3297 = vand.u32 %v2359, 4294901760
  %3298 = vmatprep.subr.mxu0 %v3297
  %v3299 = vand.u32 %v2358, 4294901760
  %3300 = vmatpush1.msra.mxu0 %v3299
  %v3301 = vand.u32 %v2357, 4294901760
  %3302 = vmatprep.subr.mxu0 %v3301
  %v3303 = vand.u32 %v2356, 4294901760
  %3304 = vmatpush1.msra.mxu0 %v3303
  %v3305 = vand.u32 %v2355, 4294901760
  %3306 = vmatprep.subr.mxu0 %v3305
  %v3307 = vand.u32 %v2354, 4294901760
  %3308 = vmatpush1.msra.mxu0 %v3307
  %v3309 = vand.u32 %v2353, 4294901760
  %3310 = vmatprep.subr.mxu0 %v3309
  %v3311 = vand.u32 %v2352, 4294901760
  %3312 = vmatpush1.msra.mxu0 %v3311
  %v3313 = vand.u32 %v2351, 4294901760
  %3314 = vmatprep.subr.mxu0 %v3313
  %v3315 = vand.u32 %v2350, 4294901760
  %3316 = vmatpush1.msra.mxu0 %v3315
  %v3317 = vand.u32 %v2349, 4294901760
  %3318 = vmatprep.subr.mxu0 %v3317
  %v3319 = vand.u32 %v2348, 4294901760
  %3320 = vmatpush1.msra.mxu0 %v3319
  %3321 = vmatprep.subr.mxu0 0.0
  %3322 = vmatpush2.msra.mxu0 0.0
  %3323 = vmatprep.subr.mxu0 0.0
  %3324 = vmatpush2.msra.mxu0 0.0
  %3325 = vmatprep.subr.mxu0 0.0
  %3326 = vmatpush2.msra.mxu0 0.0
  %3327 = vmatprep.subr.mxu0 0.0
  %3328 = vmatpush2.msra.mxu0 0.0
  %3329 = vmatprep.subr.mxu0 0.0
  %3330 = vmatpush2.msra.mxu0 0.0
  %3331 = vmatprep.subr.mxu0 0.0
  %3332 = vmatpush2.msra.mxu0 0.0
  %3333 = vmatprep.subr.mxu0 0.0
  %3334 = vmatpush2.msra.mxu0 0.0
  %3335 = vmatprep.subr.mxu0 0.0
  %3336 = vmatpush2.msra.mxu0 0.0
  %3337 = vmatprep.subr.mxu0 0.0
  %3338 = vmatpush2.msra.mxu0 0.0
  %3339 = vmatprep.subr.mxu0 0.0
  %3340 = vmatpush2.msra.mxu0 0.0
  %3341 = vmatprep.subr.mxu0 0.0
  %3342 = vmatpush2.msra.mxu0 0.0
  %3343 = vmatprep.subr.mxu0 0.0
  %3344 = vmatpush2.msra.mxu0 0.0
  %3345 = vmatprep.subr.mxu0 0.0
  %3346 = vmatpush2.msra.mxu0 0.0
  %3347 = vmatprep.subr.mxu0 0.0
  %3348 = vmatpush2.msra.mxu0 0.0
  %3349 = vmatprep.subr.mxu0 0.0
  %3350 = vmatpush2.msra.mxu0 0.0
  %3351 = vmatprep.subr.mxu0 0.0
  %3352 = vmatpush2.msra.mxu0 0.0
  %3353 = vmatprep.mubr.f32.mxu0 0.0
  %v3354 = vand.u32 %v20, 4294901760
  %3355 = vmatmul.mubr.f32.gmra.mxu0 %v3354
  %v3356 = vpop.f32.mrf.mxu0
  %v3357 = vadd.f32 %v3232, %v3356
  %v3358 = vpop.f32.mrf.mxu0
  %v3359 = vadd.f32 %v3234, %v3358
  %3360 = vmatprep.mubr.f32.mxu0 0.0
  %v3361 = vand.u32 %v21, 4294901760
  %3362 = vmatmul.mubr.f32.gmra.mxu0 %v3361
  %v3363 = vpop.f32.mrf.mxu0
  %v3364 = vadd.f32 %v3239, %v3363
  %v3365 = vpop.f32.mrf.mxu0
  %v3366 = vadd.f32 %v3241, %v3365
  %3367 = vmatprep.mubr.f32.mxu0 0.0
  %v3368 = vand.u32 %v22, 4294901760
  %3369 = vmatmul.mubr.f32.gmra.mxu0 %v3368
  %v3370 = vpop.f32.mrf.mxu0
  %v3371 = vadd.f32 %v3246, %v3370
  %v3372 = vpop.f32.mrf.mxu0
  %v3373 = vadd.f32 %v3248, %v3372
  %3374 = vmatprep.mubr.f32.mxu0 0.0
  %v3375 = vand.u32 %v23, 4294901760
  %3376 = vmatmul.mubr.f32.gmra.mxu0 %v3375
  %v3377 = vpop.f32.mrf.mxu0
  %v3378 = vadd.f32 %v3253, %v3377
  %v3379 = vpop.f32.mrf.mxu0
  %v3380 = vadd.f32 %v3255, %v3379
  %3381 = vdwg.mxu0
  %v3382 = vtanh.pop %v3357
  %v3383 = vtanh.pop %v3359
  %v3384 = vtanh.pop %v3364
  %v3385 = vtanh.pop %v3366
  %v3386 = vtanh.pop %v3371
  %v3387 = vtanh.pop %v3373
  %v3388 = vtanh.pop %v3378
  %v3389 = vtanh.pop %v3380
  %v3390 = vmul.f32 %v1152, %v2267
  %v3391 = vmul.f32 %v1153, %v2268
  %v3392 = vmul.f32 %v1154, %v2269
  %v3393 = vmul.f32 %v1155, %v2270
  %v3394 = vmul.f32 %v1156, %v2271
  %v3395 = vmul.f32 %v1157, %v2272
  %v3396 = vmul.f32 %v1158, %v2273
  %v3397 = vmul.f32 %v1159, %v2274
  %v3398 = vmul.f32 %v3390, %v3382
  %v3399 = vmul.f32 %v3391, %v3383
  %v3400 = vmul.f32 %v3392, %v3384
  %v3401 = vmul.f32 %v3393, %v3385
  %v3402 = vmul.f32 %v3394, %v3386
  %v3403 = vmul.f32 %v3395, %v3387
  %v3404 = vmul.f32 %v3396, %v3388
  %v3405 = vmul.f32 %v3397, %v3389
  %v3406 = vadd.f32 %v3398, %v3400
  %v3407 = vadd.f32 %v3406, %v3402
  %v3408 = vadd.f32 %v3407, %v3404
  %v3409 = vrot.slane %v3408, 4
  %v3410 = vadd.f32 %v3408, %v3409
  %v3411 = vrot.slane %v3410, 2
  %v3412 = vadd.f32 %v3410, %v3411
  %v3413 = vrot.slane %v3412, 1
  %v3414 = vadd.f32 %v3412, %v3413
  %v3415 = vadd.f32 %v3399, %v3401
  %v3416 = vadd.f32 %v3415, %v3403
  %v3417 = vadd.f32 %v3416, %v3405
  %v3418 = vrot.slane %v3417, 4
  %v3419 = vadd.f32 %v3417, %v3418
  %v3420 = vrot.slane %v3419, 2
  %v3421 = vadd.f32 %v3419, %v3420
  %v3422 = vrot.slane %v3421, 1
  %v3423 = vadd.f32 %v3421, %v3422
  %v3424 = vmul.f32 %v3414, 2.0
  %v3425 = vmul.f32 %v3423, 2.0
  %v3428 = vcombine.low %v3424, %v3425
  %v3430 = vunpack.c.l.s4 1966171168
  %v3431 = vunpack.c.0.s8 %v3430
  %v3432 = vlaneseq
  %v3433 = vshrl.u32 %v3432, 7
  %v3434 = vsub.s32 %v3431, %v3433
  %v3435 = vrot.slane %v3428, %v3434
  %v3437 = vunpack.c.l.s4 1966171168
  %v3438 = vunpack.c.0.s8 %v3437
  %v3439 = vlaneseq
  %v3440 = vshrl.u32 %v3439, 7
  %v3441 = vsub.s32 %v3438, %v3440
  %v3442 = vrot.slane %v3435, %v3441
  %v3444 = vlaneseq
  %vm3445 = vcmp.ge.s32.totalorder %v3444, 0
  %vm3446 = vcmp.lt.s32.totalorder %v3444, 256
  %vm3447 = vmand %vm3445, %vm3446
  %3448 = vst.msk [vmem:[%s5] sm:$0x3] %vm3447, %v3442
  // Predicated region
  $region22: #{distmult_forward.1} parent=0 // pred_check
    _
  $region23: #{distmult_forward.1} parent=0 // pred_check_branch
    %3450 = sbr.rel (0) target = $region25
  $region24: #{distmult_forward.1} parent=0 // pred_region
    _
  $region25: #{distmult_forward.1} parent=0 // pred_fallthru
    _
  // Predicated region
  $region26: #{distmult_forward.1} parent=0 // pred_check
    _
  $region27: #{distmult_forward.1} parent=0 // pred_check_branch
    %3452 = sbr.rel (0) target = $region29
  $region28: #{distmult_forward.1} parent=0 // pred_region
    _
  $region29: #{distmult_forward.1} parent=0 // pred_fallthru
    _

</llo_original>
